<compile_context>
chip_gen: v7x
topology: tpu7x:2x2x1
jax: 0.10.0
libtpu: 0.0.40
codegen_flags: <defaults>
</compile_context>

<pallas_src>
import functools

import jax
import jax.numpy as jnp
from jax import lax
from jax.experimental import pallas as pl
from jax.experimental.pallas import tpu as pltpu


# ----------------------------------------------------------------------------
# Hardware queries (best-effort; safe fallbacks).
# ----------------------------------------------------------------------------
def _tpu_vmem_bytes_and_cores():
    vmem = 64 * 1024 * 1024          # conservative fallback (v7x per-TC)
    cores = 1
    try:
        info = pltpu.get_tpu_info()
        vmem = int(getattr(info, "vmem_capacity_bytes", vmem))
    except Exception:
        pass
    try:
        kind = jax.devices()[0].device_kind.lower()
        if "v7" in kind:
            cores = 2                # v7x: 2 TensorCores per chip
    except Exception:
        pass
    return vmem, cores


def _supports_bf16_eup():
    """bf16 exp path only on v6e / v7x (v5-class has no bf16 EUP/VPU)."""
    try:
        kind = jax.devices()[0].device_kind.lower()
        return ("v6" in kind) or ("v7" in kind)
    except Exception:
        return False


# ----------------------------------------------------------------------------
# Kernel
# ----------------------------------------------------------------------------
def _attn_kernel(x_ref, wqkv_ref, bqkv_ref, wo_ref, bo_ref, o_ref,
                 qkv_ref, acc_ref, *,
                 num_heads, head_dim, compute_dtype, exp_dtype,
                 heads_per_group, kv_tile, approx_recip):
    """One (Bb, T, E) batch block per grid step.

    x_ref   : (Bb, T, E)    hidden states (compute_dtype)
    wqkv_ref: (E, 3E)       fused [q|k|v] weights, (in, out), scaling folded in
    bqkv_ref: (1, 3E)       fused biases (f32, scaling folded into q part)
    wo_ref  : (E, E)        out_proj weight, (in, out)
    bo_ref  : (1, E)        out_proj bias (f32)
    o_ref   : (Bb, T, E)    attention output
    qkv_ref : (Bb, T, 3E)   compute_dtype scratch for the fused QKV projection
    acc_ref : (Bb, T, E)    compute_dtype scratch for the merged-head context
    """
    bb, t, e = x_ref.shape

    # Fused QKV projection (single full-width MXU matmul), bias add in f32,
    # then park in compute_dtype scratch so no f32 intermediates stay live.
    x2 = x_ref[...].reshape(bb * t, e)
    qkv = jnp.dot(x2, wqkv_ref[...], preferred_element_type=jnp.float32)
    qkv = qkv + bqkv_ref[...]
    qkv_ref[...] = qkv.reshape(bb, t, 3 * e).astype(compute_dtype)

    n_groups = num_heads // heads_per_group
    for g in range(n_groups):
        ctx_parts = []
        for hh in range(heads_per_group):
            h = g * heads_per_group + hh
            c0 = h * head_dim
            qh = qkv_ref[:, :, 0 * e + c0: 0 * e + c0 + head_dim]  # (Bb,T,Dh)

            if kv_tile is None:
                kh = qkv_ref[:, :, 1 * e + c0: 1 * e + c0 + head_dim]
                vh = qkv_ref[:, :, 2 * e + c0: 2 * e + c0 + head_dim]
                # scores: contract the last (Dh) dims -- no explicit kh.T.
                s = lax.dot_general(qh, kh, (((2,), (2,)), ((0,), (0,))),
                                    preferred_element_type=jnp.float32)
                s = s - jnp.max(s, axis=-1, keepdims=True)
                p = jnp.exp(s.astype(exp_dtype))
                l = jnp.sum(p.astype(jnp.float32), axis=-1, keepdims=True)
                ctx = lax.dot_general(p.astype(compute_dtype), vh,
                                      (((2,), (1,)), ((0,), (0,))),
                                      preferred_element_type=jnp.float32)
                # Deferred normalization: scale (Bb,T,Dh), not (Bb,T,T).
                ctx = ctx * pl.reciprocal(l, approx=approx_recip)
            else:
                # Flash-style online softmax over KV tiles.
                n_kv = t // kv_tile
                m_i = jnp.full((bb, t, 1), -jnp.inf, jnp.float32)
                l_i = jnp.zeros((bb, t, 1), jnp.float32)
                acc = jnp.zeros((bb, t, head_dim), jnp.float32)
                for kv in range(n_kv):
                    rows = slice(kv * kv_tile, (kv + 1) * kv_tile)
                    ks = qkv_ref[:, rows, 1 * e + c0: 1 * e + c0 + head_dim]
                    vs = qkv_ref[:, rows, 2 * e + c0: 2 * e + c0 + head_dim]
                    s = lax.dot_general(qh, ks, (((2,), (2,)), ((0,), (0,))),
                                        preferred_element_type=jnp.float32)
                    m_new = jnp.maximum(m_i, jnp.max(s, axis=-1, keepdims=True))
                    alpha = jnp.exp(m_i - m_new)
                    p = jnp.exp((s - m_new).astype(exp_dtype))
                    l_i = alpha * l_i + jnp.sum(p.astype(jnp.float32),
                                                axis=-1, keepdims=True)
                    acc = alpha * acc + lax.dot_general(
                        p.astype(compute_dtype), vs,
                        (((2,), (1,)), ((0,), (0,))),
                        preferred_element_type=jnp.float32)
                    m_i = m_new
                ctx = acc * pl.reciprocal(l_i, approx=approx_recip)

            ctx_parts.append(ctx.astype(compute_dtype))

        gcols = slice(g * heads_per_group * head_dim,
                      (g + 1) * heads_per_group * head_dim)
        if len(ctx_parts) == 1:
            acc_ref[:, :, gcols] = ctx_parts[0]
        else:
            # One lane-dense store per head group.
            acc_ref[:, :, gcols] = jnp.concatenate(ctx_parts, axis=-1)

    # Output projection on the merged-head slab.
    attn = acc_ref[...].reshape(bb * t, e)
    out = jnp.dot(attn, wo_ref[...], preferred_element_type=jnp.float32)
    out = out + bo_ref[...]
    o_ref[...] = out.reshape(bb, t, e).astype(o_ref.dtype)


# ----------------------------------------------------------------------------
# One-time parameter preparation
# ----------------------------------------------------------------------------
def prepare_attention_params(params, *, num_heads, compute_dtype=jnp.bfloat16):
    """Transpose to (in, out), fold scaling into q, fuse QKV, cast matmul
    operands to compute_dtype (biases stay f32). Called once."""
    E = params["wq"].shape[0]
    head_dim = E // num_heads
    assert head_dim * num_heads == E
    scaling = float(head_dim) ** -0.5

    wqkv = jnp.concatenate(
        [params["wq"].T * scaling, params["wk"].T, params["wv"].T],
        axis=1).astype(compute_dtype)                       # (E, 3E)
    bqkv = jnp.concatenate(
        [params["bq"] * scaling, params["bk"], params["bv"]]
    ).reshape(1, 3 * E).astype(jnp.float32)                 # (1, 3E)
    wo = params["wo"].T.astype(compute_dtype)               # (E, E)
    bo = params["bo"].reshape(1, E).astype(jnp.float32)     # (1, E)

    if compute_dtype == jnp.bfloat16 and _supports_bf16_eup():
        exp_dtype = jnp.bfloat16       # v6e/v7x: bf16 EUP path for exp
    else:
        exp_dtype = jnp.float32

    return {"wqkv": wqkv, "bqkv": bqkv, "wo": wo, "bo": bo,
            "num_heads": num_heads, "head_dim": head_dim,
            "compute_dtype": compute_dtype, "exp_dtype": exp_dtype}


# ----------------------------------------------------------------------------
# Tiling heuristics
# ----------------------------------------------------------------------------
def _pick_heads_per_group(num_heads, head_dim, lane=128):
    """Smallest divisor d of num_heads with d*head_dim a multiple of 128
    (lane-dense slab stores); falls back to all heads in one group."""
    for d in range(1, num_heads + 1):
        if num_heads % d == 0 and (d * head_dim) % lane == 0:
            return d
    return num_heads


def _default_kv_tile(t):
    if t < 512:
        return None
    for cand in (256, 128):
        if t % cand == 0:
            return cand
    return None


def _step_vmem_bytes(bb, t, e, c_itemsize, o_itemsize, kv_tile):
    """Rough per-grid-step VMEM footprint estimate."""
    kt = kv_tile if kv_tile is not None else t
    x_blk = 2 * bb * t * e * c_itemsize           # double-buffered input
    o_blk = 2 * bb * t * e * o_itemsize           # double-buffered output
    qkv_scr = bb * t * 3 * e * c_itemsize         # qkv scratch
    acc_scr = bb * t * e * c_itemsize             # merged-head scratch
    weights = (e * 3 * e + e * e) * c_itemsize + 16 * e  # weights + biases
    scores = 2 * bb * t * kt * 4                  # s + p working set (f32)
    qkv_f32 = bb * t * 3 * e * 4                  # projection intermediate
    return x_blk + o_blk + qkv_scr + acc_scr + weights + scores + qkv_f32


def _pick_block_b(batch, t, e, c_itemsize, o_itemsize, kv_tile,
                  vmem_budget, num_cores):
    candidates = [c for c in range(1, batch + 1)
                  if batch % c == 0 and
                  _step_vmem_bytes(c, t, e, c_itemsize, o_itemsize,
                                   kv_tile) <= vmem_budget]
    if not candidates:
        return 1
    if num_cores >= 2 and batch > 1:
        # Prefer an even number of grid steps so both TensorCores stay busy.
        even = [c for c in candidates if (batch // c) % 2 == 0]
        if even:
            return max(even)
    return max(candidates)


# ----------------------------------------------------------------------------
# Public entry point
# ----------------------------------------------------------------------------
def bb_bart_attention(hidden_states, prepped, *, block_b=None, kv_tile=None):
    """Pallas implementation of BbBartAttention.forward (default arguments).

    Returns attn_output of shape (B, T, E) in hidden_states.dtype.
    (attn_weights_reshaped and past_key_value are None on the default path.)
    """
    B, T, E = hidden_states.shape
    num_heads = prepped["num_heads"]
    head_dim = prepped["head_dim"]
    compute_dtype = prepped["compute_dtype"]
    exp_dtype = prepped["exp_dtype"]
    out_dtype = hidden_states.dtype

    vmem_cap, num_cores = _tpu_vmem_bytes_and_cores()
    vmem_limit = max(32 * 1024 * 1024, int(0.85 * vmem_cap))

    if kv_tile is None:
        kv_tile = _default_kv_tile(T)
    if kv_tile is not None and (kv_tile >= T or T % kv_tile != 0):
        kv_tile = None

    # Cast activations once so the input DMA moves compute_dtype bytes.
    x = hidden_states.astype(compute_dtype)

    c_isz = jnp.dtype(compute_dtype).itemsize
    o_isz = jnp.dtype(out_dtype).itemsize
    if block_b is None:
        block_b = _pick_block_b(B, T, E, c_isz, o_isz, kv_tile,
                                int(0.6 * vmem_limit), num_cores)
    assert B % block_b == 0

    heads_per_group = _pick_heads_per_group(num_heads, head_dim)
    approx_recip = compute_dtype != jnp.float32   # exact recip for f32 path

    kernel = functools.partial(
        _attn_kernel, num_heads=num_heads, head_dim=head_dim,
        compute_dtype=compute_dtype, exp_dtype=exp_dtype,
        heads_per_group=heads_per_group, kv_tile=kv_tile,
        approx_recip=approx_recip)

    def _run(single_buffer_weights):
        wkw = ({"pipeline_mode": pl.Buffered(1)}
               if single_buffer_weights else {})
        call = pl.pallas_call(
            kernel,
            out_shape=jax.ShapeDtypeStruct((B, T, E), out_dtype),
            grid=(B // block_b,),
            in_specs=[
                pl.BlockSpec((block_b, T, E), lambda b: (b, 0, 0)),
                pl.BlockSpec((E, 3 * E), lambda b: (0, 0), **wkw),
                pl.BlockSpec((1, 3 * E), lambda b: (0, 0), **wkw),
                pl.BlockSpec((E, E), lambda b: (0, 0), **wkw),
                pl.BlockSpec((1, E), lambda b: (0, 0), **wkw),
            ],
            out_specs=pl.BlockSpec((block_b, T, E), lambda b: (b, 0, 0)),
            scratch_shapes=[
                pltpu.VMEM((block_b, T, 3 * E), compute_dtype),  # qkv slab
                pltpu.VMEM((block_b, T, E), compute_dtype),      # ctx slab
            ],
            compiler_params=pltpu.CompilerParams(
                dimension_semantics=("parallel",),
                vmem_limit_bytes=vmem_limit),
        )
        return call(x, prepped["wqkv"], prepped["bqkv"],
                    prepped["wo"], prepped["bo"])

    try:
        return _run(True)
    except Exception:
        # Fallback if this JAX version rejects Buffered(1) single-buffering.
        return _run(False)


# ----------------------------------------------------------------------------
# Pure-JAX reference + param construction + self-test
# ----------------------------------------------------------------------------
def _reference(hidden_states, params, *, num_heads):
    """Pure-JAX f32 reference mirroring the PyTorch forward (default args)."""
    B, T, E = hidden_states.shape
    head_dim = E // num_heads
    scaling = float(head_dim) ** -0.5

    def lin(x, w, b):
        return x @ w.T + b

    q = lin(hidden_states, params["wq"], params["bq"]) * scaling
    k = lin(hidden_states, params["wk"], params["bk"])
    v = lin(hidden_states, params["wv"], params["bv"])

    def split(t):  # (B, T, E) -> (B, H, T, Dh)
        return t.reshape(B, T, num_heads, head_dim).transpose(0, 2, 1, 3)

    qh, kh, vh = split(q), split(k), split(v)
    scores = jnp.einsum("bhtd,bhsd->bhts", qh, kh)
    probs = jax.nn.softmax(scores, axis=-1)
    ctx = jnp.einsum("bhts,bhsd->bhtd", probs, vh)
    ctx = ctx.transpose(0, 2, 1, 3).reshape(B, T, E)
    return lin(ctx, params["wo"], params["bo"])


def make_params(key, embed_dim, num_heads):
    keys = jax.random.split(key, 9)
    E = embed_dim
    std = 0.02
    params = {
        "wq": std * jax.random.normal(keys[0], (E, E), jnp.float32),
        "bq": std * jax.random.normal(keys[1], (E,), jnp.float32),
        "wk": std * jax.random.normal(keys[2], (E, E), jnp.float32),
        "bk": std * jax.random.normal(keys[3], (E,), jnp.float32),
        "wv": std * jax.random.normal(keys[4], (E, E), jnp.float32),
        "bv": std * jax.random.normal(keys[5], (E,), jnp.float32),
        "wo": std * jax.random.normal(keys[6], (E, E), jnp.float32),
        "bo": std * jax.random.normal(keys[7], (E,), jnp.float32),
        # relative_position_bias_table (4, num_heads): defined in __init__ but
        # never used in forward() (bias arg is ignored); kept for completeness.
        "rel_pos_bias_table":
            std * jax.random.normal(keys[8], (4, num_heads), jnp.float32),
    }
    return params


if __name__ == "__main__":
    B, T, E, H = 2, 8, 32, 4  # batch, seq, embed_dim, num_heads (head_dim=8)

    key = jax.random.PRNGKey(0)
    k_x, k_p = jax.random.split(key)
    x = jax.random.normal(k_x, (B, T, E), jnp.float32)
    params = make_params(k_p, E, H)

    ref = _reference(x, params, num_heads=H)

    # f32 compute path (tight check; exact softmax reciprocal on this path).
    prep32 = prepare_attention_params(params, num_heads=H,
                                      compute_dtype=jnp.float32)
    out32 = jax.block_until_ready(bb_bart_attention(x, prep32))
    assert out32.shape == (B, T, E) and out32.dtype == x.dtype
    assert jnp.allclose(out32, ref, atol=1e-3, rtol=1e-3), (
        float(jnp.max(jnp.abs(out32 - ref))))

    # f32 compute path with the flash/online-softmax KV tiling forced on,
    # to exercise the long-sequence code path at a small shape.
    out32f = jax.block_until_ready(bb_bart_attention(x, prep32, kv_tile=4))
    assert jnp.allclose(out32f, ref, atol=1e-3, rtol=1e-3), (
        float(jnp.max(jnp.abs(out32f - ref))))

    # bf16-on-MXU path (f32 accumulation / f32 softmax stats), bf16 tolerance.
    prep16 = prepare_attention_params(params, num_heads=H,
                                      compute_dtype=jnp.bfloat16)
    out16 = jax.block_until_ready(bb_bart_attention(x, prep16))
    assert out16.shape == (B, T, E) and out16.dtype == x.dtype
    assert jnp.allclose(out16, ref, atol=5e-3, rtol=5e-2), (
        float(jnp.max(jnp.abs(out16 - ref))))

    print("KERNEL_OK")
</pallas_src>

<mosaic_0001>
module attributes {stable_mosaic.version = 11 : i64} {
  func.func @_attn_kernel(%arg0: i32, %arg1: memref<2x8x32xf32, #tpu.memory_space<vmem>>, %arg2: memref<32x96xf32, #tpu.memory_space<vmem>>, %arg3: memref<1x96xf32, #tpu.memory_space<vmem>>, %arg4: memref<32x32xf32, #tpu.memory_space<vmem>>, %arg5: memref<1x32xf32, #tpu.memory_space<vmem>>, %arg6: memref<2x8x32xf32, #tpu.memory_space<vmem>>, %arg7: memref<2x8x96xf32, #tpu.memory_space<vmem>>, %arg8: memref<2x8x32xf32, #tpu.memory_space<vmem>>) attributes {dimension_semantics = [#tpu.dimension_semantics<parallel>], iteration_bounds = array<i64: 1>, scalar_prefetch = 0 : i64, scratch_operands = 2 : i64, tpu.core_type = #tpu.core_type<tc>, window_params = [{transform_indices = @transform_0, window_bounds = array<i64: 2, 8, 32>}, {pipeline_mode = #tpu.pipeline_mode<synchronous>, transform_indices = @transform_1, window_bounds = array<i64: 32, 96>}, {pipeline_mode = #tpu.pipeline_mode<synchronous>, transform_indices = @transform_2, window_bounds = array<i64: 1, 96>}, {pipeline_mode = #tpu.pipeline_mode<synchronous>, transform_indices = @transform_3, window_bounds = array<i64: 32, 32>}, {pipeline_mode = #tpu.pipeline_mode<synchronous>, transform_indices = @transform_4, window_bounds = array<i64: 1, 32>}, {transform_indices = @transform_5, window_bounds = array<i64: 2, 8, 32>}]} {
    %c0 = arith.constant 0 : index
    %c0_0 = arith.constant 0 : index
    %c0_1 = arith.constant 0 : index
    %0 = vector.load %arg1[%c0, %c0_0, %c0_1] : memref<2x8x32xf32, #tpu.memory_space<vmem>>, vector<2x8x32xf32>
    %1 = vector.shape_cast %0 : vector<2x8x32xf32> to vector<16x32xf32>
    %c0_2 = arith.constant 0 : index
    %c0_3 = arith.constant 0 : index
    %2 = vector.load %arg2[%c0_2, %c0_3] : memref<32x96xf32, #tpu.memory_space<vmem>>, vector<32x96xf32>
    %cst = arith.constant dense<0.000000e+00> : vector<16x96xf32>
    %3 = tpu.matmul %1, %2, %cst {dimension_numbers = #tpu.dot_dimension_numbers<[1], [0], [0], [1], [0, 0, 1, 1], [], []>} : vector<16x32xf32>, vector<32x96xf32>, vector<16x96xf32> -> vector<16x96xf32>
    %c0_4 = arith.constant 0 : index
    %c0_5 = arith.constant 0 : index
    %4 = vector.load %arg3[%c0_4, %c0_5] : memref<1x96xf32, #tpu.memory_space<vmem>>, vector<1x96xf32>
    %5 = vector.broadcast %4 : vector<1x96xf32> to vector<16x96xf32>
    %6 = arith.addf %3, %5 : vector<16x96xf32>
    %7 = vector.shape_cast %6 : vector<16x96xf32> to vector<2x8x96xf32>
    %c0_6 = arith.constant 0 : index
    %c0_7 = arith.constant 0 : index
    %c0_8 = arith.constant 0 : index
    %8 = vector.load %arg7[%c0_6, %c0_7, %c0_8] : memref<2x8x96xf32, #tpu.memory_space<vmem>>, vector<2x8x96xf32>
    tpu.vector_store %arg7[%c0_6, %c0_7, %c0_8], %7 {strides = array<i32>} : memref<2x8x96xf32, #tpu.memory_space<vmem>>, vector<2x8x96xf32>,
    %c0_9 = arith.constant 0 : index
    %c0_10 = arith.constant 0 : index
    %c0_11 = arith.constant 0 : index
    %9 = vector.load %arg7[%c0_9, %c0_10, %c0_11] : memref<2x8x96xf32, #tpu.memory_space<vmem>>, vector<2x8x8xf32>
    %c0_12 = arith.constant 0 : index
    %c0_13 = arith.constant 0 : index
    %c32 = arith.constant 32 : index
    %10 = vector.load %arg7[%c0_12, %c0_13, %c32] : memref<2x8x96xf32, #tpu.memory_space<vmem>>, vector<2x8x8xf32>
    %c0_14 = arith.constant 0 : index
    %c0_15 = arith.constant 0 : index
    %c64 = arith.constant 64 : index
    %11 = vector.load %arg7[%c0_14, %c0_15, %c64] : memref<2x8x96xf32, #tpu.memory_space<vmem>>, vector<2x8x8xf32>
    %cst_16 = arith.constant dense<0.000000e+00> : vector<2x8x8xf32>
    %12 = tpu.matmul %9, %10, %cst_16 {dimension_numbers = #tpu.dot_dimension_numbers<[2], [2], [1], [1], [0, 0, 0, 1, 1, 1], [0], [0]>} : vector<2x8x8xf32>, vector<2x8x8xf32>, vector<2x8x8xf32> -> vector<2x8x8xf32>
    %cst_17 = arith.constant dense<0xFF800000> : vector<2x8xf32>
    %13 = vector.multi_reduction <maximumf>, %12, %cst_17 [2] : vector<2x8x8xf32> to vector<2x8xf32>
    %14 = vector.shape_cast %13 : vector<2x8xf32> to vector<2x8x1xf32>
    %15 = vector.broadcast %14 : vector<2x8x1xf32> to vector<2x8x8xf32>
    %16 = arith.subf %12, %15 : vector<2x8x8xf32>
    %17 = math.exp %16 : vector<2x8x8xf32>
    %cst_18 = arith.constant dense<0.000000e+00> : vector<2x8xf32>
    %18 = vector.multi_reduction <add>, %17, %cst_18 [2] : vector<2x8x8xf32> to vector<2x8xf32>
    %19 = vector.shape_cast %18 : vector<2x8xf32> to vector<2x8x1xf32>
    %cst_19 = arith.constant dense<0.000000e+00> : vector<2x8x8xf32>
    %20 = tpu.matmul %17, %11, %cst_19 {dimension_numbers = #tpu.dot_dimension_numbers<[2], [1], [1], [2], [0, 0, 0, 1, 1, 2], [0], [0]>} : vector<2x8x8xf32>, vector<2x8x8xf32>, vector<2x8x8xf32> -> vector<2x8x8xf32>
    %21 = tpu.reciprocal %19 : vector<2x8x1xf32> -> vector<2x8x1xf32>
    %22 = vector.broadcast %21 : vector<2x8x1xf32> to vector<2x8x8xf32>
    %23 = arith.mulf %20, %22 : vector<2x8x8xf32>
    %c0_20 = arith.constant 0 : index
    %c0_21 = arith.constant 0 : index
    %c8 = arith.constant 8 : index
    %24 = vector.load %arg7[%c0_20, %c0_21, %c8] : memref<2x8x96xf32, #tpu.memory_space<vmem>>, vector<2x8x8xf32>
    %c0_22 = arith.constant 0 : index
    %c0_23 = arith.constant 0 : index
    %c40 = arith.constant 40 : index
    %25 = vector.load %arg7[%c0_22, %c0_23, %c40] : memref<2x8x96xf32, #tpu.memory_space<vmem>>, vector<2x8x8xf32>
    %c0_24 = arith.constant 0 : index
    %c0_25 = arith.constant 0 : index
    %c72 = arith.constant 72 : index
    %26 = vector.load %arg7[%c0_24, %c0_25, %c72] : memref<2x8x96xf32, #tpu.memory_space<vmem>>, vector<2x8x8xf32>
    %cst_26 = arith.constant dense<0.000000e+00> : vector<2x8x8xf32>
    %27 = tpu.matmul %24, %25, %cst_26 {dimension_numbers = #tpu.dot_dimension_numbers<[2], [2], [1], [1], [0, 0, 0, 1, 1, 1], [0], [0]>} : vector<2x8x8xf32>, vector<2x8x8xf32>, vector<2x8x8xf32> -> vector<2x8x8xf32>
    %cst_27 = arith.constant dense<0xFF800000> : vector<2x8xf32>
    %28 = vector.multi_reduction <maximumf>, %27, %cst_27 [2] : vector<2x8x8xf32> to vector<2x8xf32>
    %29 = vector.shape_cast %28 : vector<2x8xf32> to vector<2x8x1xf32>
    %30 = vector.broadcast %29 : vector<2x8x1xf32> to vector<2x8x8xf32>
    %31 = arith.subf %27, %30 : vector<2x8x8xf32>
    %32 = math.exp %31 : vector<2x8x8xf32>
    %cst_28 = arith.constant dense<0.000000e+00> : vector<2x8xf32>
    %33 = vector.multi_reduction <add>, %32, %cst_28 [2] : vector<2x8x8xf32> to vector<2x8xf32>
    %34 = vector.shape_cast %33 : vector<2x8xf32> to vector<2x8x1xf32>
    %cst_29 = arith.constant dense<0.000000e+00> : vector<2x8x8xf32>
    %35 = tpu.matmul %32, %26, %cst_29 {dimension_numbers = #tpu.dot_dimension_numbers<[2], [1], [1], [2], [0, 0, 0, 1, 1, 2], [0], [0]>} : vector<2x8x8xf32>, vector<2x8x8xf32>, vector<2x8x8xf32> -> vector<2x8x8xf32>
    %36 = tpu.reciprocal %34 : vector<2x8x1xf32> -> vector<2x8x1xf32>
    %37 = vector.broadcast %36 : vector<2x8x1xf32> to vector<2x8x8xf32>
    %38 = arith.mulf %35, %37 : vector<2x8x8xf32>
    %c0_30 = arith.constant 0 : index
    %c0_31 = arith.constant 0 : index
    %c16 = arith.constant 16 : index
    %39 = vector.load %arg7[%c0_30, %c0_31, %c16] : memref<2x8x96xf32, #tpu.memory_space<vmem>>, vector<2x8x8xf32>
    %c0_32 = arith.constant 0 : index
    %c0_33 = arith.constant 0 : index
    %c48 = arith.constant 48 : index
    %40 = vector.load %arg7[%c0_32, %c0_33, %c48] : memref<2x8x96xf32, #tpu.memory_space<vmem>>, vector<2x8x8xf32>
    %c0_34 = arith.constant 0 : index
    %c0_35 = arith.constant 0 : index
    %c80 = arith.constant 80 : index
    %41 = vector.load %arg7[%c0_34, %c0_35, %c80] : memref<2x8x96xf32, #tpu.memory_space<vmem>>, vector<2x8x8xf32>
    %cst_36 = arith.constant dense<0.000000e+00> : vector<2x8x8xf32>
    %42 = tpu.matmul %39, %40, %cst_36 {dimension_numbers = #tpu.dot_dimension_numbers<[2], [2], [1], [1], [0, 0, 0, 1, 1, 1], [0], [0]>} : vector<2x8x8xf32>, vector<2x8x8xf32>, vector<2x8x8xf32> -> vector<2x8x8xf32>
    %cst_37 = arith.constant dense<0xFF800000> : vector<2x8xf32>
    %43 = vector.multi_reduction <maximumf>, %42, %cst_37 [2] : vector<2x8x8xf32> to vector<2x8xf32>
    %44 = vector.shape_cast %43 : vector<2x8xf32> to vector<2x8x1xf32>
    %45 = vector.broadcast %44 : vector<2x8x1xf32> to vector<2x8x8xf32>
    %46 = arith.subf %42, %45 : vector<2x8x8xf32>
    %47 = math.exp %46 : vector<2x8x8xf32>
    %cst_38 = arith.constant dense<0.000000e+00> : vector<2x8xf32>
    %48 = vector.multi_reduction <add>, %47, %cst_38 [2] : vector<2x8x8xf32> to vector<2x8xf32>
    %49 = vector.shape_cast %48 : vector<2x8xf32> to vector<2x8x1xf32>
    %cst_39 = arith.constant dense<0.000000e+00> : vector<2x8x8xf32>
    %50 = tpu.matmul %47, %41, %cst_39 {dimension_numbers = #tpu.dot_dimension_numbers<[2], [1], [1], [2], [0, 0, 0, 1, 1, 2], [0], [0]>} : vector<2x8x8xf32>, vector<2x8x8xf32>, vector<2x8x8xf32> -> vector<2x8x8xf32>
    %51 = tpu.reciprocal %49 : vector<2x8x1xf32> -> vector<2x8x1xf32>
    %52 = vector.broadcast %51 : vector<2x8x1xf32> to vector<2x8x8xf32>
    %53 = arith.mulf %50, %52 : vector<2x8x8xf32>
    %c0_40 = arith.constant 0 : index
    %c0_41 = arith.constant 0 : index
    %c24 = arith.constant 24 : index
    %54 = vector.load %arg7[%c0_40, %c0_41, %c24] : memref<2x8x96xf32, #tpu.memory_space<vmem>>, vector<2x8x8xf32>
    %c0_42 = arith.constant 0 : index
    %c0_43 = arith.constant 0 : index
    %c56 = arith.constant 56 : index
    %55 = vector.load %arg7[%c0_42, %c0_43, %c56] : memref<2x8x96xf32, #tpu.memory_space<vmem>>, vector<2x8x8xf32>
    %c0_44 = arith.constant 0 : index
    %c0_45 = arith.constant 0 : index
    %c88 = arith.constant 88 : index
    %56 = vector.load %arg7[%c0_44, %c0_45, %c88] : memref<2x8x96xf32, #tpu.memory_space<vmem>>, vector<2x8x8xf32>
    %cst_46 = arith.constant dense<0.000000e+00> : vector<2x8x8xf32>
    %57 = tpu.matmul %54, %55, %cst_46 {dimension_numbers = #tpu.dot_dimension_numbers<[2], [2], [1], [1], [0, 0, 0, 1, 1, 1], [0], [0]>} : vector<2x8x8xf32>, vector<2x8x8xf32>, vector<2x8x8xf32> -> vector<2x8x8xf32>
    %cst_47 = arith.constant dense<0xFF800000> : vector<2x8xf32>
    %58 = vector.multi_reduction <maximumf>, %57, %cst_47 [2] : vector<2x8x8xf32> to vector<2x8xf32>
    %59 = vector.shape_cast %58 : vector<2x8xf32> to vector<2x8x1xf32>
    %60 = vector.broadcast %59 : vector<2x8x1xf32> to vector<2x8x8xf32>
    %61 = arith.subf %57, %60 : vector<2x8x8xf32>
    %62 = math.exp %61 : vector<2x8x8xf32>
    %cst_48 = arith.constant dense<0.000000e+00> : vector<2x8xf32>
    %63 = vector.multi_reduction <add>, %62, %cst_48 [2] : vector<2x8x8xf32> to vector<2x8xf32>
    %64 = vector.shape_cast %63 : vector<2x8xf32> to vector<2x8x1xf32>
    %cst_49 = arith.constant dense<0.000000e+00> : vector<2x8x8xf32>
    %65 = tpu.matmul %62, %56, %cst_49 {dimension_numbers = #tpu.dot_dimension_numbers<[2], [1], [1], [2], [0, 0, 0, 1, 1, 2], [0], [0]>} : vector<2x8x8xf32>, vector<2x8x8xf32>, vector<2x8x8xf32> -> vector<2x8x8xf32>
    %66 = tpu.reciprocal %64 : vector<2x8x1xf32> -> vector<2x8x1xf32>
    %67 = vector.broadcast %66 : vector<2x8x1xf32> to vector<2x8x8xf32>
    %68 = arith.mulf %65, %67 : vector<2x8x8xf32>
    %69 = tpu.concatenate %23, %38, %53, %68 in 2 : vector<2x8x8xf32>, vector<2x8x8xf32>, vector<2x8x8xf32>, vector<2x8x8xf32> -> vector<2x8x32xf32>
    %c0_50 = arith.constant 0 : index
    %c0_51 = arith.constant 0 : index
    %c0_52 = arith.constant 0 : index
    %70 = vector.load %arg8[%c0_50, %c0_51, %c0_52] : memref<2x8x32xf32, #tpu.memory_space<vmem>>, vector<2x8x32xf32>
    tpu.vector_store %arg8[%c0_50, %c0_51, %c0_52], %69 {strides = array<i32>} : memref<2x8x32xf32, #tpu.memory_space<vmem>>, vector<2x8x32xf32>,
    %c0_53 = arith.constant 0 : index
    %c0_54 = arith.constant 0 : index
    %c0_55 = arith.constant 0 : index
    %71 = vector.load %arg8[%c0_53, %c0_54, %c0_55] : memref<2x8x32xf32, #tpu.memory_space<vmem>>, vector<2x8x32xf32>
    %72 = vector.shape_cast %71 : vector<2x8x32xf32> to vector<16x32xf32>
    %c0_56 = arith.constant 0 : index
    %c0_57 = arith.constant 0 : index
    %73 = vector.load %arg4[%c0_56, %c0_57] : memref<32x32xf32, #tpu.memory_space<vmem>>, vector<32x32xf32>
    %cst_58 = arith.constant dense<0.000000e+00> : vector<16x32xf32>
    %74 = tpu.matmul %72, %73, %cst_58 {dimension_numbers = #tpu.dot_dimension_numbers<[1], [0], [0], [1], [0, 0, 1, 1], [], []>} : vector<16x32xf32>, vector<32x32xf32>, vector<16x32xf32> -> vector<16x32xf32>
    %c0_59 = arith.constant 0 : index
    %c0_60 = arith.constant 0 : index
    %75 = vector.load %arg5[%c0_59, %c0_60] : memref<1x32xf32, #tpu.memory_space<vmem>>, vector<1x32xf32>
    %76 = vector.broadcast %75 : vector<1x32xf32> to vector<16x32xf32>
    %77 = arith.addf %74, %76 : vector<16x32xf32>
    %78 = vector.shape_cast %77 : vector<16x32xf32> to vector<2x8x32xf32>
    %c0_61 = arith.constant 0 : index
    %c0_62 = arith.constant 0 : index
    %c0_63 = arith.constant 0 : index
    %79 = vector.load %arg6[%c0_61, %c0_62, %c0_63] : memref<2x8x32xf32, #tpu.memory_space<vmem>>, vector<2x8x32xf32>
    tpu.vector_store %arg6[%c0_61, %c0_62, %c0_63], %78 {strides = array<i32>} : memref<2x8x32xf32, #tpu.memory_space<vmem>>, vector<2x8x32xf32>,
    return
  }
  func.func @transform_0(%arg0: i32) -> (i32, i32, i32) {
    %c0_i32 = arith.constant 0 : i32
    %c0_i32_0 = arith.constant 0 : i32
    %c0_i32_1 = arith.constant 0 : i32
    return %arg0, %c0_i32, %c0_i32_0 : i32, i32, i32
  }
  func.func @transform_1(%arg0: i32) -> (i32, i32) {
    %c0_i32 = arith.constant 0 : i32
    %c0_i32_0 = arith.constant 0 : i32
    %c0_i32_1 = arith.constant 0 : i32
    return %c0_i32, %c0_i32_0 : i32, i32
  }
  func.func @transform_2(%arg0: i32) -> (i32, i32) {
    %c0_i32 = arith.constant 0 : i32
    %c0_i32_0 = arith.constant 0 : i32
    %c0_i32_1 = arith.constant 0 : i32
    return %c0_i32, %c0_i32_0 : i32, i32
  }
  func.func @transform_3(%arg0: i32) -> (i32, i32) {
    %c0_i32 = arith.constant 0 : i32
    %c0_i32_0 = arith.constant 0 : i32
    %c0_i32_1 = arith.constant 0 : i32
    return %c0_i32, %c0_i32_0 : i32, i32
  }
  func.func @transform_4(%arg0: i32) -> (i32, i32) {
    %c0_i32 = arith.constant 0 : i32
    %c0_i32_0 = arith.constant 0 : i32
    %c0_i32_1 = arith.constant 0 : i32
    return %c0_i32, %c0_i32_0 : i32, i32
  }
  func.func @transform_5(%arg0: i32) -> (i32, i32, i32) {
    %c0_i32 = arith.constant 0 : i32
    %c0_i32_0 = arith.constant 0 : i32
    %c0_i32_1 = arith.constant 0 : i32
    return %arg0, %c0_i32, %c0_i32_0 : i32, i32, i32
  }
}

module attributes {stable_mosaic.version = 11 : i64} {
  func.func @_attn_kernel(%arg0: i32, %arg1: memref<2x8x32xf32, #tpu.memory_space<vmem>>, %arg2: memref<32x96xf32, #tpu.memory_space<vmem>>, %arg3: memref<1x96xf32, #tpu.memory_space<vmem>>, %arg4: memref<32x32xf32, #tpu.memory_space<vmem>>, %arg5: memref<1x32xf32, #tpu.memory_space<vmem>>, %arg6: memref<2x8x32xf32, #tpu.memory_space<vmem>>, %arg7: memref<2x8x96xf32, #tpu.memory_space<vmem>>, %arg8: memref<2x8x32xf32, #tpu.memory_space<vmem>>) attributes {dimension_semantics = [#tpu.dimension_semantics<parallel>], iteration_bounds = array<i64: 1>, scalar_prefetch = 0 : i64, scratch_operands = 2 : i64, tpu.core_type = #tpu.core_type<tc>, window_params = [{transform_indices = @transform_0, window_bounds = array<i64: 2, 8, 32>}, {pipeline_mode = #tpu.pipeline_mode<synchronous>, transform_indices = @transform_1, window_bounds = array<i64: 32, 96>}, {pipeline_mode = #tpu.pipeline_mode<synchronous>, transform_indices = @transform_2, window_bounds = array<i64: 1, 96>}, {pipeline_mode = #tpu.pipeline_mode<synchronous>, transform_indices = @transform_3, window_bounds = array<i64: 32, 32>}, {pipeline_mode = #tpu.pipeline_mode<synchronous>, transform_indices = @transform_4, window_bounds = array<i64: 1, 32>}, {transform_indices = @transform_5, window_bounds = array<i64: 2, 8, 32>}]} {
    %c0 = arith.constant 0 : index
    %c0_0 = arith.constant 0 : index
    %c0_1 = arith.constant 0 : index
    %0 = vector.load %arg1[%c0, %c0_0, %c0_1] : memref<2x8x32xf32, #tpu.memory_space<vmem>>, vector<2x8x32xf32>
    %1 = vector.shape_cast %0 : vector<2x8x32xf32> to vector<16x32xf32>
    %c0_2 = arith.constant 0 : index
    %c0_3 = arith.constant 0 : index
    %2 = vector.load %arg2[%c0_2, %c0_3] : memref<32x96xf32, #tpu.memory_space<vmem>>, vector<32x96xf32>
    %cst = arith.constant dense<0.000000e+00> : vector<16x96xf32>
    %3 = tpu.matmul %1, %2, %cst {dimension_numbers = #tpu.dot_dimension_numbers<[1], [0], [0], [1], [0, 0, 1, 1], [], []>} : vector<16x32xf32>, vector<32x96xf32>, vector<16x96xf32> -> vector<16x96xf32>
    %c0_4 = arith.constant 0 : index
    %c0_5 = arith.constant 0 : index
    %4 = vector.load %arg3[%c0_4, %c0_5] : memref<1x96xf32, #tpu.memory_space<vmem>>, vector<1x96xf32>
    %5 = vector.broadcast %4 : vector<1x96xf32> to vector<16x96xf32>
    %6 = arith.addf %3, %5 : vector<16x96xf32>
    %7 = vector.shape_cast %6 : vector<16x96xf32> to vector<2x8x96xf32>
    %c0_6 = arith.constant 0 : index
    %c0_7 = arith.constant 0 : index
    %c0_8 = arith.constant 0 : index
    %8 = vector.load %arg7[%c0_6, %c0_7, %c0_8] : memref<2x8x96xf32, #tpu.memory_space<vmem>>, vector<2x8x96xf32>
    tpu.vector_store %arg7[%c0_6, %c0_7, %c0_8], %7 {strides = array<i32>} : memref<2x8x96xf32, #tpu.memory_space<vmem>>, vector<2x8x96xf32>,
    %c0_9 = arith.constant 0 : index
    %c0_10 = arith.constant 0 : index
    %c0_11 = arith.constant 0 : index
    %9 = vector.load %arg7[%c0_9, %c0_10, %c0_11] : memref<2x8x96xf32, #tpu.memory_space<vmem>>, vector<2x8x8xf32>
    %c0_12 = arith.constant 0 : index
    %c0_13 = arith.constant 0 : index
    %c32 = arith.constant 32 : index
    %10 = vector.load %arg7[%c0_12, %c0_13, %c32] : memref<2x8x96xf32, #tpu.memory_space<vmem>>, vector<2x8x8xf32>
    %c0_14 = arith.constant 0 : index
    %c0_15 = arith.constant 0 : index
    %c64 = arith.constant 64 : index
    %11 = vector.load %arg7[%c0_14, %c0_15, %c64] : memref<2x8x96xf32, #tpu.memory_space<vmem>>, vector<2x8x8xf32>
    %cst_16 = arith.constant dense<0.000000e+00> : vector<2x8x8xf32>
    %12 = tpu.matmul %9, %10, %cst_16 {dimension_numbers = #tpu.dot_dimension_numbers<[2], [2], [1], [1], [0, 0, 0, 1, 1, 1], [0], [0]>} : vector<2x8x8xf32>, vector<2x8x8xf32>, vector<2x8x8xf32> -> vector<2x8x8xf32>
    %cst_17 = arith.constant dense<0xFF800000> : vector<2x8xf32>
    %13 = vector.multi_reduction <maximumf>, %12, %cst_17 [2] : vector<2x8x8xf32> to vector<2x8xf32>
    %14 = vector.shape_cast %13 : vector<2x8xf32> to vector<2x8x1xf32>
    %15 = vector.broadcast %14 : vector<2x8x1xf32> to vector<2x8x8xf32>
    %16 = arith.subf %12, %15 : vector<2x8x8xf32>
    %17 = math.exp %16 : vector<2x8x8xf32>
    %cst_18 = arith.constant dense<0.000000e+00> : vector<2x8xf32>
    %18 = vector.multi_reduction <add>, %17, %cst_18 [2] : vector<2x8x8xf32> to vector<2x8xf32>
    %19 = vector.shape_cast %18 : vector<2x8xf32> to vector<2x8x1xf32>
    %cst_19 = arith.constant dense<0.000000e+00> : vector<2x8x8xf32>
    %20 = tpu.matmul %17, %11, %cst_19 {dimension_numbers = #tpu.dot_dimension_numbers<[2], [1], [1], [2], [0, 0, 0, 1, 1, 2], [0], [0]>} : vector<2x8x8xf32>, vector<2x8x8xf32>, vector<2x8x8xf32> -> vector<2x8x8xf32>
    %21 = tpu.reciprocal %19 : vector<2x8x1xf32> -> vector<2x8x1xf32>
    %22 = vector.broadcast %21 : vector<2x8x1xf32> to vector<2x8x8xf32>
    %23 = arith.mulf %20, %22 : vector<2x8x8xf32>
    %c0_20 = arith.constant 0 : index
    %c0_21 = arith.constant 0 : index
    %c8 = arith.constant 8 : index
    %24 = vector.load %arg7[%c0_20, %c0_21, %c8] : memref<2x8x96xf32, #tpu.memory_space<vmem>>, vector<2x8x8xf32>
    %c0_22 = arith.constant 0 : index
    %c0_23 = arith.constant 0 : index
    %c40 = arith.constant 40 : index
    %25 = vector.load %arg7[%c0_22, %c0_23, %c40] : memref<2x8x96xf32, #tpu.memory_space<vmem>>, vector<2x8x8xf32>
    %c0_24 = arith.constant 0 : index
    %c0_25 = arith.constant 0 : index
    %c72 = arith.constant 72 : index
    %26 = vector.load %arg7[%c0_24, %c0_25, %c72] : memref<2x8x96xf32, #tpu.memory_space<vmem>>, vector<2x8x8xf32>
    %cst_26 = arith.constant dense<0.000000e+00> : vector<2x8x8xf32>
    %27 = tpu.matmul %24, %25, %cst_26 {dimension_numbers = #tpu.dot_dimension_numbers<[2], [2], [1], [1], [0, 0, 0, 1, 1, 1], [0], [0]>} : vector<2x8x8xf32>, vector<2x8x8xf32>, vector<2x8x8xf32> -> vector<2x8x8xf32>
    %cst_27 = arith.constant dense<0xFF800000> : vector<2x8xf32>
    %28 = vector.multi_reduction <maximumf>, %27, %cst_27 [2] : vector<2x8x8xf32> to vector<2x8xf32>
    %29 = vector.shape_cast %28 : vector<2x8xf32> to vector<2x8x1xf32>
    %30 = vector.broadcast %29 : vector<2x8x1xf32> to vector<2x8x8xf32>
    %31 = arith.subf %27, %30 : vector<2x8x8xf32>
    %32 = math.exp %31 : vector<2x8x8xf32>
    %cst_28 = arith.constant dense<0.000000e+00> : vector<2x8xf32>
    %33 = vector.multi_reduction <add>, %32, %cst_28 [2] : vector<2x8x8xf32> to vector<2x8xf32>
    %34 = vector.shape_cast %33 : vector<2x8xf32> to vector<2x8x1xf32>
    %cst_29 = arith.constant dense<0.000000e+00> : vector<2x8x8xf32>
    %35 = tpu.matmul %32, %26, %cst_29 {dimension_numbers = #tpu.dot_dimension_numbers<[2], [1], [1], [2], [0, 0, 0, 1, 1, 2], [0], [0]>} : vector<2x8x8xf32>, vector<2x8x8xf32>, vector<2x8x8xf32> -> vector<2x8x8xf32>
    %36 = tpu.reciprocal %34 : vector<2x8x1xf32> -> vector<2x8x1xf32>
    %37 = vector.broadcast %36 : vector<2x8x1xf32> to vector<2x8x8xf32>
    %38 = arith.mulf %35, %37 : vector<2x8x8xf32>
    %c0_30 = arith.constant 0 : index
    %c0_31 = arith.constant 0 : index
    %c16 = arith.constant 16 : index
    %39 = vector.load %arg7[%c0_30, %c0_31, %c16] : memref<2x8x96xf32, #tpu.memory_space<vmem>>, vector<2x8x8xf32>
    %c0_32 = arith.constant 0 : index
    %c0_33 = arith.constant 0 : index
    %c48 = arith.constant 48 : index
    %40 = vector.load %arg7[%c0_32, %c0_33, %c48] : memref<2x8x96xf32, #tpu.memory_space<vmem>>, vector<2x8x8xf32>
    %c0_34 = arith.constant 0 : index
    %c0_35 = arith.constant 0 : index
    %c80 = arith.constant 80 : index
    %41 = vector.load %arg7[%c0_34, %c0_35, %c80] : memref<2x8x96xf32, #tpu.memory_space<vmem>>, vector<2x8x8xf32>
    %cst_36 = arith.constant dense<0.000000e+00> : vector<2x8x8xf32>
    %42 = tpu.matmul %39, %40, %cst_36 {dimension_numbers = #tpu.dot_dimension_numbers<[2], [2], [1], [1], [0, 0, 0, 1, 1, 1], [0], [0]>} : vector<2x8x8xf32>, vector<2x8x8xf32>, vector<2x8x8xf32> -> vector<2x8x8xf32>
    %cst_37 = arith.constant dense<0xFF800000> : vector<2x8xf32>
    %43 = vector.multi_reduction <maximumf>, %42, %cst_37 [2] : vector<2x8x8xf32> to vector<2x8xf32>
    %44 = vector.shape_cast %43 : vector<2x8xf32> to vector<2x8x1xf32>
    %45 = vector.broadcast %44 : vector<2x8x1xf32> to vector<2x8x8xf32>
    %46 = arith.subf %42, %45 : vector<2x8x8xf32>
    %47 = math.exp %46 : vector<2x8x8xf32>
    %cst_38 = arith.constant dense<0.000000e+00> : vector<2x8xf32>
    %48 = vector.multi_reduction <add>, %47, %cst_38 [2] : vector<2x8x8xf32> to vector<2x8xf32>
    %49 = vector.shape_cast %48 : vector<2x8xf32> to vector<2x8x1xf32>
    %cst_39 = arith.constant dense<0.000000e+00> : vector<2x8x8xf32>
    %50 = tpu.matmul %47, %41, %cst_39 {dimension_numbers = #tpu.dot_dimension_numbers<[2], [1], [1], [2], [0, 0, 0, 1, 1, 2], [0], [0]>} : vector<2x8x8xf32>, vector<2x8x8xf32>, vector<2x8x8xf32> -> vector<2x8x8xf32>
    %51 = tpu.reciprocal %49 : vector<2x8x1xf32> -> vector<2x8x1xf32>
    %52 = vector.broadcast %51 : vector<2x8x1xf32> to vector<2x8x8xf32>
    %53 = arith.mulf %50, %52 : vector<2x8x8xf32>
    %c0_40 = arith.constant 0 : index
    %c0_41 = arith.constant 0 : index
    %c24 = arith.constant 24 : index
    %54 = vector.load %arg7[%c0_40, %c0_41, %c24] : memref<2x8x96xf32, #tpu.memory_space<vmem>>, vector<2x8x8xf32>
    %c0_42 = arith.constant 0 : index
    %c0_43 = arith.constant 0 : index
    %c56 = arith.constant 56 : index
    %55 = vector.load %arg7[%c0_42, %c0_43, %c56] : memref<2x8x96xf32, #tpu.memory_space<vmem>>, vector<2x8x8xf32>
    %c0_44 = arith.constant 0 : index
    %c0_45 = arith.constant 0 : index
    %c88 = arith.constant 88 : index
    %56 = vector.load %arg7[%c0_44, %c0_45, %c88] : memref<2x8x96xf32, #tpu.memory_space<vmem>>, vector<2x8x8xf32>
    %cst_46 = arith.constant dense<0.000000e+00> : vector<2x8x8xf32>
    %57 = tpu.matmul %54, %55, %cst_46 {dimension_numbers = #tpu.dot_dimension_numbers<[2], [2], [1], [1], [0, 0, 0, 1, 1, 1], [0], [0]>} : vector<2x8x8xf32>, vector<2x8x8xf32>, vector<2x8x8xf32> -> vector<2x8x8xf32>
    %cst_47 = arith.constant dense<0xFF800000> : vector<2x8xf32>
    %58 = vector.multi_reduction <maximumf>, %57, %cst_47 [2] : vector<2x8x8xf32> to vector<2x8xf32>
    %59 = vector.shape_cast %58 : vector<2x8xf32> to vector<2x8x1xf32>
    %60 = vector.broadcast %59 : vector<2x8x1xf32> to vector<2x8x8xf32>
    %61 = arith.subf %57, %60 : vector<2x8x8xf32>
    %62 = math.exp %61 : vector<2x8x8xf32>
    %cst_48 = arith.constant dense<0.000000e+00> : vector<2x8xf32>
    %63 = vector.multi_reduction <add>, %62, %cst_48 [2] : vector<2x8x8xf32> to vector<2x8xf32>
    %64 = vector.shape_cast %63 : vector<2x8xf32> to vector<2x8x1xf32>
    %cst_49 = arith.constant dense<0.000000e+00> : vector<2x8x8xf32>
    %65 = tpu.matmul %62, %56, %cst_49 {dimension_numbers = #tpu.dot_dimension_numbers<[2], [1], [1], [2], [0, 0, 0, 1, 1, 2], [0], [0]>} : vector<2x8x8xf32>, vector<2x8x8xf32>, vector<2x8x8xf32> -> vector<2x8x8xf32>
    %66 = tpu.reciprocal %64 : vector<2x8x1xf32> -> vector<2x8x1xf32>
    %67 = vector.broadcast %66 : vector<2x8x1xf32> to vector<2x8x8xf32>
    %68 = arith.mulf %65, %67 : vector<2x8x8xf32>
    %69 = tpu.concatenate %23, %38, %53, %68 in 2 : vector<2x8x8xf32>, vector<2x8x8xf32>, vector<2x8x8xf32>, vector<2x8x8xf32> -> vector<2x8x32xf32>
    %c0_50 = arith.constant 0 : index
    %c0_51 = arith.constant 0 : index
    %c0_52 = arith.constant 0 : index
    %70 = vector.load %arg8[%c0_50, %c0_51, %c0_52] : memref<2x8x32xf32, #tpu.memory_space<vmem>>, vector<2x8x32xf32>
    tpu.vector_store %arg8[%c0_50, %c0_51, %c0_52], %69 {strides = array<i32>} : memref<2x8x32xf32, #tpu.memory_space<vmem>>, vector<2x8x32xf32>,
    %c0_53 = arith.constant 0 : index
    %c0_54 = arith.constant 0 : index
    %c0_55 = arith.constant 0 : index
    %71 = vector.load %arg8[%c0_53, %c0_54, %c0_55] : memref<2x8x32xf32, #tpu.memory_space<vmem>>, vector<2x8x32xf32>
    %72 = vector.shape_cast %71 : vector<2x8x32xf32> to vector<16x32xf32>
    %c0_56 = arith.constant 0 : index
    %c0_57 = arith.constant 0 : index
    %73 = vector.load %arg4[%c0_56, %c0_57] : memref<32x32xf32, #tpu.memory_space<vmem>>, vector<32x32xf32>
    %cst_58 = arith.constant dense<0.000000e+00> : vector<16x32xf32>
    %74 = tpu.matmul %72, %73, %cst_58 {dimension_numbers = #tpu.dot_dimension_numbers<[1], [0], [0], [1], [0, 0, 1, 1], [], []>} : vector<16x32xf32>, vector<32x32xf32>, vector<16x32xf32> -> vector<16x32xf32>
    %c0_59 = arith.constant 0 : index
    %c0_60 = arith.constant 0 : index
    %75 = vector.load %arg5[%c0_59, %c0_60] : memref<1x32xf32, #tpu.memory_space<vmem>>, vector<1x32xf32>
    %76 = vector.broadcast %75 : vector<1x32xf32> to vector<16x32xf32>
    %77 = arith.addf %74, %76 : vector<16x32xf32>
    %78 = vector.shape_cast %77 : vector<16x32xf32> to vector<2x8x32xf32>
    %c0_61 = arith.constant 0 : index
    %c0_62 = arith.constant 0 : index
    %c0_63 = arith.constant 0 : index
    %79 = vector.load %arg6[%c0_61, %c0_62, %c0_63] : memref<2x8x32xf32, #tpu.memory_space<vmem>>, vector<2x8x32xf32>
    tpu.vector_store %arg6[%c0_61, %c0_62, %c0_63], %78 {strides = array<i32>} : memref<2x8x32xf32, #tpu.memory_space<vmem>>, vector<2x8x32xf32>,
    return
  }
  func.func @transform_0(%arg0: i32) -> (i32, i32, i32) {
    %c0_i32 = arith.constant 0 : i32
    %c0_i32_0 = arith.constant 0 : i32
    %c0_i32_1 = arith.constant 0 : i32
    return %arg0, %c0_i32, %c0_i32_0 : i32, i32, i32
  }
  func.func @transform_1(%arg0: i32) -> (i32, i32) {
    %c0_i32 = arith.constant 0 : i32
    %c0_i32_0 = arith.constant 0 : i32
    %c0_i32_1 = arith.constant 0 : i32
    return %c0_i32, %c0_i32_0 : i32, i32
  }
  func.func @transform_2(%arg0: i32) -> (i32, i32) {
    %c0_i32 = arith.constant 0 : i32
    %c0_i32_0 = arith.constant 0 : i32
    %c0_i32_1 = arith.constant 0 : i32
    return %c0_i32, %c0_i32_0 : i32, i32
  }
  func.func @transform_3(%arg0: i32) -> (i32, i32) {
    %c0_i32 = arith.constant 0 : i32
    %c0_i32_0 = arith.constant 0 : i32
    %c0_i32_1 = arith.constant 0 : i32
    return %c0_i32, %c0_i32_0 : i32, i32
  }
  func.func @transform_4(%arg0: i32) -> (i32, i32) {
    %c0_i32 = arith.constant 0 : i32
    %c0_i32_0 = arith.constant 0 : i32
    %c0_i32_1 = arith.constant 0 : i32
    return %c0_i32, %c0_i32_0 : i32, i32
  }
  func.func @transform_5(%arg0: i32) -> (i32, i32, i32) {
    %c0_i32 = arith.constant 0 : i32
    %c0_i32_0 = arith.constant 0 : i32
    %c0_i32_1 = arith.constant 0 : i32
    return %arg0, %c0_i32, %c0_i32_0 : i32, i32, i32
  }
}

</mosaic_0001>

<llo_original>
// kernel: tpu_custom_call.1
$region0: #{tpu_custom_call.1}
  #allocation0 [shape = 'u32[]', space=smem, size = 0x4, offset = 0x4, fixed_abs, tag = 'smem constant byte address 0x4 - core index']
  #allocation1 [shape = 'u32[144,128]{1,0:T(1,128)}', space=vmem, size = 0x12000, scoped, tag = 'internal scratch']
  #allocation2 [shape = 'f32[2,8,96]{2,1,0:T(8,128)}', space=vmem, size = 0x2000, scoped, tag = 'scratch operand']
  #allocation3 [shape = 'f32[2,8,32]{2,1,0:T(8,128)}', space=vmem, size = 0x2000, scoped, tag = 'scratch operand']
  %s0 = inlined_call_operand.hbm [shape: f32[2,8,32], index: 0, kind: input, shape index: {}]
  %s1 = inlined_call_operand.hbm [shape: f32[32,96], index: 1, kind: input, shape index: {}]
  %s2 = inlined_call_operand.vmem [shape: f32[1,96], index: 2, kind: input, shape index: {}]
  %s3 = inlined_call_operand.hbm [shape: f32[32,32], index: 3, kind: input, shape index: {}]
  %s4 = inlined_call_operand.vmem [shape: f32[1,32], index: 4, kind: input, shape index: {}]
  %s5 = inlined_call_operand.hbm [shape: f32[2,8,32], index: 5, kind: output, shape index: {}]
  %s6 = sld [smem:[#allocation0]]
  $region42: #{tpu_custom_call.1} parent=0
    _
  %s8 = ssub.s32 1, %s6
  %s9 = scalar_select 0, %s8, %s6
  $region1: #{tpu_custom_call.1} parent=0
    #allocation4 [shape = 'u8[8192]{0}', space=vmem, size = 0x2000, scoped, tag = 'input window, operand 0, single buffered']
    #allocation5 [shape = 's32[1]{0}', space=sflag, size = 0x4, scoped, tag = 'scoped memory for tpu_custom_call.1']
    #allocation6 [shape = 's32[1]{0}', space=sflag, size = 0x4, scoped, tag = 'scoped memory for tpu_custom_call.1']
    #allocation7 [shape = 'u8[16384]{0}', space=vmem, size = 0x4000, scoped, tag = 'input window, operand 1, single buffered']
    #allocation8 [shape = 's32[1]{0}', space=sflag, size = 0x4, scoped, tag = 'scoped memory for tpu_custom_call.1']
    #allocation9 [shape = 'u8[16384]{0}', space=vmem, size = 0x4000, scoped, tag = 'input window, operand 3, single buffered']
    #allocation10 [shape = 'u8[8192]{0}', space=vmem, size = 0x2000, scoped, tag = 'output window, operand 0, single buffered']
    %10 = vsyncpa [#allocation5], 0
    %11 = vsyncpa [#allocation8], 0
    %12 = vsyncpa [#allocation6], 0
    // Predicated region
    $region2: #{tpu_custom_call.1} parent=1 // pred_check
      _
    $region3: #{tpu_custom_call.1} parent=1 // pred_check_branch
      %14 = sbr.rel (0) target = $region5
    $region4: #{tpu_custom_call.1} parent=1 // pred_region
      %s16 = ssub.s32 256, 256
      %17 = vsyncadd [#allocation5], %s16
      %s18 = sshll.u32 [#allocation4], 4
      %s19 = int_to_ptr.vmem [resolvable:$true] %s18
      %24 = dma.hbm_to_vmem [thread:$0]  %s0, 256, %s19, [#allocation5], 128, 128, 8
    $region5: #{tpu_custom_call.1} parent=1 // pred_fallthru
      _
    // Predicated region
    $region6: #{tpu_custom_call.1} parent=1 // pred_check
      _
    $region7: #{tpu_custom_call.1} parent=1 // pred_check_branch
      %26 = sbr.rel (0) target = $region9
    $region8: #{tpu_custom_call.1} parent=1 // pred_region
      %s28 = ssub.s32 512, 512
      %29 = vsyncadd [#allocation8], %s28
      %s30 = sshll.u32 [#allocation7], 4
      %s31 = int_to_ptr.vmem [resolvable:$true] %s30
      %36 = dma.hbm_to_vmem [thread:$0]  %s1, 512, %s31, [#allocation8], 128, 128, 8
    $region9: #{tpu_custom_call.1} parent=1 // pred_fallthru
      _
    // Predicated region
    $region10: #{tpu_custom_call.1} parent=1 // pred_check
      _
    $region11: #{tpu_custom_call.1} parent=1 // pred_check_branch
      %38 = sbr.rel (0) target = $region13
    $region12: #{tpu_custom_call.1} parent=1 // pred_region
      _
    $region13: #{tpu_custom_call.1} parent=1 // pred_fallthru
      _
    // Predicated region
    $region14: #{tpu_custom_call.1} parent=1 // pred_check
      _
    $region15: #{tpu_custom_call.1} parent=1 // pred_check_branch
      %40 = sbr.rel (0) target = $region17
    $region16: #{tpu_custom_call.1} parent=1 // pred_region
      %s42 = ssub.s32 512, 512
      %43 = vsyncadd [#allocation8], %s42
      %s44 = sshll.u32 [#allocation9], 4
      %s45 = int_to_ptr.vmem [resolvable:$true] %s44
      %50 = dma.hbm_to_vmem [thread:$0]  %s3, 512, %s45, [#allocation8], 128, 128, 8
    $region17: #{tpu_custom_call.1} parent=1 // pred_fallthru
      _
    // Predicated region
    $region18: #{tpu_custom_call.1} parent=1 // pred_check
      _
    $region19: #{tpu_custom_call.1} parent=1 // pred_check_branch
      %52 = sbr.rel (0) target = $region21
    $region20: #{tpu_custom_call.1} parent=1 // pred_region
      _
    $region21: #{tpu_custom_call.1} parent=1 // pred_fallthru
      _
    // Predicated region
    $region22: #{tpu_custom_call.1} parent=1 // pred_check
      _
    $region23: #{tpu_custom_call.1} parent=1 // pred_check_branch
      %54 = sbr.rel (0) target = $region25
    $region24: #{tpu_custom_call.1} parent=1 // pred_region
      %55 = dma.done [#allocation5], 256
    $region25: #{tpu_custom_call.1} parent=1 // pred_fallthru
      _
    // Predicated region
    $region26: #{tpu_custom_call.1} parent=1 // pred_check
      _
    $region27: #{tpu_custom_call.1} parent=1 // pred_check_branch
      %57 = sbr.rel (0) target = $region29
    $region28: #{tpu_custom_call.1} parent=1 // pred_region
      %58 = dma.done [#allocation8], 512
    $region29: #{tpu_custom_call.1} parent=1 // pred_fallthru
      _
    // Predicated region
    $region30: #{tpu_custom_call.1} parent=1 // pred_check
      _
    $region31: #{tpu_custom_call.1} parent=1 // pred_check_branch
      %60 = sbr.rel (0) target = $region33
    $region32: #{tpu_custom_call.1} parent=1 // pred_region
      %61 = dma.done [#allocation8], 512
    $region33: #{tpu_custom_call.1} parent=1 // pred_fallthru
      _
    %v62 = vld [vmem:[#allocation4] sm:$0xff]
    %v63 = vld [vmem:[#allocation4 + $0x8] sm:$0xff]
    %v64 = vld [vmem:[#allocation7] sm:$0xff]
    %v65 = vld [vmem:[#allocation7 + $0x8] sm:$0xff]
    %v66 = vld [vmem:[#allocation7 + $0x10] sm:$0xff]
    %v67 = vld [vmem:[#allocation7 + $0x18] sm:$0xff]
    %v68 = vld [vmem:[%s2] sm:$0x1]
    %v70 = vlaneseq
    %v71 = vshrl.u32 %v70, 7
    %v72 = vsub.s32 0, %v71
    %v73 = vrot.slane %v68, %v72
    %vm75 = vcmask 261120
    %v77 = vsel %vm75, %v62, 0
    %v80 = vsel %vm75, %v63, 0
    %82 = vmatprep.subr.mxu0 0.0
    %83 = vmatpush1.msra.mxu0 %v64
    %84 = vmatprep.subr.mxu0 0.0
    %85 = vmatpush1.msra.mxu0 %v65
    %86 = vmatprep.subr.mxu0 0.0
    %87 = vmatpush1.msra.mxu0 %v66
    %88 = vmatprep.subr.mxu0 0.0
    %89 = vmatpush1.msra.mxu0 %v67
    %90 = vmatprep.subr.mxu0 0.0
    %91 = vmatpush1.msra.mxu0 0.0
    %92 = vmatprep.subr.mxu0 0.0
    %93 = vmatpush1.msra.mxu0 0.0
    %94 = vmatprep.subr.mxu0 0.0
    %95 = vmatpush1.msra.mxu0 0.0
    %96 = vmatprep.subr.mxu0 0.0
    %97 = vmatpush1.msra.mxu0 0.0
    %98 = vmatprep.subr.mxu0 0.0
    %99 = vmatpush1.msra.mxu0 0.0
    %100 = vmatprep.subr.mxu0 0.0
    %101 = vmatpush1.msra.mxu0 0.0
    %102 = vmatprep.subr.mxu0 0.0
    %103 = vmatpush1.msra.mxu0 0.0
    %104 = vmatprep.subr.mxu0 0.0
    %105 = vmatpush1.msra.mxu0 0.0
    %106 = vmatprep.subr.mxu0 0.0
    %107 = vmatpush1.msra.mxu0 0.0
    %108 = vmatprep.subr.mxu0 0.0
    %109 = vmatpush1.msra.mxu0 0.0
    %110 = vmatprep.subr.mxu0 0.0
    %111 = vmatpush1.msra.mxu0 0.0
    %112 = vmatprep.subr.mxu0 0.0
    %113 = vmatpush1.msra.mxu0 0.0
    %114 = vmatprep.subr.mxu0 0.0
    %115 = vmatpush1.msra.mxu0 0.0
    %116 = vmatprep.subr.mxu0 0.0
    %117 = vmatpush1.msra.mxu0 0.0
    %118 = vmatprep.subr.mxu0 0.0
    %119 = vmatpush1.msra.mxu0 0.0
    %120 = vmatprep.subr.mxu0 0.0
    %121 = vmatpush1.msra.mxu0 0.0
    %122 = vmatprep.subr.mxu0 0.0
    %123 = vmatpush1.msra.mxu0 0.0
    %124 = vmatprep.subr.mxu0 0.0
    %125 = vmatpush1.msra.mxu0 0.0
    %126 = vmatprep.subr.mxu0 0.0
    %127 = vmatpush1.msra.mxu0 0.0
    %128 = vmatprep.subr.mxu0 0.0
    %129 = vmatpush1.msra.mxu0 0.0
    %130 = vmatprep.subr.mxu0 0.0
    %131 = vmatpush1.msra.mxu0 0.0
    %132 = vmatprep.subr.mxu0 0.0
    %133 = vmatpush1.msra.mxu0 0.0
    %134 = vmatprep.subr.mxu0 0.0
    %135 = vmatpush1.msra.mxu0 0.0
    %136 = vmatprep.subr.mxu0 0.0
    %137 = vmatpush1.msra.mxu0 0.0
    %138 = vmatprep.subr.mxu0 0.0
    %139 = vmatpush1.msra.mxu0 0.0
    %140 = vmatprep.subr.mxu0 0.0
    %141 = vmatpush1.msra.mxu0 0.0
    %142 = vmatprep.subr.mxu0 0.0
    %143 = vmatpush1.msra.mxu0 0.0
    %144 = vmatprep.subr.mxu0 0.0
    %145 = vmatpush1.msra.mxu0 0.0
    %146 = vmatprep.mubr.f32.mxu0 0.0
    %147 = vmatmul.mubr.f32.gmra.mrb[0].mxu0 %v77
    %v148 = vpop.f32.mrb[0].mxu0
    %v149 = vadd.f32 %v73, %v148
    %v150 = vpop.f32.mrb[0].mxu0
    %151 = vmatprep.mubr.f32.mxu0 0.0
    %152 = vmatmul.mubr.f32.gmra.mrb[0].mxu0 %v80
    %v153 = vpop.f32.mrb[0].mxu0
    %v154 = vadd.f32 %v73, %v153
    %v155 = vpop.f32.mrb[0].mxu0
    %156 = vdwg.mxu0
    %vm157 = vcmask 785408
    %158 = vst.msk [vmem:[#allocation2] sm:$0xff] %vm157, %v149
    %159 = vst.msk [vmem:[#allocation2 + $0x8] sm:$0xff] %vm157, %v154
    %v160 = vld [vmem:[#allocation2] sm:$0xff]
    %v161 = vld [vmem:[#allocation2 + $0x8] sm:$0xff]
    %163 = vrot.lane.b32.xlu0 %v160, 96
    %v164 = vpop.permute.xlu0 %163
    %vm165 = vcmask 64512
    %v166 = vsel %vm165, %v160, 0
    %v168 = vsel %vm165, %v164, 0
    %170 = vmatprep.subr.mxu0 0.0
    %171 = vmatpush1.xpose.msra.mxu0 %v168
    %172 = vmatprep.subr.mxu0 0.0
    %173 = vmatpush1.xpose.msra.mxu0 0.0
    %174 = vmatprep.subr.mxu0 0.0
    %175 = vmatpush1.xpose.msra.mxu0 0.0
    %176 = vmatprep.subr.mxu0 0.0
    %177 = vmatpush1.xpose.msra.mxu0 0.0
    %178 = vmatprep.subr.mxu0 0.0
    %179 = vmatpush1.xpose.msra.mxu0 0.0
    %180 = vmatprep.subr.mxu0 0.0
    %181 = vmatpush1.xpose.msra.mxu0 0.0
    %182 = vmatprep.subr.mxu0 0.0
    %183 = vmatpush1.xpose.msra.mxu0 0.0
    %184 = vmatprep.subr.mxu0 0.0
    %185 = vmatpush1.xpose.msra.mxu0 0.0
    %186 = vmatprep.subr.mxu0 0.0
    %187 = vmatpush1.xpose.msra.mxu0 0.0
    %188 = vmatprep.subr.mxu0 0.0
    %189 = vmatpush1.xpose.msra.mxu0 0.0
    %190 = vmatprep.subr.mxu0 0.0
    %191 = vmatpush1.xpose.msra.mxu0 0.0
    %192 = vmatprep.subr.mxu0 0.0
    %193 = vmatpush1.xpose.msra.mxu0 0.0
    %194 = vmatprep.subr.mxu0 0.0
    %195 = vmatpush1.xpose.msra.mxu0 0.0
    %196 = vmatprep.subr.mxu0 0.0
    %197 = vmatpush1.xpose.msra.mxu0 0.0
    %198 = vmatprep.subr.mxu0 0.0
    %199 = vmatpush1.xpose.msra.mxu0 0.0
    %200 = vmatprep.subr.mxu0 0.0
    %201 = vmatpush1.xpose.msra.mxu0 0.0
    %202 = vmatprep.subr.mxu0 0.0
    %203 = vmatpush1.xpose.msra.mxu0 0.0
    %204 = vmatprep.subr.mxu0 0.0
    %205 = vmatpush1.xpose.msra.mxu0 0.0
    %206 = vmatprep.subr.mxu0 0.0
    %207 = vmatpush1.xpose.msra.mxu0 0.0
    %208 = vmatprep.subr.mxu0 0.0
    %209 = vmatpush1.xpose.msra.mxu0 0.0
    %210 = vmatprep.subr.mxu0 0.0
    %211 = vmatpush1.xpose.msra.mxu0 0.0
    %212 = vmatprep.subr.mxu0 0.0
    %213 = vmatpush1.xpose.msra.mxu0 0.0
    %214 = vmatprep.subr.mxu0 0.0
    %215 = vmatpush1.xpose.msra.mxu0 0.0
    %216 = vmatprep.subr.mxu0 0.0
    %217 = vmatpush1.xpose.msra.mxu0 0.0
    %218 = vmatprep.subr.mxu0 0.0
    %219 = vmatpush1.xpose.msra.mxu0 0.0
    %220 = vmatprep.subr.mxu0 0.0
    %221 = vmatpush1.xpose.msra.mxu0 0.0
    %222 = vmatprep.subr.mxu0 0.0
    %223 = vmatpush1.xpose.msra.mxu0 0.0
    %224 = vmatprep.subr.mxu0 0.0
    %225 = vmatpush1.xpose.msra.mxu0 0.0
    %226 = vmatprep.subr.mxu0 0.0
    %227 = vmatpush1.xpose.msra.mxu0 0.0
    %228 = vmatprep.subr.mxu0 0.0
    %229 = vmatpush1.xpose.msra.mxu0 0.0
    %230 = vmatprep.subr.mxu0 0.0
    %231 = vmatpush1.xpose.msra.mxu0 0.0
    %232 = vmatprep.subr.mxu0 0.0
    %233 = vmatpush1.xpose.msra.mxu0 0.0
    %234 = vmatprep.mubr.f32.mxu0 0.0
    %235 = vmatmul.mubr.f32.gmra.mrb[0].mxu0 %v166
    %v236 = vpop.f32.mrb[0].mxu0
    %v237 = vadd.f32 0.0, %v236
    %v238 = vpop.f32.mrb[0].mxu0
    %239 = vdwg.mxu0
    %241 = vrot.lane.b32.xlu0 %v161, 96
    %v242 = vpop.permute.xlu0 %241
    %v243 = vsel %vm165, %v161, 0
    %v245 = vsel %vm165, %v242, 0
    %247 = vmatprep.subr.mxu0 0.0
    %248 = vmatpush1.xpose.msra.mxu0 %v245
    %249 = vmatprep.subr.mxu0 0.0
    %250 = vmatpush1.xpose.msra.mxu0 0.0
    %251 = vmatprep.subr.mxu0 0.0
    %252 = vmatpush1.xpose.msra.mxu0 0.0
    %253 = vmatprep.subr.mxu0 0.0
    %254 = vmatpush1.xpose.msra.mxu0 0.0
    %255 = vmatprep.subr.mxu0 0.0
    %256 = vmatpush1.xpose.msra.mxu0 0.0
    %257 = vmatprep.subr.mxu0 0.0
    %258 = vmatpush1.xpose.msra.mxu0 0.0
    %259 = vmatprep.subr.mxu0 0.0
    %260 = vmatpush1.xpose.msra.mxu0 0.0
    %261 = vmatprep.subr.mxu0 0.0
    %262 = vmatpush1.xpose.msra.mxu0 0.0
    %263 = vmatprep.subr.mxu0 0.0
    %264 = vmatpush1.xpose.msra.mxu0 0.0
    %265 = vmatprep.subr.mxu0 0.0
    %266 = vmatpush1.xpose.msra.mxu0 0.0
    %267 = vmatprep.subr.mxu0 0.0
    %268 = vmatpush1.xpose.msra.mxu0 0.0
    %269 = vmatprep.subr.mxu0 0.0
    %270 = vmatpush1.xpose.msra.mxu0 0.0
    %271 = vmatprep.subr.mxu0 0.0
    %272 = vmatpush1.xpose.msra.mxu0 0.0
    %273 = vmatprep.subr.mxu0 0.0
    %274 = vmatpush1.xpose.msra.mxu0 0.0
    %275 = vmatprep.subr.mxu0 0.0
    %276 = vmatpush1.xpose.msra.mxu0 0.0
    %277 = vmatprep.subr.mxu0 0.0
    %278 = vmatpush1.xpose.msra.mxu0 0.0
    %279 = vmatprep.subr.mxu0 0.0
    %280 = vmatpush1.xpose.msra.mxu0 0.0
    %281 = vmatprep.subr.mxu0 0.0
    %282 = vmatpush1.xpose.msra.mxu0 0.0
    %283 = vmatprep.subr.mxu0 0.0
    %284 = vmatpush1.xpose.msra.mxu0 0.0
    %285 = vmatprep.subr.mxu0 0.0
    %286 = vmatpush1.xpose.msra.mxu0 0.0
    %287 = vmatprep.subr.mxu0 0.0
    %288 = vmatpush1.xpose.msra.mxu0 0.0
    %289 = vmatprep.subr.mxu0 0.0
    %290 = vmatpush1.xpose.msra.mxu0 0.0
    %291 = vmatprep.subr.mxu0 0.0
    %292 = vmatpush1.xpose.msra.mxu0 0.0
    %293 = vmatprep.subr.mxu0 0.0
    %294 = vmatpush1.xpose.msra.mxu0 0.0
    %295 = vmatprep.subr.mxu0 0.0
    %296 = vmatpush1.xpose.msra.mxu0 0.0
    %297 = vmatprep.subr.mxu0 0.0
    %298 = vmatpush1.xpose.msra.mxu0 0.0
    %299 = vmatprep.subr.mxu0 0.0
    %300 = vmatpush1.xpose.msra.mxu0 0.0
    %301 = vmatprep.subr.mxu0 0.0
    %302 = vmatpush1.xpose.msra.mxu0 0.0
    %303 = vmatprep.subr.mxu0 0.0
    %304 = vmatpush1.xpose.msra.mxu0 0.0
    %305 = vmatprep.subr.mxu0 0.0
    %306 = vmatpush1.xpose.msra.mxu0 0.0
    %307 = vmatprep.subr.mxu0 0.0
    %308 = vmatpush1.xpose.msra.mxu0 0.0
    %309 = vmatprep.subr.mxu0 0.0
    %310 = vmatpush1.xpose.msra.mxu0 0.0
    %311 = vmatprep.mubr.f32.mxu0 0.0
    %312 = vmatmul.mubr.f32.gmra.mrb[0].mxu0 %v243
    %v313 = vpop.f32.mrb[0].mxu0
    %v314 = vadd.f32 0.0, %v313
    %v315 = vpop.f32.mrb[0].mxu0
    %316 = vdwg.mxu0
    %v317 = vsel %vm165, %v237, -inf
    %318 = vmax.xlane.f32.xlu0 %v317
    %v319 = vpop.xlane.xlu0 %318
    %v320 = vsel %vm165, %v314, -inf
    %321 = vmax.xlane.f32.xlu0 %v320
    %v322 = vpop.xlane.xlu0 %321
    %v323 = vsub.f32 %v237, %v319
    %v324 = vsub.f32 %v314, %v322
    %v325 = vmul.f32 %v323, 1.442695
    %v326 = vpow.pop %v325
    %v327 = vmul.f32 %v324, 1.442695
    %v328 = vpow.pop %v327
    %v329 = vsel %vm165, %v326, 0.0
    %330 = vadd.xlane.f32.xlu0 %v329
    %v331 = vpop.xlane.xlu0 %330
    %v332 = vsel %vm165, %v328, 0.0
    %333 = vadd.xlane.f32.xlu0 %v332
    %v334 = vpop.xlane.xlu0 %333
    %335 = vrot.lane.b32.xlu0 %v160, 64
    %v336 = vpop.permute.xlu0 %335
    %v339 = vsel %vm165, %v326, 0
    %341 = vmatprep.subr.mxu0 0.0
    %342 = vmatpush1.msra.mxu0 %v336
    %343 = vmatprep.subr.mxu0 0.0
    %344 = vmatpush1.msra.mxu0 0.0
    %345 = vmatprep.subr.mxu0 0.0
    %346 = vmatpush1.msra.mxu0 0.0
    %347 = vmatprep.subr.mxu0 0.0
    %348 = vmatpush1.msra.mxu0 0.0
    %349 = vmatprep.subr.mxu0 0.0
    %350 = vmatpush1.msra.mxu0 0.0
    %351 = vmatprep.subr.mxu0 0.0
    %352 = vmatpush1.msra.mxu0 0.0
    %353 = vmatprep.subr.mxu0 0.0
    %354 = vmatpush1.msra.mxu0 0.0
    %355 = vmatprep.subr.mxu0 0.0
    %356 = vmatpush1.msra.mxu0 0.0
    %357 = vmatprep.subr.mxu0 0.0
    %358 = vmatpush1.msra.mxu0 0.0
    %359 = vmatprep.subr.mxu0 0.0
    %360 = vmatpush1.msra.mxu0 0.0
    %361 = vmatprep.subr.mxu0 0.0
    %362 = vmatpush1.msra.mxu0 0.0
    %363 = vmatprep.subr.mxu0 0.0
    %364 = vmatpush1.msra.mxu0 0.0
    %365 = vmatprep.subr.mxu0 0.0
    %366 = vmatpush1.msra.mxu0 0.0
    %367 = vmatprep.subr.mxu0 0.0
    %368 = vmatpush1.msra.mxu0 0.0
    %369 = vmatprep.subr.mxu0 0.0
    %370 = vmatpush1.msra.mxu0 0.0
    %371 = vmatprep.subr.mxu0 0.0
    %372 = vmatpush1.msra.mxu0 0.0
    %373 = vmatprep.subr.mxu0 0.0
    %374 = vmatpush1.msra.mxu0 0.0
    %375 = vmatprep.subr.mxu0 0.0
    %376 = vmatpush1.msra.mxu0 0.0
    %377 = vmatprep.subr.mxu0 0.0
    %378 = vmatpush1.msra.mxu0 0.0
    %379 = vmatprep.subr.mxu0 0.0
    %380 = vmatpush1.msra.mxu0 0.0
    %381 = vmatprep.subr.mxu0 0.0
    %382 = vmatpush1.msra.mxu0 0.0
    %383 = vmatprep.subr.mxu0 0.0
    %384 = vmatpush1.msra.mxu0 0.0
    %385 = vmatprep.subr.mxu0 0.0
    %386 = vmatpush1.msra.mxu0 0.0
    %387 = vmatprep.subr.mxu0 0.0
    %388 = vmatpush1.msra.mxu0 0.0
    %389 = vmatprep.subr.mxu0 0.0
    %390 = vmatpush1.msra.mxu0 0.0
    %391 = vmatprep.subr.mxu0 0.0
    %392 = vmatpush1.msra.mxu0 0.0
    %393 = vmatprep.subr.mxu0 0.0
    %394 = vmatpush1.msra.mxu0 0.0
    %395 = vmatprep.subr.mxu0 0.0
    %396 = vmatpush1.msra.mxu0 0.0
    %397 = vmatprep.subr.mxu0 0.0
    %398 = vmatpush1.msra.mxu0 0.0
    %399 = vmatprep.subr.mxu0 0.0
    %400 = vmatpush1.msra.mxu0 0.0
    %401 = vmatprep.subr.mxu0 0.0
    %402 = vmatpush1.msra.mxu0 0.0
    %403 = vmatprep.subr.mxu0 0.0
    %404 = vmatpush1.msra.mxu0 0.0
    %405 = vmatprep.mubr.f32.mxu0 0.0
    %406 = vmatmul.mubr.f32.gmra.mrb[0].mxu0 %v339
    %v407 = vpop.f32.mrb[0].mxu0
    %v408 = vadd.f32 0.0, %v407
    %v409 = vpop.f32.mrb[0].mxu0
    %410 = vdwg.mxu0
    %411 = vrot.lane.b32.xlu0 %v161, 64
    %v412 = vpop.permute.xlu0 %411
    %v415 = vsel %vm165, %v328, 0
    %417 = vmatprep.subr.mxu0 0.0
    %418 = vmatpush1.msra.mxu0 %v412
    %419 = vmatprep.subr.mxu0 0.0
    %420 = vmatpush1.msra.mxu0 0.0
    %421 = vmatprep.subr.mxu0 0.0
    %422 = vmatpush1.msra.mxu0 0.0
    %423 = vmatprep.subr.mxu0 0.0
    %424 = vmatpush1.msra.mxu0 0.0
    %425 = vmatprep.subr.mxu0 0.0
    %426 = vmatpush1.msra.mxu0 0.0
    %427 = vmatprep.subr.mxu0 0.0
    %428 = vmatpush1.msra.mxu0 0.0
    %429 = vmatprep.subr.mxu0 0.0
    %430 = vmatpush1.msra.mxu0 0.0
    %431 = vmatprep.subr.mxu0 0.0
    %432 = vmatpush1.msra.mxu0 0.0
    %433 = vmatprep.subr.mxu0 0.0
    %434 = vmatpush1.msra.mxu0 0.0
    %435 = vmatprep.subr.mxu0 0.0
    %436 = vmatpush1.msra.mxu0 0.0
    %437 = vmatprep.subr.mxu0 0.0
    %438 = vmatpush1.msra.mxu0 0.0
    %439 = vmatprep.subr.mxu0 0.0
    %440 = vmatpush1.msra.mxu0 0.0
    %441 = vmatprep.subr.mxu0 0.0
    %442 = vmatpush1.msra.mxu0 0.0
    %443 = vmatprep.subr.mxu0 0.0
    %444 = vmatpush1.msra.mxu0 0.0
    %445 = vmatprep.subr.mxu0 0.0
    %446 = vmatpush1.msra.mxu0 0.0
    %447 = vmatprep.subr.mxu0 0.0
    %448 = vmatpush1.msra.mxu0 0.0
    %449 = vmatprep.subr.mxu0 0.0
    %450 = vmatpush1.msra.mxu0 0.0
    %451 = vmatprep.subr.mxu0 0.0
    %452 = vmatpush1.msra.mxu0 0.0
    %453 = vmatprep.subr.mxu0 0.0
    %454 = vmatpush1.msra.mxu0 0.0
    %455 = vmatprep.subr.mxu0 0.0
    %456 = vmatpush1.msra.mxu0 0.0
    %457 = vmatprep.subr.mxu0 0.0
    %458 = vmatpush1.msra.mxu0 0.0
    %459 = vmatprep.subr.mxu0 0.0
    %460 = vmatpush1.msra.mxu0 0.0
    %461 = vmatprep.subr.mxu0 0.0
    %462 = vmatpush1.msra.mxu0 0.0
    %463 = vmatprep.subr.mxu0 0.0
    %464 = vmatpush1.msra.mxu0 0.0
    %465 = vmatprep.subr.mxu0 0.0
    %466 = vmatpush1.msra.mxu0 0.0
    %467 = vmatprep.subr.mxu0 0.0
    %468 = vmatpush1.msra.mxu0 0.0
    %469 = vmatprep.subr.mxu0 0.0
    %470 = vmatpush1.msra.mxu0 0.0
    %471 = vmatprep.subr.mxu0 0.0
    %472 = vmatpush1.msra.mxu0 0.0
    %473 = vmatprep.subr.mxu0 0.0
    %474 = vmatpush1.msra.mxu0 0.0
    %475 = vmatprep.subr.mxu0 0.0
    %476 = vmatpush1.msra.mxu0 0.0
    %477 = vmatprep.subr.mxu0 0.0
    %478 = vmatpush1.msra.mxu0 0.0
    %479 = vmatprep.subr.mxu0 0.0
    %480 = vmatpush1.msra.mxu0 0.0
    %481 = vmatprep.mubr.f32.mxu0 0.0
    %482 = vmatmul.mubr.f32.gmra.mrb[0].mxu0 %v415
    %v483 = vpop.f32.mrb[0].mxu0
    %v484 = vadd.f32 0.0, %v483
    %v485 = vpop.f32.mrb[0].mxu0
    %486 = vdwg.mxu0
    %v487 = vrcp.pop %v331
    %v488 = vrcp.pop %v334
    %v489 = vmul.f32 %v408, %v487
    %v490 = vmul.f32 %v484, %v488
    %491 = vrot.lane.b32.xlu0 %v160, 120
    %v492 = vpop.permute.xlu0 %491
    %493 = vrot.lane.b32.xlu0 %v160, 88
    %v494 = vpop.permute.xlu0 %493
    %v495 = vsel %vm165, %v492, 0
    %v497 = vsel %vm165, %v494, 0
    %499 = vmatprep.subr.mxu0 0.0
    %500 = vmatpush1.xpose.msra.mxu0 %v497
    %501 = vmatprep.subr.mxu0 0.0
    %502 = vmatpush1.xpose.msra.mxu0 0.0
    %503 = vmatprep.subr.mxu0 0.0
    %504 = vmatpush1.xpose.msra.mxu0 0.0
    %505 = vmatprep.subr.mxu0 0.0
    %506 = vmatpush1.xpose.msra.mxu0 0.0
    %507 = vmatprep.subr.mxu0 0.0
    %508 = vmatpush1.xpose.msra.mxu0 0.0
    %509 = vmatprep.subr.mxu0 0.0
    %510 = vmatpush1.xpose.msra.mxu0 0.0
    %511 = vmatprep.subr.mxu0 0.0
    %512 = vmatpush1.xpose.msra.mxu0 0.0
    %513 = vmatprep.subr.mxu0 0.0
    %514 = vmatpush1.xpose.msra.mxu0 0.0
    %515 = vmatprep.subr.mxu0 0.0
    %516 = vmatpush1.xpose.msra.mxu0 0.0
    %517 = vmatprep.subr.mxu0 0.0
    %518 = vmatpush1.xpose.msra.mxu0 0.0
    %519 = vmatprep.subr.mxu0 0.0
    %520 = vmatpush1.xpose.msra.mxu0 0.0
    %521 = vmatprep.subr.mxu0 0.0
    %522 = vmatpush1.xpose.msra.mxu0 0.0
    %523 = vmatprep.subr.mxu0 0.0
    %524 = vmatpush1.xpose.msra.mxu0 0.0
    %525 = vmatprep.subr.mxu0 0.0
    %526 = vmatpush1.xpose.msra.mxu0 0.0
    %527 = vmatprep.subr.mxu0 0.0
    %528 = vmatpush1.xpose.msra.mxu0 0.0
    %529 = vmatprep.subr.mxu0 0.0
    %530 = vmatpush1.xpose.msra.mxu0 0.0
    %531 = vmatprep.subr.mxu0 0.0
    %532 = vmatpush1.xpose.msra.mxu0 0.0
    %533 = vmatprep.subr.mxu0 0.0
    %534 = vmatpush1.xpose.msra.mxu0 0.0
    %535 = vmatprep.subr.mxu0 0.0
    %536 = vmatpush1.xpose.msra.mxu0 0.0
    %537 = vmatprep.subr.mxu0 0.0
    %538 = vmatpush1.xpose.msra.mxu0 0.0
    %539 = vmatprep.subr.mxu0 0.0
    %540 = vmatpush1.xpose.msra.mxu0 0.0
    %541 = vmatprep.subr.mxu0 0.0
    %542 = vmatpush1.xpose.msra.mxu0 0.0
    %543 = vmatprep.subr.mxu0 0.0
    %544 = vmatpush1.xpose.msra.mxu0 0.0
    %545 = vmatprep.subr.mxu0 0.0
    %546 = vmatpush1.xpose.msra.mxu0 0.0
    %547 = vmatprep.subr.mxu0 0.0
    %548 = vmatpush1.xpose.msra.mxu0 0.0
    %549 = vmatprep.subr.mxu0 0.0
    %550 = vmatpush1.xpose.msra.mxu0 0.0
    %551 = vmatprep.subr.mxu0 0.0
    %552 = vmatpush1.xpose.msra.mxu0 0.0
    %553 = vmatprep.subr.mxu0 0.0
    %554 = vmatpush1.xpose.msra.mxu0 0.0
    %555 = vmatprep.subr.mxu0 0.0
    %556 = vmatpush1.xpose.msra.mxu0 0.0
    %557 = vmatprep.subr.mxu0 0.0
    %558 = vmatpush1.xpose.msra.mxu0 0.0
    %559 = vmatprep.subr.mxu0 0.0
    %560 = vmatpush1.xpose.msra.mxu0 0.0
    %561 = vmatprep.subr.mxu0 0.0
    %562 = vmatpush1.xpose.msra.mxu0 0.0
    %563 = vmatprep.mubr.f32.mxu0 0.0
    %564 = vmatmul.mubr.f32.gmra.mrb[0].mxu0 %v495
    %v565 = vpop.f32.mrb[0].mxu0
    %v566 = vadd.f32 0.0, %v565
    %v567 = vpop.f32.mrb[0].mxu0
    %568 = vdwg.mxu0
    %569 = vrot.lane.b32.xlu0 %v161, 120
    %v570 = vpop.permute.xlu0 %569
    %571 = vrot.lane.b32.xlu0 %v161, 88
    %v572 = vpop.permute.xlu0 %571
    %v573 = vsel %vm165, %v570, 0
    %v575 = vsel %vm165, %v572, 0
    %577 = vmatprep.subr.mxu0 0.0
    %578 = vmatpush1.xpose.msra.mxu0 %v575
    %579 = vmatprep.subr.mxu0 0.0
    %580 = vmatpush1.xpose.msra.mxu0 0.0
    %581 = vmatprep.subr.mxu0 0.0
    %582 = vmatpush1.xpose.msra.mxu0 0.0
    %583 = vmatprep.subr.mxu0 0.0
    %584 = vmatpush1.xpose.msra.mxu0 0.0
    %585 = vmatprep.subr.mxu0 0.0
    %586 = vmatpush1.xpose.msra.mxu0 0.0
    %587 = vmatprep.subr.mxu0 0.0
    %588 = vmatpush1.xpose.msra.mxu0 0.0
    %589 = vmatprep.subr.mxu0 0.0
    %590 = vmatpush1.xpose.msra.mxu0 0.0
    %591 = vmatprep.subr.mxu0 0.0
    %592 = vmatpush1.xpose.msra.mxu0 0.0
    %593 = vmatprep.subr.mxu0 0.0
    %594 = vmatpush1.xpose.msra.mxu0 0.0
    %595 = vmatprep.subr.mxu0 0.0
    %596 = vmatpush1.xpose.msra.mxu0 0.0
    %597 = vmatprep.subr.mxu0 0.0
    %598 = vmatpush1.xpose.msra.mxu0 0.0
    %599 = vmatprep.subr.mxu0 0.0
    %600 = vmatpush1.xpose.msra.mxu0 0.0
    %601 = vmatprep.subr.mxu0 0.0
    %602 = vmatpush1.xpose.msra.mxu0 0.0
    %603 = vmatprep.subr.mxu0 0.0
    %604 = vmatpush1.xpose.msra.mxu0 0.0
    %605 = vmatprep.subr.mxu0 0.0
    %606 = vmatpush1.xpose.msra.mxu0 0.0
    %607 = vmatprep.subr.mxu0 0.0
    %608 = vmatpush1.xpose.msra.mxu0 0.0
    %609 = vmatprep.subr.mxu0 0.0
    %610 = vmatpush1.xpose.msra.mxu0 0.0
    %611 = vmatprep.subr.mxu0 0.0
    %612 = vmatpush1.xpose.msra.mxu0 0.0
    %613 = vmatprep.subr.mxu0 0.0
    %614 = vmatpush1.xpose.msra.mxu0 0.0
    %615 = vmatprep.subr.mxu0 0.0
    %616 = vmatpush1.xpose.msra.mxu0 0.0
    %617 = vmatprep.subr.mxu0 0.0
    %618 = vmatpush1.xpose.msra.mxu0 0.0
    %619 = vmatprep.subr.mxu0 0.0
    %620 = vmatpush1.xpose.msra.mxu0 0.0
    %621 = vmatprep.subr.mxu0 0.0
    %622 = vmatpush1.xpose.msra.mxu0 0.0
    %623 = vmatprep.subr.mxu0 0.0
    %624 = vmatpush1.xpose.msra.mxu0 0.0
    %625 = vmatprep.subr.mxu0 0.0
    %626 = vmatpush1.xpose.msra.mxu0 0.0
    %627 = vmatprep.subr.mxu0 0.0
    %628 = vmatpush1.xpose.msra.mxu0 0.0
    %629 = vmatprep.subr.mxu0 0.0
    %630 = vmatpush1.xpose.msra.mxu0 0.0
    %631 = vmatprep.subr.mxu0 0.0
    %632 = vmatpush1.xpose.msra.mxu0 0.0
    %633 = vmatprep.subr.mxu0 0.0
    %634 = vmatpush1.xpose.msra.mxu0 0.0
    %635 = vmatprep.subr.mxu0 0.0
    %636 = vmatpush1.xpose.msra.mxu0 0.0
    %637 = vmatprep.subr.mxu0 0.0
    %638 = vmatpush1.xpose.msra.mxu0 0.0
    %639 = vmatprep.subr.mxu0 0.0
    %640 = vmatpush1.xpose.msra.mxu0 0.0
    %641 = vmatprep.mubr.f32.mxu0 0.0
    %642 = vmatmul.mubr.f32.gmra.mrb[0].mxu0 %v573
    %v643 = vpop.f32.mrb[0].mxu0
    %v644 = vadd.f32 0.0, %v643
    %v645 = vpop.f32.mrb[0].mxu0
    %646 = vdwg.mxu0
    %v647 = vsel %vm165, %v566, -inf
    %648 = vmax.xlane.f32.xlu0 %v647
    %v649 = vpop.xlane.xlu0 %648
    %v650 = vsel %vm165, %v644, -inf
    %651 = vmax.xlane.f32.xlu0 %v650
    %v652 = vpop.xlane.xlu0 %651
    %v653 = vsub.f32 %v566, %v649
    %v654 = vsub.f32 %v644, %v652
    %v655 = vmul.f32 %v653, 1.442695
    %v656 = vpow.pop %v655
    %v657 = vmul.f32 %v654, 1.442695
    %v658 = vpow.pop %v657
    %v659 = vsel %vm165, %v656, 0.0
    %660 = vadd.xlane.f32.xlu0 %v659
    %v661 = vpop.xlane.xlu0 %660
    %v662 = vsel %vm165, %v658, 0.0
    %663 = vadd.xlane.f32.xlu0 %v662
    %v664 = vpop.xlane.xlu0 %663
    %665 = vrot.lane.b32.xlu0 %v160, 56
    %v666 = vpop.permute.xlu0 %665
    %v669 = vsel %vm165, %v656, 0
    %671 = vmatprep.subr.mxu0 0.0
    %672 = vmatpush1.msra.mxu0 %v666
    %673 = vmatprep.subr.mxu0 0.0
    %674 = vmatpush1.msra.mxu0 0.0
    %675 = vmatprep.subr.mxu0 0.0
    %676 = vmatpush1.msra.mxu0 0.0
    %677 = vmatprep.subr.mxu0 0.0
    %678 = vmatpush1.msra.mxu0 0.0
    %679 = vmatprep.subr.mxu0 0.0
    %680 = vmatpush1.msra.mxu0 0.0
    %681 = vmatprep.subr.mxu0 0.0
    %682 = vmatpush1.msra.mxu0 0.0
    %683 = vmatprep.subr.mxu0 0.0
    %684 = vmatpush1.msra.mxu0 0.0
    %685 = vmatprep.subr.mxu0 0.0
    %686 = vmatpush1.msra.mxu0 0.0
    %687 = vmatprep.subr.mxu0 0.0
    %688 = vmatpush1.msra.mxu0 0.0
    %689 = vmatprep.subr.mxu0 0.0
    %690 = vmatpush1.msra.mxu0 0.0
    %691 = vmatprep.subr.mxu0 0.0
    %692 = vmatpush1.msra.mxu0 0.0
    %693 = vmatprep.subr.mxu0 0.0
    %694 = vmatpush1.msra.mxu0 0.0
    %695 = vmatprep.subr.mxu0 0.0
    %696 = vmatpush1.msra.mxu0 0.0
    %697 = vmatprep.subr.mxu0 0.0
    %698 = vmatpush1.msra.mxu0 0.0
    %699 = vmatprep.subr.mxu0 0.0
    %700 = vmatpush1.msra.mxu0 0.0
    %701 = vmatprep.subr.mxu0 0.0
    %702 = vmatpush1.msra.mxu0 0.0
    %703 = vmatprep.subr.mxu0 0.0
    %704 = vmatpush1.msra.mxu0 0.0
    %705 = vmatprep.subr.mxu0 0.0
    %706 = vmatpush1.msra.mxu0 0.0
    %707 = vmatprep.subr.mxu0 0.0
    %708 = vmatpush1.msra.mxu0 0.0
    %709 = vmatprep.subr.mxu0 0.0
    %710 = vmatpush1.msra.mxu0 0.0
    %711 = vmatprep.subr.mxu0 0.0
    %712 = vmatpush1.msra.mxu0 0.0
    %713 = vmatprep.subr.mxu0 0.0
    %714 = vmatpush1.msra.mxu0 0.0
    %715 = vmatprep.subr.mxu0 0.0
    %716 = vmatpush1.msra.mxu0 0.0
    %717 = vmatprep.subr.mxu0 0.0
    %718 = vmatpush1.msra.mxu0 0.0
    %719 = vmatprep.subr.mxu0 0.0
    %720 = vmatpush1.msra.mxu0 0.0
    %721 = vmatprep.subr.mxu0 0.0
    %722 = vmatpush1.msra.mxu0 0.0
    %723 = vmatprep.subr.mxu0 0.0
    %724 = vmatpush1.msra.mxu0 0.0
    %725 = vmatprep.subr.mxu0 0.0
    %726 = vmatpush1.msra.mxu0 0.0
    %727 = vmatprep.subr.mxu0 0.0
    %728 = vmatpush1.msra.mxu0 0.0
    %729 = vmatprep.subr.mxu0 0.0
    %730 = vmatpush1.msra.mxu0 0.0
    %731 = vmatprep.subr.mxu0 0.0
    %732 = vmatpush1.msra.mxu0 0.0
    %733 = vmatprep.subr.mxu0 0.0
    %734 = vmatpush1.msra.mxu0 0.0
    %735 = vmatprep.mubr.f32.mxu0 0.0
    %736 = vmatmul.mubr.f32.gmra.mrb[0].mxu0 %v669
    %v737 = vpop.f32.mrb[0].mxu0
    %v738 = vadd.f32 0.0, %v737
    %v739 = vpop.f32.mrb[0].mxu0
    %740 = vdwg.mxu0
    %741 = vrot.lane.b32.xlu0 %v161, 56
    %v742 = vpop.permute.xlu0 %741
    %v745 = vsel %vm165, %v658, 0
    %747 = vmatprep.subr.mxu0 0.0
    %748 = vmatpush1.msra.mxu0 %v742
    %749 = vmatprep.subr.mxu0 0.0
    %750 = vmatpush1.msra.mxu0 0.0
    %751 = vmatprep.subr.mxu0 0.0
    %752 = vmatpush1.msra.mxu0 0.0
    %753 = vmatprep.subr.mxu0 0.0
    %754 = vmatpush1.msra.mxu0 0.0
    %755 = vmatprep.subr.mxu0 0.0
    %756 = vmatpush1.msra.mxu0 0.0
    %757 = vmatprep.subr.mxu0 0.0
    %758 = vmatpush1.msra.mxu0 0.0
    %759 = vmatprep.subr.mxu0 0.0
    %760 = vmatpush1.msra.mxu0 0.0
    %761 = vmatprep.subr.mxu0 0.0
    %762 = vmatpush1.msra.mxu0 0.0
    %763 = vmatprep.subr.mxu0 0.0
    %764 = vmatpush1.msra.mxu0 0.0
    %765 = vmatprep.subr.mxu0 0.0
    %766 = vmatpush1.msra.mxu0 0.0
    %767 = vmatprep.subr.mxu0 0.0
    %768 = vmatpush1.msra.mxu0 0.0
    %769 = vmatprep.subr.mxu0 0.0
    %770 = vmatpush1.msra.mxu0 0.0
    %771 = vmatprep.subr.mxu0 0.0
    %772 = vmatpush1.msra.mxu0 0.0
    %773 = vmatprep.subr.mxu0 0.0
    %774 = vmatpush1.msra.mxu0 0.0
    %775 = vmatprep.subr.mxu0 0.0
    %776 = vmatpush1.msra.mxu0 0.0
    %777 = vmatprep.subr.mxu0 0.0
    %778 = vmatpush1.msra.mxu0 0.0
    %779 = vmatprep.subr.mxu0 0.0
    %780 = vmatpush1.msra.mxu0 0.0
    %781 = vmatprep.subr.mxu0 0.0
    %782 = vmatpush1.msra.mxu0 0.0
    %783 = vmatprep.subr.mxu0 0.0
    %784 = vmatpush1.msra.mxu0 0.0
    %785 = vmatprep.subr.mxu0 0.0
    %786 = vmatpush1.msra.mxu0 0.0
    %787 = vmatprep.subr.mxu0 0.0
    %788 = vmatpush1.msra.mxu0 0.0
    %789 = vmatprep.subr.mxu0 0.0
    %790 = vmatpush1.msra.mxu0 0.0
    %791 = vmatprep.subr.mxu0 0.0
    %792 = vmatpush1.msra.mxu0 0.0
    %793 = vmatprep.subr.mxu0 0.0
    %794 = vmatpush1.msra.mxu0 0.0
    %795 = vmatprep.subr.mxu0 0.0
    %796 = vmatpush1.msra.mxu0 0.0
    %797 = vmatprep.subr.mxu0 0.0
    %798 = vmatpush1.msra.mxu0 0.0
    %799 = vmatprep.subr.mxu0 0.0
    %800 = vmatpush1.msra.mxu0 0.0
    %801 = vmatprep.subr.mxu0 0.0
    %802 = vmatpush1.msra.mxu0 0.0
    %803 = vmatprep.subr.mxu0 0.0
    %804 = vmatpush1.msra.mxu0 0.0
    %805 = vmatprep.subr.mxu0 0.0
    %806 = vmatpush1.msra.mxu0 0.0
    %807 = vmatprep.subr.mxu0 0.0
    %808 = vmatpush1.msra.mxu0 0.0
    %809 = vmatprep.subr.mxu0 0.0
    %810 = vmatpush1.msra.mxu0 0.0
    %811 = vmatprep.mubr.f32.mxu0 0.0
    %812 = vmatmul.mubr.f32.gmra.mrb[0].mxu0 %v745
    %v813 = vpop.f32.mrb[0].mxu0
    %v814 = vadd.f32 0.0, %v813
    %v815 = vpop.f32.mrb[0].mxu0
    %816 = vdwg.mxu0
    %v817 = vrcp.pop %v661
    %v818 = vrcp.pop %v664
    %v819 = vmul.f32 %v738, %v817
    %v820 = vmul.f32 %v814, %v818
    %821 = vrot.lane.b32.xlu0 %v160, 112
    %v822 = vpop.permute.xlu0 %821
    %823 = vrot.lane.b32.xlu0 %v160, 80
    %v824 = vpop.permute.xlu0 %823
    %v825 = vsel %vm165, %v822, 0
    %v827 = vsel %vm165, %v824, 0
    %829 = vmatprep.subr.mxu0 0.0
    %830 = vmatpush1.xpose.msra.mxu0 %v827
    %831 = vmatprep.subr.mxu0 0.0
    %832 = vmatpush1.xpose.msra.mxu0 0.0
    %833 = vmatprep.subr.mxu0 0.0
    %834 = vmatpush1.xpose.msra.mxu0 0.0
    %835 = vmatprep.subr.mxu0 0.0
    %836 = vmatpush1.xpose.msra.mxu0 0.0
    %837 = vmatprep.subr.mxu0 0.0
    %838 = vmatpush1.xpose.msra.mxu0 0.0
    %839 = vmatprep.subr.mxu0 0.0
    %840 = vmatpush1.xpose.msra.mxu0 0.0
    %841 = vmatprep.subr.mxu0 0.0
    %842 = vmatpush1.xpose.msra.mxu0 0.0
    %843 = vmatprep.subr.mxu0 0.0
    %844 = vmatpush1.xpose.msra.mxu0 0.0
    %845 = vmatprep.subr.mxu0 0.0
    %846 = vmatpush1.xpose.msra.mxu0 0.0
    %847 = vmatprep.subr.mxu0 0.0
    %848 = vmatpush1.xpose.msra.mxu0 0.0
    %849 = vmatprep.subr.mxu0 0.0
    %850 = vmatpush1.xpose.msra.mxu0 0.0
    %851 = vmatprep.subr.mxu0 0.0
    %852 = vmatpush1.xpose.msra.mxu0 0.0
    %853 = vmatprep.subr.mxu0 0.0
    %854 = vmatpush1.xpose.msra.mxu0 0.0
    %855 = vmatprep.subr.mxu0 0.0
    %856 = vmatpush1.xpose.msra.mxu0 0.0
    %857 = vmatprep.subr.mxu0 0.0
    %858 = vmatpush1.xpose.msra.mxu0 0.0
    %859 = vmatprep.subr.mxu0 0.0
    %860 = vmatpush1.xpose.msra.mxu0 0.0
    %861 = vmatprep.subr.mxu0 0.0
    %862 = vmatpush1.xpose.msra.mxu0 0.0
    %863 = vmatprep.subr.mxu0 0.0
    %864 = vmatpush1.xpose.msra.mxu0 0.0
    %865 = vmatprep.subr.mxu0 0.0
    %866 = vmatpush1.xpose.msra.mxu0 0.0
    %867 = vmatprep.subr.mxu0 0.0
    %868 = vmatpush1.xpose.msra.mxu0 0.0
    %869 = vmatprep.subr.mxu0 0.0
    %870 = vmatpush1.xpose.msra.mxu0 0.0
    %871 = vmatprep.subr.mxu0 0.0
    %872 = vmatpush1.xpose.msra.mxu0 0.0
    %873 = vmatprep.subr.mxu0 0.0
    %874 = vmatpush1.xpose.msra.mxu0 0.0
    %875 = vmatprep.subr.mxu0 0.0
    %876 = vmatpush1.xpose.msra.mxu0 0.0
    %877 = vmatprep.subr.mxu0 0.0
    %878 = vmatpush1.xpose.msra.mxu0 0.0
    %879 = vmatprep.subr.mxu0 0.0
    %880 = vmatpush1.xpose.msra.mxu0 0.0
    %881 = vmatprep.subr.mxu0 0.0
    %882 = vmatpush1.xpose.msra.mxu0 0.0
    %883 = vmatprep.subr.mxu0 0.0
    %884 = vmatpush1.xpose.msra.mxu0 0.0
    %885 = vmatprep.subr.mxu0 0.0
    %886 = vmatpush1.xpose.msra.mxu0 0.0
    %887 = vmatprep.subr.mxu0 0.0
    %888 = vmatpush1.xpose.msra.mxu0 0.0
    %889 = vmatprep.subr.mxu0 0.0
    %890 = vmatpush1.xpose.msra.mxu0 0.0
    %891 = vmatprep.subr.mxu0 0.0
    %892 = vmatpush1.xpose.msra.mxu0 0.0
    %893 = vmatprep.mubr.f32.mxu0 0.0
    %894 = vmatmul.mubr.f32.gmra.mrb[0].mxu0 %v825
    %v895 = vpop.f32.mrb[0].mxu0
    %v896 = vadd.f32 0.0, %v895
    %v897 = vpop.f32.mrb[0].mxu0
    %898 = vdwg.mxu0
    %899 = vrot.lane.b32.xlu0 %v161, 112
    %v900 = vpop.permute.xlu0 %899
    %901 = vrot.lane.b32.xlu0 %v161, 80
    %v902 = vpop.permute.xlu0 %901
    %v903 = vsel %vm165, %v900, 0
    %v905 = vsel %vm165, %v902, 0
    %907 = vmatprep.subr.mxu0 0.0
    %908 = vmatpush1.xpose.msra.mxu0 %v905
    %909 = vmatprep.subr.mxu0 0.0
    %910 = vmatpush1.xpose.msra.mxu0 0.0
    %911 = vmatprep.subr.mxu0 0.0
    %912 = vmatpush1.xpose.msra.mxu0 0.0
    %913 = vmatprep.subr.mxu0 0.0
    %914 = vmatpush1.xpose.msra.mxu0 0.0
    %915 = vmatprep.subr.mxu0 0.0
    %916 = vmatpush1.xpose.msra.mxu0 0.0
    %917 = vmatprep.subr.mxu0 0.0
    %918 = vmatpush1.xpose.msra.mxu0 0.0
    %919 = vmatprep.subr.mxu0 0.0
    %920 = vmatpush1.xpose.msra.mxu0 0.0
    %921 = vmatprep.subr.mxu0 0.0
    %922 = vmatpush1.xpose.msra.mxu0 0.0
    %923 = vmatprep.subr.mxu0 0.0
    %924 = vmatpush1.xpose.msra.mxu0 0.0
    %925 = vmatprep.subr.mxu0 0.0
    %926 = vmatpush1.xpose.msra.mxu0 0.0
    %927 = vmatprep.subr.mxu0 0.0
    %928 = vmatpush1.xpose.msra.mxu0 0.0
    %929 = vmatprep.subr.mxu0 0.0
    %930 = vmatpush1.xpose.msra.mxu0 0.0
    %931 = vmatprep.subr.mxu0 0.0
    %932 = vmatpush1.xpose.msra.mxu0 0.0
    %933 = vmatprep.subr.mxu0 0.0
    %934 = vmatpush1.xpose.msra.mxu0 0.0
    %935 = vmatprep.subr.mxu0 0.0
    %936 = vmatpush1.xpose.msra.mxu0 0.0
    %937 = vmatprep.subr.mxu0 0.0
    %938 = vmatpush1.xpose.msra.mxu0 0.0
    %939 = vmatprep.subr.mxu0 0.0
    %940 = vmatpush1.xpose.msra.mxu0 0.0
    %941 = vmatprep.subr.mxu0 0.0
    %942 = vmatpush1.xpose.msra.mxu0 0.0
    %943 = vmatprep.subr.mxu0 0.0
    %944 = vmatpush1.xpose.msra.mxu0 0.0
    %945 = vmatprep.subr.mxu0 0.0
    %946 = vmatpush1.xpose.msra.mxu0 0.0
    %947 = vmatprep.subr.mxu0 0.0
    %948 = vmatpush1.xpose.msra.mxu0 0.0
    %949 = vmatprep.subr.mxu0 0.0
    %950 = vmatpush1.xpose.msra.mxu0 0.0
    %951 = vmatprep.subr.mxu0 0.0
    %952 = vmatpush1.xpose.msra.mxu0 0.0
    %953 = vmatprep.subr.mxu0 0.0
    %954 = vmatpush1.xpose.msra.mxu0 0.0
    %955 = vmatprep.subr.mxu0 0.0
    %956 = vmatpush1.xpose.msra.mxu0 0.0
    %957 = vmatprep.subr.mxu0 0.0
    %958 = vmatpush1.xpose.msra.mxu0 0.0
    %959 = vmatprep.subr.mxu0 0.0
    %960 = vmatpush1.xpose.msra.mxu0 0.0
    %961 = vmatprep.subr.mxu0 0.0
    %962 = vmatpush1.xpose.msra.mxu0 0.0
    %963 = vmatprep.subr.mxu0 0.0
    %964 = vmatpush1.xpose.msra.mxu0 0.0
    %965 = vmatprep.subr.mxu0 0.0
    %966 = vmatpush1.xpose.msra.mxu0 0.0
    %967 = vmatprep.subr.mxu0 0.0
    %968 = vmatpush1.xpose.msra.mxu0 0.0
    %969 = vmatprep.subr.mxu0 0.0
    %970 = vmatpush1.xpose.msra.mxu0 0.0
    %971 = vmatprep.mubr.f32.mxu0 0.0
    %972 = vmatmul.mubr.f32.gmra.mrb[0].mxu0 %v903
    %v973 = vpop.f32.mrb[0].mxu0
    %v974 = vadd.f32 0.0, %v973
    %v975 = vpop.f32.mrb[0].mxu0
    %976 = vdwg.mxu0
    %v977 = vsel %vm165, %v896, -inf
    %978 = vmax.xlane.f32.xlu0 %v977
    %v979 = vpop.xlane.xlu0 %978
    %v980 = vsel %vm165, %v974, -inf
    %981 = vmax.xlane.f32.xlu0 %v980
    %v982 = vpop.xlane.xlu0 %981
    %v983 = vsub.f32 %v896, %v979
    %v984 = vsub.f32 %v974, %v982
    %v985 = vmul.f32 %v983, 1.442695
    %v986 = vpow.pop %v985
    %v987 = vmul.f32 %v984, 1.442695
    %v988 = vpow.pop %v987
    %v989 = vsel %vm165, %v986, 0.0
    %990 = vadd.xlane.f32.xlu0 %v989
    %v991 = vpop.xlane.xlu0 %990
    %v992 = vsel %vm165, %v988, 0.0
    %993 = vadd.xlane.f32.xlu0 %v992
    %v994 = vpop.xlane.xlu0 %993
    %995 = vrot.lane.b32.xlu0 %v160, 48
    %v996 = vpop.permute.xlu0 %995
    %v999 = vsel %vm165, %v986, 0
    %1001 = vmatprep.subr.mxu0 0.0
    %1002 = vmatpush1.msra.mxu0 %v996
    %1003 = vmatprep.subr.mxu0 0.0
    %1004 = vmatpush1.msra.mxu0 0.0
    %1005 = vmatprep.subr.mxu0 0.0
    %1006 = vmatpush1.msra.mxu0 0.0
    %1007 = vmatprep.subr.mxu0 0.0
    %1008 = vmatpush1.msra.mxu0 0.0
    %1009 = vmatprep.subr.mxu0 0.0
    %1010 = vmatpush1.msra.mxu0 0.0
    %1011 = vmatprep.subr.mxu0 0.0
    %1012 = vmatpush1.msra.mxu0 0.0
    %1013 = vmatprep.subr.mxu0 0.0
    %1014 = vmatpush1.msra.mxu0 0.0
    %1015 = vmatprep.subr.mxu0 0.0
    %1016 = vmatpush1.msra.mxu0 0.0
    %1017 = vmatprep.subr.mxu0 0.0
    %1018 = vmatpush1.msra.mxu0 0.0
    %1019 = vmatprep.subr.mxu0 0.0
    %1020 = vmatpush1.msra.mxu0 0.0
    %1021 = vmatprep.subr.mxu0 0.0
    %1022 = vmatpush1.msra.mxu0 0.0
    %1023 = vmatprep.subr.mxu0 0.0
    %1024 = vmatpush1.msra.mxu0 0.0
    %1025 = vmatprep.subr.mxu0 0.0
    %1026 = vmatpush1.msra.mxu0 0.0
    %1027 = vmatprep.subr.mxu0 0.0
    %1028 = vmatpush1.msra.mxu0 0.0
    %1029 = vmatprep.subr.mxu0 0.0
    %1030 = vmatpush1.msra.mxu0 0.0
    %1031 = vmatprep.subr.mxu0 0.0
    %1032 = vmatpush1.msra.mxu0 0.0
    %1033 = vmatprep.subr.mxu0 0.0
    %1034 = vmatpush1.msra.mxu0 0.0
    %1035 = vmatprep.subr.mxu0 0.0
    %1036 = vmatpush1.msra.mxu0 0.0
    %1037 = vmatprep.subr.mxu0 0.0
    %1038 = vmatpush1.msra.mxu0 0.0
    %1039 = vmatprep.subr.mxu0 0.0
    %1040 = vmatpush1.msra.mxu0 0.0
    %1041 = vmatprep.subr.mxu0 0.0
    %1042 = vmatpush1.msra.mxu0 0.0
    %1043 = vmatprep.subr.mxu0 0.0
    %1044 = vmatpush1.msra.mxu0 0.0
    %1045 = vmatprep.subr.mxu0 0.0
    %1046 = vmatpush1.msra.mxu0 0.0
    %1047 = vmatprep.subr.mxu0 0.0
    %1048 = vmatpush1.msra.mxu0 0.0
    %1049 = vmatprep.subr.mxu0 0.0
    %1050 = vmatpush1.msra.mxu0 0.0
    %1051 = vmatprep.subr.mxu0 0.0
    %1052 = vmatpush1.msra.mxu0 0.0
    %1053 = vmatprep.subr.mxu0 0.0
    %1054 = vmatpush1.msra.mxu0 0.0
    %1055 = vmatprep.subr.mxu0 0.0
    %1056 = vmatpush1.msra.mxu0 0.0
    %1057 = vmatprep.subr.mxu0 0.0
    %1058 = vmatpush1.msra.mxu0 0.0
    %1059 = vmatprep.subr.mxu0 0.0
    %1060 = vmatpush1.msra.mxu0 0.0
    %1061 = vmatprep.subr.mxu0 0.0
    %1062 = vmatpush1.msra.mxu0 0.0
    %1063 = vmatprep.subr.mxu0 0.0
    %1064 = vmatpush1.msra.mxu0 0.0
    %1065 = vmatprep.mubr.f32.mxu0 0.0
    %1066 = vmatmul.mubr.f32.gmra.mrb[0].mxu0 %v999
    %v1067 = vpop.f32.mrb[0].mxu0
    %v1068 = vadd.f32 0.0, %v1067
    %v1069 = vpop.f32.mrb[0].mxu0
    %1070 = vdwg.mxu0
    %1071 = vrot.lane.b32.xlu0 %v161, 48
    %v1072 = vpop.permute.xlu0 %1071
    %v1075 = vsel %vm165, %v988, 0
    %1077 = vmatprep.subr.mxu0 0.0
    %1078 = vmatpush1.msra.mxu0 %v1072
    %1079 = vmatprep.subr.mxu0 0.0
    %1080 = vmatpush1.msra.mxu0 0.0
    %1081 = vmatprep.subr.mxu0 0.0
    %1082 = vmatpush1.msra.mxu0 0.0
    %1083 = vmatprep.subr.mxu0 0.0
    %1084 = vmatpush1.msra.mxu0 0.0
    %1085 = vmatprep.subr.mxu0 0.0
    %1086 = vmatpush1.msra.mxu0 0.0
    %1087 = vmatprep.subr.mxu0 0.0
    %1088 = vmatpush1.msra.mxu0 0.0
    %1089 = vmatprep.subr.mxu0 0.0
    %1090 = vmatpush1.msra.mxu0 0.0
    %1091 = vmatprep.subr.mxu0 0.0
    %1092 = vmatpush1.msra.mxu0 0.0
    %1093 = vmatprep.subr.mxu0 0.0
    %1094 = vmatpush1.msra.mxu0 0.0
    %1095 = vmatprep.subr.mxu0 0.0
    %1096 = vmatpush1.msra.mxu0 0.0
    %1097 = vmatprep.subr.mxu0 0.0
    %1098 = vmatpush1.msra.mxu0 0.0
    %1099 = vmatprep.subr.mxu0 0.0
    %1100 = vmatpush1.msra.mxu0 0.0
    %1101 = vmatprep.subr.mxu0 0.0
    %1102 = vmatpush1.msra.mxu0 0.0
    %1103 = vmatprep.subr.mxu0 0.0
    %1104 = vmatpush1.msra.mxu0 0.0
    %1105 = vmatprep.subr.mxu0 0.0
    %1106 = vmatpush1.msra.mxu0 0.0
    %1107 = vmatprep.subr.mxu0 0.0
    %1108 = vmatpush1.msra.mxu0 0.0
    %1109 = vmatprep.subr.mxu0 0.0
    %1110 = vmatpush1.msra.mxu0 0.0
    %1111 = vmatprep.subr.mxu0 0.0
    %1112 = vmatpush1.msra.mxu0 0.0
    %1113 = vmatprep.subr.mxu0 0.0
    %1114 = vmatpush1.msra.mxu0 0.0
    %1115 = vmatprep.subr.mxu0 0.0
    %1116 = vmatpush1.msra.mxu0 0.0
    %1117 = vmatprep.subr.mxu0 0.0
    %1118 = vmatpush1.msra.mxu0 0.0
    %1119 = vmatprep.subr.mxu0 0.0
    %1120 = vmatpush1.msra.mxu0 0.0
    %1121 = vmatprep.subr.mxu0 0.0
    %1122 = vmatpush1.msra.mxu0 0.0
    %1123 = vmatprep.subr.mxu0 0.0
    %1124 = vmatpush1.msra.mxu0 0.0
    %1125 = vmatprep.subr.mxu0 0.0
    %1126 = vmatpush1.msra.mxu0 0.0
    %1127 = vmatprep.subr.mxu0 0.0
    %1128 = vmatpush1.msra.mxu0 0.0
    %1129 = vmatprep.subr.mxu0 0.0
    %1130 = vmatpush1.msra.mxu0 0.0
    %1131 = vmatprep.subr.mxu0 0.0
    %1132 = vmatpush1.msra.mxu0 0.0
    %1133 = vmatprep.subr.mxu0 0.0
    %1134 = vmatpush1.msra.mxu0 0.0
    %1135 = vmatprep.subr.mxu0 0.0
    %1136 = vmatpush1.msra.mxu0 0.0
    %1137 = vmatprep.subr.mxu0 0.0
    %1138 = vmatpush1.msra.mxu0 0.0
    %1139 = vmatprep.subr.mxu0 0.0
    %1140 = vmatpush1.msra.mxu0 0.0
    %1141 = vmatprep.mubr.f32.mxu0 0.0
    %1142 = vmatmul.mubr.f32.gmra.mrb[0].mxu0 %v1075
    %v1143 = vpop.f32.mrb[0].mxu0
    %v1144 = vadd.f32 0.0, %v1143
    %v1145 = vpop.f32.mrb[0].mxu0
    %1146 = vdwg.mxu0
    %v1147 = vrcp.pop %v991
    %v1148 = vrcp.pop %v994
    %v1149 = vmul.f32 %v1068, %v1147
    %v1150 = vmul.f32 %v1144, %v1148
    %1151 = vrot.lane.b32.xlu0 %v160, 104
    %v1152 = vpop.permute.xlu0 %1151
    %1153 = vrot.lane.b32.xlu0 %v160, 72
    %v1154 = vpop.permute.xlu0 %1153
    %v1155 = vsel %vm165, %v1152, 0
    %v1157 = vsel %vm165, %v1154, 0
    %1159 = vmatprep.subr.mxu0 0.0
    %1160 = vmatpush1.xpose.msra.mxu0 %v1157
    %1161 = vmatprep.subr.mxu0 0.0
    %1162 = vmatpush1.xpose.msra.mxu0 0.0
    %1163 = vmatprep.subr.mxu0 0.0
    %1164 = vmatpush1.xpose.msra.mxu0 0.0
    %1165 = vmatprep.subr.mxu0 0.0
    %1166 = vmatpush1.xpose.msra.mxu0 0.0
    %1167 = vmatprep.subr.mxu0 0.0
    %1168 = vmatpush1.xpose.msra.mxu0 0.0
    %1169 = vmatprep.subr.mxu0 0.0
    %1170 = vmatpush1.xpose.msra.mxu0 0.0
    %1171 = vmatprep.subr.mxu0 0.0
    %1172 = vmatpush1.xpose.msra.mxu0 0.0
    %1173 = vmatprep.subr.mxu0 0.0
    %1174 = vmatpush1.xpose.msra.mxu0 0.0
    %1175 = vmatprep.subr.mxu0 0.0
    %1176 = vmatpush1.xpose.msra.mxu0 0.0
    %1177 = vmatprep.subr.mxu0 0.0
    %1178 = vmatpush1.xpose.msra.mxu0 0.0
    %1179 = vmatprep.subr.mxu0 0.0
    %1180 = vmatpush1.xpose.msra.mxu0 0.0
    %1181 = vmatprep.subr.mxu0 0.0
    %1182 = vmatpush1.xpose.msra.mxu0 0.0
    %1183 = vmatprep.subr.mxu0 0.0
    %1184 = vmatpush1.xpose.msra.mxu0 0.0
    %1185 = vmatprep.subr.mxu0 0.0
    %1186 = vmatpush1.xpose.msra.mxu0 0.0
    %1187 = vmatprep.subr.mxu0 0.0
    %1188 = vmatpush1.xpose.msra.mxu0 0.0
    %1189 = vmatprep.subr.mxu0 0.0
    %1190 = vmatpush1.xpose.msra.mxu0 0.0
    %1191 = vmatprep.subr.mxu0 0.0
    %1192 = vmatpush1.xpose.msra.mxu0 0.0
    %1193 = vmatprep.subr.mxu0 0.0
    %1194 = vmatpush1.xpose.msra.mxu0 0.0
    %1195 = vmatprep.subr.mxu0 0.0
    %1196 = vmatpush1.xpose.msra.mxu0 0.0
    %1197 = vmatprep.subr.mxu0 0.0
    %1198 = vmatpush1.xpose.msra.mxu0 0.0
    %1199 = vmatprep.subr.mxu0 0.0
    %1200 = vmatpush1.xpose.msra.mxu0 0.0
    %1201 = vmatprep.subr.mxu0 0.0
    %1202 = vmatpush1.xpose.msra.mxu0 0.0
    %1203 = vmatprep.subr.mxu0 0.0
    %1204 = vmatpush1.xpose.msra.mxu0 0.0
    %1205 = vmatprep.subr.mxu0 0.0
    %1206 = vmatpush1.xpose.msra.mxu0 0.0
    %1207 = vmatprep.subr.mxu0 0.0
    %1208 = vmatpush1.xpose.msra.mxu0 0.0
    %1209 = vmatprep.subr.mxu0 0.0
    %1210 = vmatpush1.xpose.msra.mxu0 0.0
    %1211 = vmatprep.subr.mxu0 0.0
    %1212 = vmatpush1.xpose.msra.mxu0 0.0
    %1213 = vmatprep.subr.mxu0 0.0
    %1214 = vmatpush1.xpose.msra.mxu0 0.0
    %1215 = vmatprep.subr.mxu0 0.0
    %1216 = vmatpush1.xpose.msra.mxu0 0.0
    %1217 = vmatprep.subr.mxu0 0.0
    %1218 = vmatpush1.xpose.msra.mxu0 0.0
    %1219 = vmatprep.subr.mxu0 0.0
    %1220 = vmatpush1.xpose.msra.mxu0 0.0
    %1221 = vmatprep.subr.mxu0 0.0
    %1222 = vmatpush1.xpose.msra.mxu0 0.0
    %1223 = vmatprep.mubr.f32.mxu0 0.0
    %1224 = vmatmul.mubr.f32.gmra.mrb[0].mxu0 %v1155
    %v1225 = vpop.f32.mrb[0].mxu0
    %v1226 = vadd.f32 0.0, %v1225
    %v1227 = vpop.f32.mrb[0].mxu0
    %1228 = vdwg.mxu0
    %1229 = vrot.lane.b32.xlu0 %v161, 104
    %v1230 = vpop.permute.xlu0 %1229
    %1231 = vrot.lane.b32.xlu0 %v161, 72
    %v1232 = vpop.permute.xlu0 %1231
    %v1233 = vsel %vm165, %v1230, 0
    %v1235 = vsel %vm165, %v1232, 0
    %1237 = vmatprep.subr.mxu0 0.0
    %1238 = vmatpush1.xpose.msra.mxu0 %v1235
    %1239 = vmatprep.subr.mxu0 0.0
    %1240 = vmatpush1.xpose.msra.mxu0 0.0
    %1241 = vmatprep.subr.mxu0 0.0
    %1242 = vmatpush1.xpose.msra.mxu0 0.0
    %1243 = vmatprep.subr.mxu0 0.0
    %1244 = vmatpush1.xpose.msra.mxu0 0.0
    %1245 = vmatprep.subr.mxu0 0.0
    %1246 = vmatpush1.xpose.msra.mxu0 0.0
    %1247 = vmatprep.subr.mxu0 0.0
    %1248 = vmatpush1.xpose.msra.mxu0 0.0
    %1249 = vmatprep.subr.mxu0 0.0
    %1250 = vmatpush1.xpose.msra.mxu0 0.0
    %1251 = vmatprep.subr.mxu0 0.0
    %1252 = vmatpush1.xpose.msra.mxu0 0.0
    %1253 = vmatprep.subr.mxu0 0.0
    %1254 = vmatpush1.xpose.msra.mxu0 0.0
    %1255 = vmatprep.subr.mxu0 0.0
    %1256 = vmatpush1.xpose.msra.mxu0 0.0
    %1257 = vmatprep.subr.mxu0 0.0
    %1258 = vmatpush1.xpose.msra.mxu0 0.0
    %1259 = vmatprep.subr.mxu0 0.0
    %1260 = vmatpush1.xpose.msra.mxu0 0.0
    %1261 = vmatprep.subr.mxu0 0.0
    %1262 = vmatpush1.xpose.msra.mxu0 0.0
    %1263 = vmatprep.subr.mxu0 0.0
    %1264 = vmatpush1.xpose.msra.mxu0 0.0
    %1265 = vmatprep.subr.mxu0 0.0
    %1266 = vmatpush1.xpose.msra.mxu0 0.0
    %1267 = vmatprep.subr.mxu0 0.0
    %1268 = vmatpush1.xpose.msra.mxu0 0.0
    %1269 = vmatprep.subr.mxu0 0.0
    %1270 = vmatpush1.xpose.msra.mxu0 0.0
    %1271 = vmatprep.subr.mxu0 0.0
    %1272 = vmatpush1.xpose.msra.mxu0 0.0
    %1273 = vmatprep.subr.mxu0 0.0
    %1274 = vmatpush1.xpose.msra.mxu0 0.0
    %1275 = vmatprep.subr.mxu0 0.0
    %1276 = vmatpush1.xpose.msra.mxu0 0.0
    %1277 = vmatprep.subr.mxu0 0.0
    %1278 = vmatpush1.xpose.msra.mxu0 0.0
    %1279 = vmatprep.subr.mxu0 0.0
    %1280 = vmatpush1.xpose.msra.mxu0 0.0
    %1281 = vmatprep.subr.mxu0 0.0
    %1282 = vmatpush1.xpose.msra.mxu0 0.0
    %1283 = vmatprep.subr.mxu0 0.0
    %1284 = vmatpush1.xpose.msra.mxu0 0.0
    %1285 = vmatprep.subr.mxu0 0.0
    %1286 = vmatpush1.xpose.msra.mxu0 0.0
    %1287 = vmatprep.subr.mxu0 0.0
    %1288 = vmatpush1.xpose.msra.mxu0 0.0
    %1289 = vmatprep.subr.mxu0 0.0
    %1290 = vmatpush1.xpose.msra.mxu0 0.0
    %1291 = vmatprep.subr.mxu0 0.0
    %1292 = vmatpush1.xpose.msra.mxu0 0.0
    %1293 = vmatprep.subr.mxu0 0.0
    %1294 = vmatpush1.xpose.msra.mxu0 0.0
    %1295 = vmatprep.subr.mxu0 0.0
    %1296 = vmatpush1.xpose.msra.mxu0 0.0
    %1297 = vmatprep.subr.mxu0 0.0
    %1298 = vmatpush1.xpose.msra.mxu0 0.0
    %1299 = vmatprep.subr.mxu0 0.0
    %1300 = vmatpush1.xpose.msra.mxu0 0.0
    %1301 = vmatprep.mubr.f32.mxu0 0.0
    %1302 = vmatmul.mubr.f32.gmra.mrb[0].mxu0 %v1233
    %v1303 = vpop.f32.mrb[0].mxu0
    %v1304 = vadd.f32 0.0, %v1303
    %v1305 = vpop.f32.mrb[0].mxu0
    %1306 = vdwg.mxu0
    %v1307 = vsel %vm165, %v1226, -inf
    %1308 = vmax.xlane.f32.xlu0 %v1307
    %v1309 = vpop.xlane.xlu0 %1308
    %v1310 = vsel %vm165, %v1304, -inf
    %1311 = vmax.xlane.f32.xlu0 %v1310
    %v1312 = vpop.xlane.xlu0 %1311
    %v1313 = vsub.f32 %v1226, %v1309
    %v1314 = vsub.f32 %v1304, %v1312
    %v1315 = vmul.f32 %v1313, 1.442695
    %v1316 = vpow.pop %v1315
    %v1317 = vmul.f32 %v1314, 1.442695
    %v1318 = vpow.pop %v1317
    %v1319 = vsel %vm165, %v1316, 0.0
    %1320 = vadd.xlane.f32.xlu0 %v1319
    %v1321 = vpop.xlane.xlu0 %1320
    %v1322 = vsel %vm165, %v1318, 0.0
    %1323 = vadd.xlane.f32.xlu0 %v1322
    %v1324 = vpop.xlane.xlu0 %1323
    %1325 = vrot.lane.b32.xlu0 %v160, 40
    %v1326 = vpop.permute.xlu0 %1325
    %v1329 = vsel %vm165, %v1316, 0
    %1331 = vmatprep.subr.mxu0 0.0
    %1332 = vmatpush1.msra.mxu0 %v1326
    %1333 = vmatprep.subr.mxu0 0.0
    %1334 = vmatpush1.msra.mxu0 0.0
    %1335 = vmatprep.subr.mxu0 0.0
    %1336 = vmatpush1.msra.mxu0 0.0
    %1337 = vmatprep.subr.mxu0 0.0
    %1338 = vmatpush1.msra.mxu0 0.0
    %1339 = vmatprep.subr.mxu0 0.0
    %1340 = vmatpush1.msra.mxu0 0.0
    %1341 = vmatprep.subr.mxu0 0.0
    %1342 = vmatpush1.msra.mxu0 0.0
    %1343 = vmatprep.subr.mxu0 0.0
    %1344 = vmatpush1.msra.mxu0 0.0
    %1345 = vmatprep.subr.mxu0 0.0
    %1346 = vmatpush1.msra.mxu0 0.0
    %1347 = vmatprep.subr.mxu0 0.0
    %1348 = vmatpush1.msra.mxu0 0.0
    %1349 = vmatprep.subr.mxu0 0.0
    %1350 = vmatpush1.msra.mxu0 0.0
    %1351 = vmatprep.subr.mxu0 0.0
    %1352 = vmatpush1.msra.mxu0 0.0
    %1353 = vmatprep.subr.mxu0 0.0
    %1354 = vmatpush1.msra.mxu0 0.0
    %1355 = vmatprep.subr.mxu0 0.0
    %1356 = vmatpush1.msra.mxu0 0.0
    %1357 = vmatprep.subr.mxu0 0.0
    %1358 = vmatpush1.msra.mxu0 0.0
    %1359 = vmatprep.subr.mxu0 0.0
    %1360 = vmatpush1.msra.mxu0 0.0
    %1361 = vmatprep.subr.mxu0 0.0
    %1362 = vmatpush1.msra.mxu0 0.0
    %1363 = vmatprep.subr.mxu0 0.0
    %1364 = vmatpush1.msra.mxu0 0.0
    %1365 = vmatprep.subr.mxu0 0.0
    %1366 = vmatpush1.msra.mxu0 0.0
    %1367 = vmatprep.subr.mxu0 0.0
    %1368 = vmatpush1.msra.mxu0 0.0
    %1369 = vmatprep.subr.mxu0 0.0
    %1370 = vmatpush1.msra.mxu0 0.0
    %1371 = vmatprep.subr.mxu0 0.0
    %1372 = vmatpush1.msra.mxu0 0.0
    %1373 = vmatprep.subr.mxu0 0.0
    %1374 = vmatpush1.msra.mxu0 0.0
    %1375 = vmatprep.subr.mxu0 0.0
    %1376 = vmatpush1.msra.mxu0 0.0
    %1377 = vmatprep.subr.mxu0 0.0
    %1378 = vmatpush1.msra.mxu0 0.0
    %1379 = vmatprep.subr.mxu0 0.0
    %1380 = vmatpush1.msra.mxu0 0.0
    %1381 = vmatprep.subr.mxu0 0.0
    %1382 = vmatpush1.msra.mxu0 0.0
    %1383 = vmatprep.subr.mxu0 0.0
    %1384 = vmatpush1.msra.mxu0 0.0
    %1385 = vmatprep.subr.mxu0 0.0
    %1386 = vmatpush1.msra.mxu0 0.0
    %1387 = vmatprep.subr.mxu0 0.0
    %1388 = vmatpush1.msra.mxu0 0.0
    %1389 = vmatprep.subr.mxu0 0.0
    %1390 = vmatpush1.msra.mxu0 0.0
    %1391 = vmatprep.subr.mxu0 0.0
    %1392 = vmatpush1.msra.mxu0 0.0
    %1393 = vmatprep.subr.mxu0 0.0
    %1394 = vmatpush1.msra.mxu0 0.0
    %1395 = vmatprep.mubr.f32.mxu0 0.0
    %1396 = vmatmul.mubr.f32.gmra.mrb[0].mxu0 %v1329
    %v1397 = vpop.f32.mrb[0].mxu0
    %v1398 = vadd.f32 0.0, %v1397
    %v1399 = vpop.f32.mrb[0].mxu0
    %1400 = vdwg.mxu0
    %1401 = vrot.lane.b32.xlu0 %v161, 40
    %v1402 = vpop.permute.xlu0 %1401
    %v1405 = vsel %vm165, %v1318, 0
    %1407 = vmatprep.subr.mxu0 0.0
    %1408 = vmatpush1.msra.mxu0 %v1402
    %1409 = vmatprep.subr.mxu0 0.0
    %1410 = vmatpush1.msra.mxu0 0.0
    %1411 = vmatprep.subr.mxu0 0.0
    %1412 = vmatpush1.msra.mxu0 0.0
    %1413 = vmatprep.subr.mxu0 0.0
    %1414 = vmatpush1.msra.mxu0 0.0
    %1415 = vmatprep.subr.mxu0 0.0
    %1416 = vmatpush1.msra.mxu0 0.0
    %1417 = vmatprep.subr.mxu0 0.0
    %1418 = vmatpush1.msra.mxu0 0.0
    %1419 = vmatprep.subr.mxu0 0.0
    %1420 = vmatpush1.msra.mxu0 0.0
    %1421 = vmatprep.subr.mxu0 0.0
    %1422 = vmatpush1.msra.mxu0 0.0
    %1423 = vmatprep.subr.mxu0 0.0
    %1424 = vmatpush1.msra.mxu0 0.0
    %1425 = vmatprep.subr.mxu0 0.0
    %1426 = vmatpush1.msra.mxu0 0.0
    %1427 = vmatprep.subr.mxu0 0.0
    %1428 = vmatpush1.msra.mxu0 0.0
    %1429 = vmatprep.subr.mxu0 0.0
    %1430 = vmatpush1.msra.mxu0 0.0
    %1431 = vmatprep.subr.mxu0 0.0
    %1432 = vmatpush1.msra.mxu0 0.0
    %1433 = vmatprep.subr.mxu0 0.0
    %1434 = vmatpush1.msra.mxu0 0.0
    %1435 = vmatprep.subr.mxu0 0.0
    %1436 = vmatpush1.msra.mxu0 0.0
    %1437 = vmatprep.subr.mxu0 0.0
    %1438 = vmatpush1.msra.mxu0 0.0
    %1439 = vmatprep.subr.mxu0 0.0
    %1440 = vmatpush1.msra.mxu0 0.0
    %1441 = vmatprep.subr.mxu0 0.0
    %1442 = vmatpush1.msra.mxu0 0.0
    %1443 = vmatprep.subr.mxu0 0.0
    %1444 = vmatpush1.msra.mxu0 0.0
    %1445 = vmatprep.subr.mxu0 0.0
    %1446 = vmatpush1.msra.mxu0 0.0
    %1447 = vmatprep.subr.mxu0 0.0
    %1448 = vmatpush1.msra.mxu0 0.0
    %1449 = vmatprep.subr.mxu0 0.0
    %1450 = vmatpush1.msra.mxu0 0.0
    %1451 = vmatprep.subr.mxu0 0.0
    %1452 = vmatpush1.msra.mxu0 0.0
    %1453 = vmatprep.subr.mxu0 0.0
    %1454 = vmatpush1.msra.mxu0 0.0
    %1455 = vmatprep.subr.mxu0 0.0
    %1456 = vmatpush1.msra.mxu0 0.0
    %1457 = vmatprep.subr.mxu0 0.0
    %1458 = vmatpush1.msra.mxu0 0.0
    %1459 = vmatprep.subr.mxu0 0.0
    %1460 = vmatpush1.msra.mxu0 0.0
    %1461 = vmatprep.subr.mxu0 0.0
    %1462 = vmatpush1.msra.mxu0 0.0
    %1463 = vmatprep.subr.mxu0 0.0
    %1464 = vmatpush1.msra.mxu0 0.0
    %1465 = vmatprep.subr.mxu0 0.0
    %1466 = vmatpush1.msra.mxu0 0.0
    %1467 = vmatprep.subr.mxu0 0.0
    %1468 = vmatpush1.msra.mxu0 0.0
    %1469 = vmatprep.subr.mxu0 0.0
    %1470 = vmatpush1.msra.mxu0 0.0
    %1471 = vmatprep.mubr.f32.mxu0 0.0
    %1472 = vmatmul.mubr.f32.gmra.mrb[0].mxu0 %v1405
    %v1473 = vpop.f32.mrb[0].mxu0
    %v1474 = vadd.f32 0.0, %v1473
    %v1475 = vpop.f32.mrb[0].mxu0
    %1476 = vdwg.mxu0
    %v1477 = vrcp.pop %v1321
    %v1478 = vrcp.pop %v1324
    %v1479 = vmul.f32 %v1398, %v1477
    %v1480 = vmul.f32 %v1474, %v1478
    %1483 = vrot.lane.b32.xlu0 %v819, 8
    %v1484 = vpop.permute.xlu0 %1483
    %1485 = vrot.lane.b32.xlu0 %v820, 8
    %v1486 = vpop.permute.xlu0 %1485
    %1491 = vrot.lane.b32.xlu0 %v1149, 16
    %v1492 = vpop.permute.xlu0 %1491
    %1493 = vrot.lane.b32.xlu0 %v1150, 16
    %v1494 = vpop.permute.xlu0 %1493
    %1499 = vrot.lane.b32.xlu0 %v1479, 24
    %v1500 = vpop.permute.xlu0 %1499
    %1501 = vrot.lane.b32.xlu0 %v1480, 24
    %v1502 = vpop.permute.xlu0 %1501
    %v1505 = vsel %vm165, %v489, %v1484
    %v1506 = vsel %vm165, %v490, %v1486
    %vm1507 = vcmask 130048
    %v1508 = vsel %vm1507, %v1505, %v1492
    %v1509 = vsel %vm1507, %v1506, %v1494
    %vm1510 = vcmask 195584
    %v1511 = vsel %vm1510, %v1508, %v1500
    %v1512 = vsel %vm1510, %v1509, %v1502
    %1513 = vst.msk [vmem:[#allocation3] sm:$0xff] %vm75, %v1511
    %1514 = vst.msk [vmem:[#allocation3 + $0x8] sm:$0xff] %vm75, %v1512
    %v1515 = vld [vmem:[#allocation3] sm:$0xff]
    %v1516 = vld [vmem:[#allocation3 + $0x8] sm:$0xff]
    %v1517 = vld [vmem:[#allocation9] sm:$0xff]
    %v1518 = vld [vmem:[#allocation9 + $0x8] sm:$0xff]
    %v1519 = vld [vmem:[#allocation9 + $0x10] sm:$0xff]
    %v1520 = vld [vmem:[#allocation9 + $0x18] sm:$0xff]
    %v1521 = vld [vmem:[%s4] sm:$0x1]
    %v1523 = vlaneseq
    %v1524 = vshrl.u32 %v1523, 7
    %v1525 = vsub.s32 0, %v1524
    %v1526 = vrot.slane %v1521, %v1525
    %v1529 = vsel %vm75, %v1515, 0
    %v1532 = vsel %vm75, %v1516, 0
    %1534 = vmatprep.subr.mxu0 0.0
    %1535 = vmatpush1.msra.mxu0 %v1517
    %1536 = vmatprep.subr.mxu0 0.0
    %1537 = vmatpush1.msra.mxu0 %v1518
    %1538 = vmatprep.subr.mxu0 0.0
    %1539 = vmatpush1.msra.mxu0 %v1519
    %1540 = vmatprep.subr.mxu0 0.0
    %1541 = vmatpush1.msra.mxu0 %v1520
    %1542 = vmatprep.subr.mxu0 0.0
    %1543 = vmatpush1.msra.mxu0 0.0
    %1544 = vmatprep.subr.mxu0 0.0
    %1545 = vmatpush1.msra.mxu0 0.0
    %1546 = vmatprep.subr.mxu0 0.0
    %1547 = vmatpush1.msra.mxu0 0.0
    %1548 = vmatprep.subr.mxu0 0.0
    %1549 = vmatpush1.msra.mxu0 0.0
    %1550 = vmatprep.subr.mxu0 0.0
    %1551 = vmatpush1.msra.mxu0 0.0
    %1552 = vmatprep.subr.mxu0 0.0
    %1553 = vmatpush1.msra.mxu0 0.0
    %1554 = vmatprep.subr.mxu0 0.0
    %1555 = vmatpush1.msra.mxu0 0.0
    %1556 = vmatprep.subr.mxu0 0.0
    %1557 = vmatpush1.msra.mxu0 0.0
    %1558 = vmatprep.subr.mxu0 0.0
    %1559 = vmatpush1.msra.mxu0 0.0
    %1560 = vmatprep.subr.mxu0 0.0
    %1561 = vmatpush1.msra.mxu0 0.0
    %1562 = vmatprep.subr.mxu0 0.0
    %1563 = vmatpush1.msra.mxu0 0.0
    %1564 = vmatprep.subr.mxu0 0.0
    %1565 = vmatpush1.msra.mxu0 0.0
    %1566 = vmatprep.subr.mxu0 0.0
    %1567 = vmatpush1.msra.mxu0 0.0
    %1568 = vmatprep.subr.mxu0 0.0
    %1569 = vmatpush1.msra.mxu0 0.0
    %1570 = vmatprep.subr.mxu0 0.0
    %1571 = vmatpush1.msra.mxu0 0.0
    %1572 = vmatprep.subr.mxu0 0.0
    %1573 = vmatpush1.msra.mxu0 0.0
    %1574 = vmatprep.subr.mxu0 0.0
    %1575 = vmatpush1.msra.mxu0 0.0
    %1576 = vmatprep.subr.mxu0 0.0
    %1577 = vmatpush1.msra.mxu0 0.0
    %1578 = vmatprep.subr.mxu0 0.0
    %1579 = vmatpush1.msra.mxu0 0.0
    %1580 = vmatprep.subr.mxu0 0.0
    %1581 = vmatpush1.msra.mxu0 0.0
    %1582 = vmatprep.subr.mxu0 0.0
    %1583 = vmatpush1.msra.mxu0 0.0
    %1584 = vmatprep.subr.mxu0 0.0
    %1585 = vmatpush1.msra.mxu0 0.0
    %1586 = vmatprep.subr.mxu0 0.0
    %1587 = vmatpush1.msra.mxu0 0.0
    %1588 = vmatprep.subr.mxu0 0.0
    %1589 = vmatpush1.msra.mxu0 0.0
    %1590 = vmatprep.subr.mxu0 0.0
    %1591 = vmatpush1.msra.mxu0 0.0
    %1592 = vmatprep.subr.mxu0 0.0
    %1593 = vmatpush1.msra.mxu0 0.0
    %1594 = vmatprep.subr.mxu0 0.0
    %1595 = vmatpush1.msra.mxu0 0.0
    %1596 = vmatprep.subr.mxu0 0.0
    %1597 = vmatpush1.msra.mxu0 0.0
    %1598 = vmatprep.mubr.f32.mxu0 0.0
    %1599 = vmatmul.mubr.f32.gmra.mrb[0].mxu0 %v1529
    %v1600 = vpop.f32.mrb[0].mxu0
    %v1601 = vadd.f32 %v1526, %v1600
    %v1602 = vpop.f32.mrb[0].mxu0
    %1603 = vmatprep.mubr.f32.mxu0 0.0
    %1604 = vmatmul.mubr.f32.gmra.mrb[0].mxu0 %v1532
    %v1605 = vpop.f32.mrb[0].mxu0
    %v1606 = vadd.f32 %v1526, %v1605
    %v1607 = vpop.f32.mrb[0].mxu0
    %1608 = vdwg.mxu0
    %1609 = vst.msk [vmem:[#allocation10] sm:$0xff] %vm75, %v1601
    %1610 = vst.msk [vmem:[#allocation10 + $0x8] sm:$0xff] %vm75, %v1606
    // Predicated region
    $region34: #{tpu_custom_call.1} parent=1 // pred_check
      _
    $region35: #{tpu_custom_call.1} parent=1 // pred_check_branch
      %1612 = sbr.rel (0) target = $region37
    $region36: #{tpu_custom_call.1} parent=1 // pred_region
      %s1614 = ssub.s32 256, 256
      %1615 = vsyncadd [#allocation6], %s1614
      %s1616 = sshll.u32 [#allocation10], 4
      %s1617 = int_to_ptr.vmem [resolvable:$true] %s1616
      %1622 = dma.vmem_to_hbm [thread:$0]  %s1617, 256, %s5, [#allocation6], 128, 128, 8
    $region37: #{tpu_custom_call.1} parent=1 // pred_fallthru
      _
    // Predicated region
    $region38: #{tpu_custom_call.1} parent=1 // pred_check
      _
    $region39: #{tpu_custom_call.1} parent=1 // pred_check_branch
      %1624 = sbr.rel (0) target = $region41
    $region40: #{tpu_custom_call.1} parent=1 // pred_region
      %1625 = dma.done [#allocation6], 256
    $region41: #{tpu_custom_call.1} parent=1 // pred_fallthru
      _
    %1626 = vsyncpa [#allocation5], 1
    %1627 = vsyncpa [#allocation8], 1
    %1628 = vsyncpa [#allocation6], 1

// kernel: tpu_custom_call.1
$region0: #{tpu_custom_call.1}
  #allocation0 [shape = 'u32[]', space=smem, size = 0x4, offset = 0x4, fixed_abs, tag = 'smem constant byte address 0x4 - core index']
  #allocation1 [shape = 'u32[144,128]{1,0:T(1,128)}', space=vmem, size = 0x12000, scoped, tag = 'internal scratch']
  #allocation2 [shape = 'f32[2,8,96]{2,1,0:T(8,128)}', space=vmem, size = 0x2000, scoped, tag = 'scratch operand']
  #allocation3 [shape = 'f32[2,8,32]{2,1,0:T(8,128)}', space=vmem, size = 0x2000, scoped, tag = 'scratch operand']
  %s0 = inlined_call_operand.hbm [shape: f32[2,8,32], index: 0, kind: input, shape index: {}]
  %s1 = inlined_call_operand.hbm [shape: f32[32,96], index: 1, kind: input, shape index: {}]
  %s2 = inlined_call_operand.vmem [shape: f32[1,96], index: 2, kind: input, shape index: {}]
  %s3 = inlined_call_operand.hbm [shape: f32[32,32], index: 3, kind: input, shape index: {}]
  %s4 = inlined_call_operand.vmem [shape: f32[1,32], index: 4, kind: input, shape index: {}]
  %s5 = inlined_call_operand.hbm [shape: f32[2,8,32], index: 5, kind: output, shape index: {}]
  %s6 = sld [smem:[#allocation0]]
  $region42: #{tpu_custom_call.1} parent=0
    _
  %s8 = ssub.s32 1, %s6
  %s9 = scalar_select 0, %s8, %s6
  $region1: #{tpu_custom_call.1} parent=0
    #allocation4 [shape = 'u8[8192]{0}', space=vmem, size = 0x2000, scoped, tag = 'input window, operand 0, single buffered']
    #allocation5 [shape = 's32[1]{0}', space=sflag, size = 0x4, scoped, tag = 'scoped memory for tpu_custom_call.1']
    #allocation6 [shape = 's32[1]{0}', space=sflag, size = 0x4, scoped, tag = 'scoped memory for tpu_custom_call.1']
    #allocation7 [shape = 'u8[16384]{0}', space=vmem, size = 0x4000, scoped, tag = 'input window, operand 1, single buffered']
    #allocation8 [shape = 's32[1]{0}', space=sflag, size = 0x4, scoped, tag = 'scoped memory for tpu_custom_call.1']
    #allocation9 [shape = 'u8[16384]{0}', space=vmem, size = 0x4000, scoped, tag = 'input window, operand 3, single buffered']
    #allocation10 [shape = 'u8[8192]{0}', space=vmem, size = 0x2000, scoped, tag = 'output window, operand 0, single buffered']
    %10 = vsyncpa [#allocation5], 0
    %11 = vsyncpa [#allocation8], 0
    %12 = vsyncpa [#allocation6], 0
    // Predicated region
    $region2: #{tpu_custom_call.1} parent=1 // pred_check
      _
    $region3: #{tpu_custom_call.1} parent=1 // pred_check_branch
      %14 = sbr.rel (0) target = $region5
    $region4: #{tpu_custom_call.1} parent=1 // pred_region
      %s16 = ssub.s32 256, 256
      %17 = vsyncadd [#allocation5], %s16
      %s18 = sshll.u32 [#allocation4], 4
      %s19 = int_to_ptr.vmem [resolvable:$true] %s18
      %24 = dma.hbm_to_vmem [thread:$0]  %s0, 256, %s19, [#allocation5], 128, 128, 8
    $region5: #{tpu_custom_call.1} parent=1 // pred_fallthru
      _
    // Predicated region
    $region6: #{tpu_custom_call.1} parent=1 // pred_check
      _
    $region7: #{tpu_custom_call.1} parent=1 // pred_check_branch
      %26 = sbr.rel (0) target = $region9
    $region8: #{tpu_custom_call.1} parent=1 // pred_region
      %s28 = ssub.s32 512, 512
      %29 = vsyncadd [#allocation8], %s28
      %s30 = sshll.u32 [#allocation7], 4
      %s31 = int_to_ptr.vmem [resolvable:$true] %s30
      %36 = dma.hbm_to_vmem [thread:$0]  %s1, 512, %s31, [#allocation8], 128, 128, 8
    $region9: #{tpu_custom_call.1} parent=1 // pred_fallthru
      _
    // Predicated region
    $region10: #{tpu_custom_call.1} parent=1 // pred_check
      _
    $region11: #{tpu_custom_call.1} parent=1 // pred_check_branch
      %38 = sbr.rel (0) target = $region13
    $region12: #{tpu_custom_call.1} parent=1 // pred_region
      _
    $region13: #{tpu_custom_call.1} parent=1 // pred_fallthru
      _
    // Predicated region
    $region14: #{tpu_custom_call.1} parent=1 // pred_check
      _
    $region15: #{tpu_custom_call.1} parent=1 // pred_check_branch
      %40 = sbr.rel (0) target = $region17
    $region16: #{tpu_custom_call.1} parent=1 // pred_region
      %s42 = ssub.s32 512, 512
      %43 = vsyncadd [#allocation8], %s42
      %s44 = sshll.u32 [#allocation9], 4
      %s45 = int_to_ptr.vmem [resolvable:$true] %s44
      %50 = dma.hbm_to_vmem [thread:$0]  %s3, 512, %s45, [#allocation8], 128, 128, 8
    $region17: #{tpu_custom_call.1} parent=1 // pred_fallthru
      _
    // Predicated region
    $region18: #{tpu_custom_call.1} parent=1 // pred_check
      _
    $region19: #{tpu_custom_call.1} parent=1 // pred_check_branch
      %52 = sbr.rel (0) target = $region21
    $region20: #{tpu_custom_call.1} parent=1 // pred_region
      _
    $region21: #{tpu_custom_call.1} parent=1 // pred_fallthru
      _
    // Predicated region
    $region22: #{tpu_custom_call.1} parent=1 // pred_check
      _
    $region23: #{tpu_custom_call.1} parent=1 // pred_check_branch
      %54 = sbr.rel (0) target = $region25
    $region24: #{tpu_custom_call.1} parent=1 // pred_region
      %55 = dma.done [#allocation5], 256
    $region25: #{tpu_custom_call.1} parent=1 // pred_fallthru
      _
    // Predicated region
    $region26: #{tpu_custom_call.1} parent=1 // pred_check
      _
    $region27: #{tpu_custom_call.1} parent=1 // pred_check_branch
      %57 = sbr.rel (0) target = $region29
    $region28: #{tpu_custom_call.1} parent=1 // pred_region
      %58 = dma.done [#allocation8], 512
    $region29: #{tpu_custom_call.1} parent=1 // pred_fallthru
      _
    // Predicated region
    $region30: #{tpu_custom_call.1} parent=1 // pred_check
      _
    $region31: #{tpu_custom_call.1} parent=1 // pred_check_branch
      %60 = sbr.rel (0) target = $region33
    $region32: #{tpu_custom_call.1} parent=1 // pred_region
      %61 = dma.done [#allocation8], 512
    $region33: #{tpu_custom_call.1} parent=1 // pred_fallthru
      _
    %v62 = vld [vmem:[#allocation4] sm:$0xff]
    %v63 = vld [vmem:[#allocation4 + $0x8] sm:$0xff]
    %v64 = vld [vmem:[#allocation7] sm:$0xff]
    %v65 = vld [vmem:[#allocation7 + $0x8] sm:$0xff]
    %v66 = vld [vmem:[#allocation7 + $0x10] sm:$0xff]
    %v67 = vld [vmem:[#allocation7 + $0x18] sm:$0xff]
    %v68 = vld [vmem:[%s2] sm:$0x1]
    %v70 = vlaneseq
    %v71 = vshrl.u32 %v70, 7
    %v72 = vsub.s32 0, %v71
    %v73 = vrot.slane %v68, %v72
    %vm75 = vcmask 261120
    %v77 = vsel %vm75, %v62, 0
    %v80 = vsel %vm75, %v63, 0
    %82 = vmatprep.subr.mxu0 0.0
    %83 = vmatpush1.msra.mxu0 %v64
    %84 = vmatprep.subr.mxu0 0.0
    %85 = vmatpush1.msra.mxu0 %v65
    %86 = vmatprep.subr.mxu0 0.0
    %87 = vmatpush1.msra.mxu0 %v66
    %88 = vmatprep.subr.mxu0 0.0
    %89 = vmatpush1.msra.mxu0 %v67
    %90 = vmatprep.subr.mxu0 0.0
    %91 = vmatpush1.msra.mxu0 0.0
    %92 = vmatprep.subr.mxu0 0.0
    %93 = vmatpush1.msra.mxu0 0.0
    %94 = vmatprep.subr.mxu0 0.0
    %95 = vmatpush1.msra.mxu0 0.0
    %96 = vmatprep.subr.mxu0 0.0
    %97 = vmatpush1.msra.mxu0 0.0
    %98 = vmatprep.subr.mxu0 0.0
    %99 = vmatpush1.msra.mxu0 0.0
    %100 = vmatprep.subr.mxu0 0.0
    %101 = vmatpush1.msra.mxu0 0.0
    %102 = vmatprep.subr.mxu0 0.0
    %103 = vmatpush1.msra.mxu0 0.0
    %104 = vmatprep.subr.mxu0 0.0
    %105 = vmatpush1.msra.mxu0 0.0
    %106 = vmatprep.subr.mxu0 0.0
    %107 = vmatpush1.msra.mxu0 0.0
    %108 = vmatprep.subr.mxu0 0.0
    %109 = vmatpush1.msra.mxu0 0.0
    %110 = vmatprep.subr.mxu0 0.0
    %111 = vmatpush1.msra.mxu0 0.0
    %112 = vmatprep.subr.mxu0 0.0
    %113 = vmatpush1.msra.mxu0 0.0
    %114 = vmatprep.subr.mxu0 0.0
    %115 = vmatpush1.msra.mxu0 0.0
    %116 = vmatprep.subr.mxu0 0.0
    %117 = vmatpush1.msra.mxu0 0.0
    %118 = vmatprep.subr.mxu0 0.0
    %119 = vmatpush1.msra.mxu0 0.0
    %120 = vmatprep.subr.mxu0 0.0
    %121 = vmatpush1.msra.mxu0 0.0
    %122 = vmatprep.subr.mxu0 0.0
    %123 = vmatpush1.msra.mxu0 0.0
    %124 = vmatprep.subr.mxu0 0.0
    %125 = vmatpush1.msra.mxu0 0.0
    %126 = vmatprep.subr.mxu0 0.0
    %127 = vmatpush1.msra.mxu0 0.0
    %128 = vmatprep.subr.mxu0 0.0
    %129 = vmatpush1.msra.mxu0 0.0
    %130 = vmatprep.subr.mxu0 0.0
    %131 = vmatpush1.msra.mxu0 0.0
    %132 = vmatprep.subr.mxu0 0.0
    %133 = vmatpush1.msra.mxu0 0.0
    %134 = vmatprep.subr.mxu0 0.0
    %135 = vmatpush1.msra.mxu0 0.0
    %136 = vmatprep.subr.mxu0 0.0
    %137 = vmatpush1.msra.mxu0 0.0
    %138 = vmatprep.subr.mxu0 0.0
    %139 = vmatpush1.msra.mxu0 0.0
    %140 = vmatprep.subr.mxu0 0.0
    %141 = vmatpush1.msra.mxu0 0.0
    %142 = vmatprep.subr.mxu0 0.0
    %143 = vmatpush1.msra.mxu0 0.0
    %144 = vmatprep.subr.mxu0 0.0
    %145 = vmatpush1.msra.mxu0 0.0
    %146 = vmatprep.mubr.f32.mxu0 0.0
    %147 = vmatmul.mubr.f32.gmra.mrb[0].mxu0 %v77
    %v148 = vpop.f32.mrb[0].mxu0
    %v149 = vadd.f32 %v73, %v148
    %v150 = vpop.f32.mrb[0].mxu0
    %151 = vmatprep.mubr.f32.mxu0 0.0
    %152 = vmatmul.mubr.f32.gmra.mrb[0].mxu0 %v80
    %v153 = vpop.f32.mrb[0].mxu0
    %v154 = vadd.f32 %v73, %v153
    %v155 = vpop.f32.mrb[0].mxu0
    %156 = vdwg.mxu0
    %vm157 = vcmask 785408
    %158 = vst.msk [vmem:[#allocation2] sm:$0xff] %vm157, %v149
    %159 = vst.msk [vmem:[#allocation2 + $0x8] sm:$0xff] %vm157, %v154
    %v160 = vld [vmem:[#allocation2] sm:$0xff]
    %v161 = vld [vmem:[#allocation2 + $0x8] sm:$0xff]
    %163 = vrot.lane.b32.xlu0 %v160, 96
    %v164 = vpop.permute.xlu0 %163
    %vm165 = vcmask 64512
    %v166 = vsel %vm165, %v160, 0
    %v168 = vsel %vm165, %v164, 0
    %170 = vmatprep.subr.mxu0 0.0
    %171 = vmatpush1.xpose.msra.mxu0 %v168
    %172 = vmatprep.subr.mxu0 0.0
    %173 = vmatpush1.xpose.msra.mxu0 0.0
    %174 = vmatprep.subr.mxu0 0.0
    %175 = vmatpush1.xpose.msra.mxu0 0.0
    %176 = vmatprep.subr.mxu0 0.0
    %177 = vmatpush1.xpose.msra.mxu0 0.0
    %178 = vmatprep.subr.mxu0 0.0
    %179 = vmatpush1.xpose.msra.mxu0 0.0
    %180 = vmatprep.subr.mxu0 0.0
    %181 = vmatpush1.xpose.msra.mxu0 0.0
    %182 = vmatprep.subr.mxu0 0.0
    %183 = vmatpush1.xpose.msra.mxu0 0.0
    %184 = vmatprep.subr.mxu0 0.0
    %185 = vmatpush1.xpose.msra.mxu0 0.0
    %186 = vmatprep.subr.mxu0 0.0
    %187 = vmatpush1.xpose.msra.mxu0 0.0
    %188 = vmatprep.subr.mxu0 0.0
    %189 = vmatpush1.xpose.msra.mxu0 0.0
    %190 = vmatprep.subr.mxu0 0.0
    %191 = vmatpush1.xpose.msra.mxu0 0.0
    %192 = vmatprep.subr.mxu0 0.0
    %193 = vmatpush1.xpose.msra.mxu0 0.0
    %194 = vmatprep.subr.mxu0 0.0
    %195 = vmatpush1.xpose.msra.mxu0 0.0
    %196 = vmatprep.subr.mxu0 0.0
    %197 = vmatpush1.xpose.msra.mxu0 0.0
    %198 = vmatprep.subr.mxu0 0.0
    %199 = vmatpush1.xpose.msra.mxu0 0.0
    %200 = vmatprep.subr.mxu0 0.0
    %201 = vmatpush1.xpose.msra.mxu0 0.0
    %202 = vmatprep.subr.mxu0 0.0
    %203 = vmatpush1.xpose.msra.mxu0 0.0
    %204 = vmatprep.subr.mxu0 0.0
    %205 = vmatpush1.xpose.msra.mxu0 0.0
    %206 = vmatprep.subr.mxu0 0.0
    %207 = vmatpush1.xpose.msra.mxu0 0.0
    %208 = vmatprep.subr.mxu0 0.0
    %209 = vmatpush1.xpose.msra.mxu0 0.0
    %210 = vmatprep.subr.mxu0 0.0
    %211 = vmatpush1.xpose.msra.mxu0 0.0
    %212 = vmatprep.subr.mxu0 0.0
    %213 = vmatpush1.xpose.msra.mxu0 0.0
    %214 = vmatprep.subr.mxu0 0.0
    %215 = vmatpush1.xpose.msra.mxu0 0.0
    %216 = vmatprep.subr.mxu0 0.0
    %217 = vmatpush1.xpose.msra.mxu0 0.0
    %218 = vmatprep.subr.mxu0 0.0
    %219 = vmatpush1.xpose.msra.mxu0 0.0
    %220 = vmatprep.subr.mxu0 0.0
    %221 = vmatpush1.xpose.msra.mxu0 0.0
    %222 = vmatprep.subr.mxu0 0.0
    %223 = vmatpush1.xpose.msra.mxu0 0.0
    %224 = vmatprep.subr.mxu0 0.0
    %225 = vmatpush1.xpose.msra.mxu0 0.0
    %226 = vmatprep.subr.mxu0 0.0
    %227 = vmatpush1.xpose.msra.mxu0 0.0
    %228 = vmatprep.subr.mxu0 0.0
    %229 = vmatpush1.xpose.msra.mxu0 0.0
    %230 = vmatprep.subr.mxu0 0.0
    %231 = vmatpush1.xpose.msra.mxu0 0.0
    %232 = vmatprep.subr.mxu0 0.0
    %233 = vmatpush1.xpose.msra.mxu0 0.0
    %234 = vmatprep.mubr.f32.mxu0 0.0
    %235 = vmatmul.mubr.f32.gmra.mrb[0].mxu0 %v166
    %v236 = vpop.f32.mrb[0].mxu0
    %v237 = vadd.f32 0.0, %v236
    %v238 = vpop.f32.mrb[0].mxu0
    %239 = vdwg.mxu0
    %241 = vrot.lane.b32.xlu0 %v161, 96
    %v242 = vpop.permute.xlu0 %241
    %v243 = vsel %vm165, %v161, 0
    %v245 = vsel %vm165, %v242, 0
    %247 = vmatprep.subr.mxu0 0.0
    %248 = vmatpush1.xpose.msra.mxu0 %v245
    %249 = vmatprep.subr.mxu0 0.0
    %250 = vmatpush1.xpose.msra.mxu0 0.0
    %251 = vmatprep.subr.mxu0 0.0
    %252 = vmatpush1.xpose.msra.mxu0 0.0
    %253 = vmatprep.subr.mxu0 0.0
    %254 = vmatpush1.xpose.msra.mxu0 0.0
    %255 = vmatprep.subr.mxu0 0.0
    %256 = vmatpush1.xpose.msra.mxu0 0.0
    %257 = vmatprep.subr.mxu0 0.0
    %258 = vmatpush1.xpose.msra.mxu0 0.0
    %259 = vmatprep.subr.mxu0 0.0
    %260 = vmatpush1.xpose.msra.mxu0 0.0
    %261 = vmatprep.subr.mxu0 0.0
    %262 = vmatpush1.xpose.msra.mxu0 0.0
    %263 = vmatprep.subr.mxu0 0.0
    %264 = vmatpush1.xpose.msra.mxu0 0.0
    %265 = vmatprep.subr.mxu0 0.0
    %266 = vmatpush1.xpose.msra.mxu0 0.0
    %267 = vmatprep.subr.mxu0 0.0
    %268 = vmatpush1.xpose.msra.mxu0 0.0
    %269 = vmatprep.subr.mxu0 0.0
    %270 = vmatpush1.xpose.msra.mxu0 0.0
    %271 = vmatprep.subr.mxu0 0.0
    %272 = vmatpush1.xpose.msra.mxu0 0.0
    %273 = vmatprep.subr.mxu0 0.0
    %274 = vmatpush1.xpose.msra.mxu0 0.0
    %275 = vmatprep.subr.mxu0 0.0
    %276 = vmatpush1.xpose.msra.mxu0 0.0
    %277 = vmatprep.subr.mxu0 0.0
    %278 = vmatpush1.xpose.msra.mxu0 0.0
    %279 = vmatprep.subr.mxu0 0.0
    %280 = vmatpush1.xpose.msra.mxu0 0.0
    %281 = vmatprep.subr.mxu0 0.0
    %282 = vmatpush1.xpose.msra.mxu0 0.0
    %283 = vmatprep.subr.mxu0 0.0
    %284 = vmatpush1.xpose.msra.mxu0 0.0
    %285 = vmatprep.subr.mxu0 0.0
    %286 = vmatpush1.xpose.msra.mxu0 0.0
    %287 = vmatprep.subr.mxu0 0.0
    %288 = vmatpush1.xpose.msra.mxu0 0.0
    %289 = vmatprep.subr.mxu0 0.0
    %290 = vmatpush1.xpose.msra.mxu0 0.0
    %291 = vmatprep.subr.mxu0 0.0
    %292 = vmatpush1.xpose.msra.mxu0 0.0
    %293 = vmatprep.subr.mxu0 0.0
    %294 = vmatpush1.xpose.msra.mxu0 0.0
    %295 = vmatprep.subr.mxu0 0.0
    %296 = vmatpush1.xpose.msra.mxu0 0.0
    %297 = vmatprep.subr.mxu0 0.0
    %298 = vmatpush1.xpose.msra.mxu0 0.0
    %299 = vmatprep.subr.mxu0 0.0
    %300 = vmatpush1.xpose.msra.mxu0 0.0
    %301 = vmatprep.subr.mxu0 0.0
    %302 = vmatpush1.xpose.msra.mxu0 0.0
    %303 = vmatprep.subr.mxu0 0.0
    %304 = vmatpush1.xpose.msra.mxu0 0.0
    %305 = vmatprep.subr.mxu0 0.0
    %306 = vmatpush1.xpose.msra.mxu0 0.0
    %307 = vmatprep.subr.mxu0 0.0
    %308 = vmatpush1.xpose.msra.mxu0 0.0
    %309 = vmatprep.subr.mxu0 0.0
    %310 = vmatpush1.xpose.msra.mxu0 0.0
    %311 = vmatprep.mubr.f32.mxu0 0.0
    %312 = vmatmul.mubr.f32.gmra.mrb[0].mxu0 %v243
    %v313 = vpop.f32.mrb[0].mxu0
    %v314 = vadd.f32 0.0, %v313
    %v315 = vpop.f32.mrb[0].mxu0
    %316 = vdwg.mxu0
    %v317 = vsel %vm165, %v237, -inf
    %318 = vmax.xlane.f32.xlu0 %v317
    %v319 = vpop.xlane.xlu0 %318
    %v320 = vsel %vm165, %v314, -inf
    %321 = vmax.xlane.f32.xlu0 %v320
    %v322 = vpop.xlane.xlu0 %321
    %v323 = vsub.f32 %v237, %v319
    %v324 = vsub.f32 %v314, %v322
    %v325 = vmul.f32 %v323, 1.442695
    %v326 = vpow.pop %v325
    %v327 = vmul.f32 %v324, 1.442695
    %v328 = vpow.pop %v327
    %v329 = vsel %vm165, %v326, 0.0
    %330 = vadd.xlane.f32.xlu0 %v329
    %v331 = vpop.xlane.xlu0 %330
    %v332 = vsel %vm165, %v328, 0.0
    %333 = vadd.xlane.f32.xlu0 %v332
    %v334 = vpop.xlane.xlu0 %333
    %335 = vrot.lane.b32.xlu0 %v160, 64
    %v336 = vpop.permute.xlu0 %335
    %v339 = vsel %vm165, %v326, 0
    %341 = vmatprep.subr.mxu0 0.0
    %342 = vmatpush1.msra.mxu0 %v336
    %343 = vmatprep.subr.mxu0 0.0
    %344 = vmatpush1.msra.mxu0 0.0
    %345 = vmatprep.subr.mxu0 0.0
    %346 = vmatpush1.msra.mxu0 0.0
    %347 = vmatprep.subr.mxu0 0.0
    %348 = vmatpush1.msra.mxu0 0.0
    %349 = vmatprep.subr.mxu0 0.0
    %350 = vmatpush1.msra.mxu0 0.0
    %351 = vmatprep.subr.mxu0 0.0
    %352 = vmatpush1.msra.mxu0 0.0
    %353 = vmatprep.subr.mxu0 0.0
    %354 = vmatpush1.msra.mxu0 0.0
    %355 = vmatprep.subr.mxu0 0.0
    %356 = vmatpush1.msra.mxu0 0.0
    %357 = vmatprep.subr.mxu0 0.0
    %358 = vmatpush1.msra.mxu0 0.0
    %359 = vmatprep.subr.mxu0 0.0
    %360 = vmatpush1.msra.mxu0 0.0
    %361 = vmatprep.subr.mxu0 0.0
    %362 = vmatpush1.msra.mxu0 0.0
    %363 = vmatprep.subr.mxu0 0.0
    %364 = vmatpush1.msra.mxu0 0.0
    %365 = vmatprep.subr.mxu0 0.0
    %366 = vmatpush1.msra.mxu0 0.0
    %367 = vmatprep.subr.mxu0 0.0
    %368 = vmatpush1.msra.mxu0 0.0
    %369 = vmatprep.subr.mxu0 0.0
    %370 = vmatpush1.msra.mxu0 0.0
    %371 = vmatprep.subr.mxu0 0.0
    %372 = vmatpush1.msra.mxu0 0.0
    %373 = vmatprep.subr.mxu0 0.0
    %374 = vmatpush1.msra.mxu0 0.0
    %375 = vmatprep.subr.mxu0 0.0
    %376 = vmatpush1.msra.mxu0 0.0
    %377 = vmatprep.subr.mxu0 0.0
    %378 = vmatpush1.msra.mxu0 0.0
    %379 = vmatprep.subr.mxu0 0.0
    %380 = vmatpush1.msra.mxu0 0.0
    %381 = vmatprep.subr.mxu0 0.0
    %382 = vmatpush1.msra.mxu0 0.0
    %383 = vmatprep.subr.mxu0 0.0
    %384 = vmatpush1.msra.mxu0 0.0
    %385 = vmatprep.subr.mxu0 0.0
    %386 = vmatpush1.msra.mxu0 0.0
    %387 = vmatprep.subr.mxu0 0.0
    %388 = vmatpush1.msra.mxu0 0.0
    %389 = vmatprep.subr.mxu0 0.0
    %390 = vmatpush1.msra.mxu0 0.0
    %391 = vmatprep.subr.mxu0 0.0
    %392 = vmatpush1.msra.mxu0 0.0
    %393 = vmatprep.subr.mxu0 0.0
    %394 = vmatpush1.msra.mxu0 0.0
    %395 = vmatprep.subr.mxu0 0.0
    %396 = vmatpush1.msra.mxu0 0.0
    %397 = vmatprep.subr.mxu0 0.0
    %398 = vmatpush1.msra.mxu0 0.0
    %399 = vmatprep.subr.mxu0 0.0
    %400 = vmatpush1.msra.mxu0 0.0
    %401 = vmatprep.subr.mxu0 0.0
    %402 = vmatpush1.msra.mxu0 0.0
    %403 = vmatprep.subr.mxu0 0.0
    %404 = vmatpush1.msra.mxu0 0.0
    %405 = vmatprep.mubr.f32.mxu0 0.0
    %406 = vmatmul.mubr.f32.gmra.mrb[0].mxu0 %v339
    %v407 = vpop.f32.mrb[0].mxu0
    %v408 = vadd.f32 0.0, %v407
    %v409 = vpop.f32.mrb[0].mxu0
    %410 = vdwg.mxu0
    %411 = vrot.lane.b32.xlu0 %v161, 64
    %v412 = vpop.permute.xlu0 %411
    %v415 = vsel %vm165, %v328, 0
    %417 = vmatprep.subr.mxu0 0.0
    %418 = vmatpush1.msra.mxu0 %v412
    %419 = vmatprep.subr.mxu0 0.0
    %420 = vmatpush1.msra.mxu0 0.0
    %421 = vmatprep.subr.mxu0 0.0
    %422 = vmatpush1.msra.mxu0 0.0
    %423 = vmatprep.subr.mxu0 0.0
    %424 = vmatpush1.msra.mxu0 0.0
    %425 = vmatprep.subr.mxu0 0.0
    %426 = vmatpush1.msra.mxu0 0.0
    %427 = vmatprep.subr.mxu0 0.0
    %428 = vmatpush1.msra.mxu0 0.0
    %429 = vmatprep.subr.mxu0 0.0
    %430 = vmatpush1.msra.mxu0 0.0
    %431 = vmatprep.subr.mxu0 0.0
    %432 = vmatpush1.msra.mxu0 0.0
    %433 = vmatprep.subr.mxu0 0.0
    %434 = vmatpush1.msra.mxu0 0.0
    %435 = vmatprep.subr.mxu0 0.0
    %436 = vmatpush1.msra.mxu0 0.0
    %437 = vmatprep.subr.mxu0 0.0
    %438 = vmatpush1.msra.mxu0 0.0
    %439 = vmatprep.subr.mxu0 0.0
    %440 = vmatpush1.msra.mxu0 0.0
    %441 = vmatprep.subr.mxu0 0.0
    %442 = vmatpush1.msra.mxu0 0.0
    %443 = vmatprep.subr.mxu0 0.0
    %444 = vmatpush1.msra.mxu0 0.0
    %445 = vmatprep.subr.mxu0 0.0
    %446 = vmatpush1.msra.mxu0 0.0
    %447 = vmatprep.subr.mxu0 0.0
    %448 = vmatpush1.msra.mxu0 0.0
    %449 = vmatprep.subr.mxu0 0.0
    %450 = vmatpush1.msra.mxu0 0.0
    %451 = vmatprep.subr.mxu0 0.0
    %452 = vmatpush1.msra.mxu0 0.0
    %453 = vmatprep.subr.mxu0 0.0
    %454 = vmatpush1.msra.mxu0 0.0
    %455 = vmatprep.subr.mxu0 0.0
    %456 = vmatpush1.msra.mxu0 0.0
    %457 = vmatprep.subr.mxu0 0.0
    %458 = vmatpush1.msra.mxu0 0.0
    %459 = vmatprep.subr.mxu0 0.0
    %460 = vmatpush1.msra.mxu0 0.0
    %461 = vmatprep.subr.mxu0 0.0
    %462 = vmatpush1.msra.mxu0 0.0
    %463 = vmatprep.subr.mxu0 0.0
    %464 = vmatpush1.msra.mxu0 0.0
    %465 = vmatprep.subr.mxu0 0.0
    %466 = vmatpush1.msra.mxu0 0.0
    %467 = vmatprep.subr.mxu0 0.0
    %468 = vmatpush1.msra.mxu0 0.0
    %469 = vmatprep.subr.mxu0 0.0
    %470 = vmatpush1.msra.mxu0 0.0
    %471 = vmatprep.subr.mxu0 0.0
    %472 = vmatpush1.msra.mxu0 0.0
    %473 = vmatprep.subr.mxu0 0.0
    %474 = vmatpush1.msra.mxu0 0.0
    %475 = vmatprep.subr.mxu0 0.0
    %476 = vmatpush1.msra.mxu0 0.0
    %477 = vmatprep.subr.mxu0 0.0
    %478 = vmatpush1.msra.mxu0 0.0
    %479 = vmatprep.subr.mxu0 0.0
    %480 = vmatpush1.msra.mxu0 0.0
    %481 = vmatprep.mubr.f32.mxu0 0.0
    %482 = vmatmul.mubr.f32.gmra.mrb[0].mxu0 %v415
    %v483 = vpop.f32.mrb[0].mxu0
    %v484 = vadd.f32 0.0, %v483
    %v485 = vpop.f32.mrb[0].mxu0
    %486 = vdwg.mxu0
    %v487 = vrcp.pop %v331
    %v488 = vrcp.pop %v334
    %v489 = vmul.f32 %v408, %v487
    %v490 = vmul.f32 %v484, %v488
    %491 = vrot.lane.b32.xlu0 %v160, 120
    %v492 = vpop.permute.xlu0 %491
    %493 = vrot.lane.b32.xlu0 %v160, 88
    %v494 = vpop.permute.xlu0 %493
    %v495 = vsel %vm165, %v492, 0
    %v497 = vsel %vm165, %v494, 0
    %499 = vmatprep.subr.mxu0 0.0
    %500 = vmatpush1.xpose.msra.mxu0 %v497
    %501 = vmatprep.subr.mxu0 0.0
    %502 = vmatpush1.xpose.msra.mxu0 0.0
    %503 = vmatprep.subr.mxu0 0.0
    %504 = vmatpush1.xpose.msra.mxu0 0.0
    %505 = vmatprep.subr.mxu0 0.0
    %506 = vmatpush1.xpose.msra.mxu0 0.0
    %507 = vmatprep.subr.mxu0 0.0
    %508 = vmatpush1.xpose.msra.mxu0 0.0
    %509 = vmatprep.subr.mxu0 0.0
    %510 = vmatpush1.xpose.msra.mxu0 0.0
    %511 = vmatprep.subr.mxu0 0.0
    %512 = vmatpush1.xpose.msra.mxu0 0.0
    %513 = vmatprep.subr.mxu0 0.0
    %514 = vmatpush1.xpose.msra.mxu0 0.0
    %515 = vmatprep.subr.mxu0 0.0
    %516 = vmatpush1.xpose.msra.mxu0 0.0
    %517 = vmatprep.subr.mxu0 0.0
    %518 = vmatpush1.xpose.msra.mxu0 0.0
    %519 = vmatprep.subr.mxu0 0.0
    %520 = vmatpush1.xpose.msra.mxu0 0.0
    %521 = vmatprep.subr.mxu0 0.0
    %522 = vmatpush1.xpose.msra.mxu0 0.0
    %523 = vmatprep.subr.mxu0 0.0
    %524 = vmatpush1.xpose.msra.mxu0 0.0
    %525 = vmatprep.subr.mxu0 0.0
    %526 = vmatpush1.xpose.msra.mxu0 0.0
    %527 = vmatprep.subr.mxu0 0.0
    %528 = vmatpush1.xpose.msra.mxu0 0.0
    %529 = vmatprep.subr.mxu0 0.0
    %530 = vmatpush1.xpose.msra.mxu0 0.0
    %531 = vmatprep.subr.mxu0 0.0
    %532 = vmatpush1.xpose.msra.mxu0 0.0
    %533 = vmatprep.subr.mxu0 0.0
    %534 = vmatpush1.xpose.msra.mxu0 0.0
    %535 = vmatprep.subr.mxu0 0.0
    %536 = vmatpush1.xpose.msra.mxu0 0.0
    %537 = vmatprep.subr.mxu0 0.0
    %538 = vmatpush1.xpose.msra.mxu0 0.0
    %539 = vmatprep.subr.mxu0 0.0
    %540 = vmatpush1.xpose.msra.mxu0 0.0
    %541 = vmatprep.subr.mxu0 0.0
    %542 = vmatpush1.xpose.msra.mxu0 0.0
    %543 = vmatprep.subr.mxu0 0.0
    %544 = vmatpush1.xpose.msra.mxu0 0.0
    %545 = vmatprep.subr.mxu0 0.0
    %546 = vmatpush1.xpose.msra.mxu0 0.0
    %547 = vmatprep.subr.mxu0 0.0
    %548 = vmatpush1.xpose.msra.mxu0 0.0
    %549 = vmatprep.subr.mxu0 0.0
    %550 = vmatpush1.xpose.msra.mxu0 0.0
    %551 = vmatprep.subr.mxu0 0.0
    %552 = vmatpush1.xpose.msra.mxu0 0.0
    %553 = vmatprep.subr.mxu0 0.0
    %554 = vmatpush1.xpose.msra.mxu0 0.0
    %555 = vmatprep.subr.mxu0 0.0
    %556 = vmatpush1.xpose.msra.mxu0 0.0
    %557 = vmatprep.subr.mxu0 0.0
    %558 = vmatpush1.xpose.msra.mxu0 0.0
    %559 = vmatprep.subr.mxu0 0.0
    %560 = vmatpush1.xpose.msra.mxu0 0.0
    %561 = vmatprep.subr.mxu0 0.0
    %562 = vmatpush1.xpose.msra.mxu0 0.0
    %563 = vmatprep.mubr.f32.mxu0 0.0
    %564 = vmatmul.mubr.f32.gmra.mrb[0].mxu0 %v495
    %v565 = vpop.f32.mrb[0].mxu0
    %v566 = vadd.f32 0.0, %v565
    %v567 = vpop.f32.mrb[0].mxu0
    %568 = vdwg.mxu0
    %569 = vrot.lane.b32.xlu0 %v161, 120
    %v570 = vpop.permute.xlu0 %569
    %571 = vrot.lane.b32.xlu0 %v161, 88
    %v572 = vpop.permute.xlu0 %571
    %v573 = vsel %vm165, %v570, 0
    %v575 = vsel %vm165, %v572, 0
    %577 = vmatprep.subr.mxu0 0.0
    %578 = vmatpush1.xpose.msra.mxu0 %v575
    %579 = vmatprep.subr.mxu0 0.0
    %580 = vmatpush1.xpose.msra.mxu0 0.0
    %581 = vmatprep.subr.mxu0 0.0
    %582 = vmatpush1.xpose.msra.mxu0 0.0
    %583 = vmatprep.subr.mxu0 0.0
    %584 = vmatpush1.xpose.msra.mxu0 0.0
    %585 = vmatprep.subr.mxu0 0.0
    %586 = vmatpush1.xpose.msra.mxu0 0.0
    %587 = vmatprep.subr.mxu0 0.0
    %588 = vmatpush1.xpose.msra.mxu0 0.0
    %589 = vmatprep.subr.mxu0 0.0
    %590 = vmatpush1.xpose.msra.mxu0 0.0
    %591 = vmatprep.subr.mxu0 0.0
    %592 = vmatpush1.xpose.msra.mxu0 0.0
    %593 = vmatprep.subr.mxu0 0.0
    %594 = vmatpush1.xpose.msra.mxu0 0.0
    %595 = vmatprep.subr.mxu0 0.0
    %596 = vmatpush1.xpose.msra.mxu0 0.0
    %597 = vmatprep.subr.mxu0 0.0
    %598 = vmatpush1.xpose.msra.mxu0 0.0
    %599 = vmatprep.subr.mxu0 0.0
    %600 = vmatpush1.xpose.msra.mxu0 0.0
    %601 = vmatprep.subr.mxu0 0.0
    %602 = vmatpush1.xpose.msra.mxu0 0.0
    %603 = vmatprep.subr.mxu0 0.0
    %604 = vmatpush1.xpose.msra.mxu0 0.0
    %605 = vmatprep.subr.mxu0 0.0
    %606 = vmatpush1.xpose.msra.mxu0 0.0
    %607 = vmatprep.subr.mxu0 0.0
    %608 = vmatpush1.xpose.msra.mxu0 0.0
    %609 = vmatprep.subr.mxu0 0.0
    %610 = vmatpush1.xpose.msra.mxu0 0.0
    %611 = vmatprep.subr.mxu0 0.0
    %612 = vmatpush1.xpose.msra.mxu0 0.0
    %613 = vmatprep.subr.mxu0 0.0
    %614 = vmatpush1.xpose.msra.mxu0 0.0
    %615 = vmatprep.subr.mxu0 0.0
    %616 = vmatpush1.xpose.msra.mxu0 0.0
    %617 = vmatprep.subr.mxu0 0.0
    %618 = vmatpush1.xpose.msra.mxu0 0.0
    %619 = vmatprep.subr.mxu0 0.0
    %620 = vmatpush1.xpose.msra.mxu0 0.0
    %621 = vmatprep.subr.mxu0 0.0
    %622 = vmatpush1.xpose.msra.mxu0 0.0
    %623 = vmatprep.subr.mxu0 0.0
    %624 = vmatpush1.xpose.msra.mxu0 0.0
    %625 = vmatprep.subr.mxu0 0.0
    %626 = vmatpush1.xpose.msra.mxu0 0.0
    %627 = vmatprep.subr.mxu0 0.0
    %628 = vmatpush1.xpose.msra.mxu0 0.0
    %629 = vmatprep.subr.mxu0 0.0
    %630 = vmatpush1.xpose.msra.mxu0 0.0
    %631 = vmatprep.subr.mxu0 0.0
    %632 = vmatpush1.xpose.msra.mxu0 0.0
    %633 = vmatprep.subr.mxu0 0.0
    %634 = vmatpush1.xpose.msra.mxu0 0.0
    %635 = vmatprep.subr.mxu0 0.0
    %636 = vmatpush1.xpose.msra.mxu0 0.0
    %637 = vmatprep.subr.mxu0 0.0
    %638 = vmatpush1.xpose.msra.mxu0 0.0
    %639 = vmatprep.subr.mxu0 0.0
    %640 = vmatpush1.xpose.msra.mxu0 0.0
    %641 = vmatprep.mubr.f32.mxu0 0.0
    %642 = vmatmul.mubr.f32.gmra.mrb[0].mxu0 %v573
    %v643 = vpop.f32.mrb[0].mxu0
    %v644 = vadd.f32 0.0, %v643
    %v645 = vpop.f32.mrb[0].mxu0
    %646 = vdwg.mxu0
    %v647 = vsel %vm165, %v566, -inf
    %648 = vmax.xlane.f32.xlu0 %v647
    %v649 = vpop.xlane.xlu0 %648
    %v650 = vsel %vm165, %v644, -inf
    %651 = vmax.xlane.f32.xlu0 %v650
    %v652 = vpop.xlane.xlu0 %651
    %v653 = vsub.f32 %v566, %v649
    %v654 = vsub.f32 %v644, %v652
    %v655 = vmul.f32 %v653, 1.442695
    %v656 = vpow.pop %v655
    %v657 = vmul.f32 %v654, 1.442695
    %v658 = vpow.pop %v657
    %v659 = vsel %vm165, %v656, 0.0
    %660 = vadd.xlane.f32.xlu0 %v659
    %v661 = vpop.xlane.xlu0 %660
    %v662 = vsel %vm165, %v658, 0.0
    %663 = vadd.xlane.f32.xlu0 %v662
    %v664 = vpop.xlane.xlu0 %663
    %665 = vrot.lane.b32.xlu0 %v160, 56
    %v666 = vpop.permute.xlu0 %665
    %v669 = vsel %vm165, %v656, 0
    %671 = vmatprep.subr.mxu0 0.0
    %672 = vmatpush1.msra.mxu0 %v666
    %673 = vmatprep.subr.mxu0 0.0
    %674 = vmatpush1.msra.mxu0 0.0
    %675 = vmatprep.subr.mxu0 0.0
    %676 = vmatpush1.msra.mxu0 0.0
    %677 = vmatprep.subr.mxu0 0.0
    %678 = vmatpush1.msra.mxu0 0.0
    %679 = vmatprep.subr.mxu0 0.0
    %680 = vmatpush1.msra.mxu0 0.0
    %681 = vmatprep.subr.mxu0 0.0
    %682 = vmatpush1.msra.mxu0 0.0
    %683 = vmatprep.subr.mxu0 0.0
    %684 = vmatpush1.msra.mxu0 0.0
    %685 = vmatprep.subr.mxu0 0.0
    %686 = vmatpush1.msra.mxu0 0.0
    %687 = vmatprep.subr.mxu0 0.0
    %688 = vmatpush1.msra.mxu0 0.0
    %689 = vmatprep.subr.mxu0 0.0
    %690 = vmatpush1.msra.mxu0 0.0
    %691 = vmatprep.subr.mxu0 0.0
    %692 = vmatpush1.msra.mxu0 0.0
    %693 = vmatprep.subr.mxu0 0.0
    %694 = vmatpush1.msra.mxu0 0.0
    %695 = vmatprep.subr.mxu0 0.0
    %696 = vmatpush1.msra.mxu0 0.0
    %697 = vmatprep.subr.mxu0 0.0
    %698 = vmatpush1.msra.mxu0 0.0
    %699 = vmatprep.subr.mxu0 0.0
    %700 = vmatpush1.msra.mxu0 0.0
    %701 = vmatprep.subr.mxu0 0.0
    %702 = vmatpush1.msra.mxu0 0.0
    %703 = vmatprep.subr.mxu0 0.0
    %704 = vmatpush1.msra.mxu0 0.0
    %705 = vmatprep.subr.mxu0 0.0
    %706 = vmatpush1.msra.mxu0 0.0
    %707 = vmatprep.subr.mxu0 0.0
    %708 = vmatpush1.msra.mxu0 0.0
    %709 = vmatprep.subr.mxu0 0.0
    %710 = vmatpush1.msra.mxu0 0.0
    %711 = vmatprep.subr.mxu0 0.0
    %712 = vmatpush1.msra.mxu0 0.0
    %713 = vmatprep.subr.mxu0 0.0
    %714 = vmatpush1.msra.mxu0 0.0
    %715 = vmatprep.subr.mxu0 0.0
    %716 = vmatpush1.msra.mxu0 0.0
    %717 = vmatprep.subr.mxu0 0.0
    %718 = vmatpush1.msra.mxu0 0.0
    %719 = vmatprep.subr.mxu0 0.0
    %720 = vmatpush1.msra.mxu0 0.0
    %721 = vmatprep.subr.mxu0 0.0
    %722 = vmatpush1.msra.mxu0 0.0
    %723 = vmatprep.subr.mxu0 0.0
    %724 = vmatpush1.msra.mxu0 0.0
    %725 = vmatprep.subr.mxu0 0.0
    %726 = vmatpush1.msra.mxu0 0.0
    %727 = vmatprep.subr.mxu0 0.0
    %728 = vmatpush1.msra.mxu0 0.0
    %729 = vmatprep.subr.mxu0 0.0
    %730 = vmatpush1.msra.mxu0 0.0
    %731 = vmatprep.subr.mxu0 0.0
    %732 = vmatpush1.msra.mxu0 0.0
    %733 = vmatprep.subr.mxu0 0.0
    %734 = vmatpush1.msra.mxu0 0.0
    %735 = vmatprep.mubr.f32.mxu0 0.0
    %736 = vmatmul.mubr.f32.gmra.mrb[0].mxu0 %v669
    %v737 = vpop.f32.mrb[0].mxu0
    %v738 = vadd.f32 0.0, %v737
    %v739 = vpop.f32.mrb[0].mxu0
    %740 = vdwg.mxu0
    %741 = vrot.lane.b32.xlu0 %v161, 56
    %v742 = vpop.permute.xlu0 %741
    %v745 = vsel %vm165, %v658, 0
    %747 = vmatprep.subr.mxu0 0.0
    %748 = vmatpush1.msra.mxu0 %v742
    %749 = vmatprep.subr.mxu0 0.0
    %750 = vmatpush1.msra.mxu0 0.0
    %751 = vmatprep.subr.mxu0 0.0
    %752 = vmatpush1.msra.mxu0 0.0
    %753 = vmatprep.subr.mxu0 0.0
    %754 = vmatpush1.msra.mxu0 0.0
    %755 = vmatprep.subr.mxu0 0.0
    %756 = vmatpush1.msra.mxu0 0.0
    %757 = vmatprep.subr.mxu0 0.0
    %758 = vmatpush1.msra.mxu0 0.0
    %759 = vmatprep.subr.mxu0 0.0
    %760 = vmatpush1.msra.mxu0 0.0
    %761 = vmatprep.subr.mxu0 0.0
    %762 = vmatpush1.msra.mxu0 0.0
    %763 = vmatprep.subr.mxu0 0.0
    %764 = vmatpush1.msra.mxu0 0.0
    %765 = vmatprep.subr.mxu0 0.0
    %766 = vmatpush1.msra.mxu0 0.0
    %767 = vmatprep.subr.mxu0 0.0
    %768 = vmatpush1.msra.mxu0 0.0
    %769 = vmatprep.subr.mxu0 0.0
    %770 = vmatpush1.msra.mxu0 0.0
    %771 = vmatprep.subr.mxu0 0.0
    %772 = vmatpush1.msra.mxu0 0.0
    %773 = vmatprep.subr.mxu0 0.0
    %774 = vmatpush1.msra.mxu0 0.0
    %775 = vmatprep.subr.mxu0 0.0
    %776 = vmatpush1.msra.mxu0 0.0
    %777 = vmatprep.subr.mxu0 0.0
    %778 = vmatpush1.msra.mxu0 0.0
    %779 = vmatprep.subr.mxu0 0.0
    %780 = vmatpush1.msra.mxu0 0.0
    %781 = vmatprep.subr.mxu0 0.0
    %782 = vmatpush1.msra.mxu0 0.0
    %783 = vmatprep.subr.mxu0 0.0
    %784 = vmatpush1.msra.mxu0 0.0
    %785 = vmatprep.subr.mxu0 0.0
    %786 = vmatpush1.msra.mxu0 0.0
    %787 = vmatprep.subr.mxu0 0.0
    %788 = vmatpush1.msra.mxu0 0.0
    %789 = vmatprep.subr.mxu0 0.0
    %790 = vmatpush1.msra.mxu0 0.0
    %791 = vmatprep.subr.mxu0 0.0
    %792 = vmatpush1.msra.mxu0 0.0
    %793 = vmatprep.subr.mxu0 0.0
    %794 = vmatpush1.msra.mxu0 0.0
    %795 = vmatprep.subr.mxu0 0.0
    %796 = vmatpush1.msra.mxu0 0.0
    %797 = vmatprep.subr.mxu0 0.0
    %798 = vmatpush1.msra.mxu0 0.0
    %799 = vmatprep.subr.mxu0 0.0
    %800 = vmatpush1.msra.mxu0 0.0
    %801 = vmatprep.subr.mxu0 0.0
    %802 = vmatpush1.msra.mxu0 0.0
    %803 = vmatprep.subr.mxu0 0.0
    %804 = vmatpush1.msra.mxu0 0.0
    %805 = vmatprep.subr.mxu0 0.0
    %806 = vmatpush1.msra.mxu0 0.0
    %807 = vmatprep.subr.mxu0 0.0
    %808 = vmatpush1.msra.mxu0 0.0
    %809 = vmatprep.subr.mxu0 0.0
    %810 = vmatpush1.msra.mxu0 0.0
    %811 = vmatprep.mubr.f32.mxu0 0.0
    %812 = vmatmul.mubr.f32.gmra.mrb[0].mxu0 %v745
    %v813 = vpop.f32.mrb[0].mxu0
    %v814 = vadd.f32 0.0, %v813
    %v815 = vpop.f32.mrb[0].mxu0
    %816 = vdwg.mxu0
    %v817 = vrcp.pop %v661
    %v818 = vrcp.pop %v664
    %v819 = vmul.f32 %v738, %v817
    %v820 = vmul.f32 %v814, %v818
    %821 = vrot.lane.b32.xlu0 %v160, 112
    %v822 = vpop.permute.xlu0 %821
    %823 = vrot.lane.b32.xlu0 %v160, 80
    %v824 = vpop.permute.xlu0 %823
    %v825 = vsel %vm165, %v822, 0
    %v827 = vsel %vm165, %v824, 0
    %829 = vmatprep.subr.mxu0 0.0
    %830 = vmatpush1.xpose.msra.mxu0 %v827
    %831 = vmatprep.subr.mxu0 0.0
    %832 = vmatpush1.xpose.msra.mxu0 0.0
    %833 = vmatprep.subr.mxu0 0.0
    %834 = vmatpush1.xpose.msra.mxu0 0.0
    %835 = vmatprep.subr.mxu0 0.0
    %836 = vmatpush1.xpose.msra.mxu0 0.0
    %837 = vmatprep.subr.mxu0 0.0
    %838 = vmatpush1.xpose.msra.mxu0 0.0
    %839 = vmatprep.subr.mxu0 0.0
    %840 = vmatpush1.xpose.msra.mxu0 0.0
    %841 = vmatprep.subr.mxu0 0.0
    %842 = vmatpush1.xpose.msra.mxu0 0.0
    %843 = vmatprep.subr.mxu0 0.0
    %844 = vmatpush1.xpose.msra.mxu0 0.0
    %845 = vmatprep.subr.mxu0 0.0
    %846 = vmatpush1.xpose.msra.mxu0 0.0
    %847 = vmatprep.subr.mxu0 0.0
    %848 = vmatpush1.xpose.msra.mxu0 0.0
    %849 = vmatprep.subr.mxu0 0.0
    %850 = vmatpush1.xpose.msra.mxu0 0.0
    %851 = vmatprep.subr.mxu0 0.0
    %852 = vmatpush1.xpose.msra.mxu0 0.0
    %853 = vmatprep.subr.mxu0 0.0
    %854 = vmatpush1.xpose.msra.mxu0 0.0
    %855 = vmatprep.subr.mxu0 0.0
    %856 = vmatpush1.xpose.msra.mxu0 0.0
    %857 = vmatprep.subr.mxu0 0.0
    %858 = vmatpush1.xpose.msra.mxu0 0.0
    %859 = vmatprep.subr.mxu0 0.0
    %860 = vmatpush1.xpose.msra.mxu0 0.0
    %861 = vmatprep.subr.mxu0 0.0
    %862 = vmatpush1.xpose.msra.mxu0 0.0
    %863 = vmatprep.subr.mxu0 0.0
    %864 = vmatpush1.xpose.msra.mxu0 0.0
    %865 = vmatprep.subr.mxu0 0.0
    %866 = vmatpush1.xpose.msra.mxu0 0.0
    %867 = vmatprep.subr.mxu0 0.0
    %868 = vmatpush1.xpose.msra.mxu0 0.0
    %869 = vmatprep.subr.mxu0 0.0
    %870 = vmatpush1.xpose.msra.mxu0 0.0
    %871 = vmatprep.subr.mxu0 0.0
    %872 = vmatpush1.xpose.msra.mxu0 0.0
    %873 = vmatprep.subr.mxu0 0.0
    %874 = vmatpush1.xpose.msra.mxu0 0.0
    %875 = vmatprep.subr.mxu0 0.0
    %876 = vmatpush1.xpose.msra.mxu0 0.0
    %877 = vmatprep.subr.mxu0 0.0
    %878 = vmatpush1.xpose.msra.mxu0 0.0
    %879 = vmatprep.subr.mxu0 0.0
    %880 = vmatpush1.xpose.msra.mxu0 0.0
    %881 = vmatprep.subr.mxu0 0.0
    %882 = vmatpush1.xpose.msra.mxu0 0.0
    %883 = vmatprep.subr.mxu0 0.0
    %884 = vmatpush1.xpose.msra.mxu0 0.0
    %885 = vmatprep.subr.mxu0 0.0
    %886 = vmatpush1.xpose.msra.mxu0 0.0
    %887 = vmatprep.subr.mxu0 0.0
    %888 = vmatpush1.xpose.msra.mxu0 0.0
    %889 = vmatprep.subr.mxu0 0.0
    %890 = vmatpush1.xpose.msra.mxu0 0.0
    %891 = vmatprep.subr.mxu0 0.0
    %892 = vmatpush1.xpose.msra.mxu0 0.0
    %893 = vmatprep.mubr.f32.mxu0 0.0
    %894 = vmatmul.mubr.f32.gmra.mrb[0].mxu0 %v825
    %v895 = vpop.f32.mrb[0].mxu0
    %v896 = vadd.f32 0.0, %v895
    %v897 = vpop.f32.mrb[0].mxu0
    %898 = vdwg.mxu0
    %899 = vrot.lane.b32.xlu0 %v161, 112
    %v900 = vpop.permute.xlu0 %899
    %901 = vrot.lane.b32.xlu0 %v161, 80
    %v902 = vpop.permute.xlu0 %901
    %v903 = vsel %vm165, %v900, 0
    %v905 = vsel %vm165, %v902, 0
    %907 = vmatprep.subr.mxu0 0.0
    %908 = vmatpush1.xpose.msra.mxu0 %v905
    %909 = vmatprep.subr.mxu0 0.0
    %910 = vmatpush1.xpose.msra.mxu0 0.0
    %911 = vmatprep.subr.mxu0 0.0
    %912 = vmatpush1.xpose.msra.mxu0 0.0
    %913 = vmatprep.subr.mxu0 0.0
    %914 = vmatpush1.xpose.msra.mxu0 0.0
    %915 = vmatprep.subr.mxu0 0.0
    %916 = vmatpush1.xpose.msra.mxu0 0.0
    %917 = vmatprep.subr.mxu0 0.0
    %918 = vmatpush1.xpose.msra.mxu0 0.0
    %919 = vmatprep.subr.mxu0 0.0
    %920 = vmatpush1.xpose.msra.mxu0 0.0
    %921 = vmatprep.subr.mxu0 0.0
    %922 = vmatpush1.xpose.msra.mxu0 0.0
    %923 = vmatprep.subr.mxu0 0.0
    %924 = vmatpush1.xpose.msra.mxu0 0.0
    %925 = vmatprep.subr.mxu0 0.0
    %926 = vmatpush1.xpose.msra.mxu0 0.0
    %927 = vmatprep.subr.mxu0 0.0
    %928 = vmatpush1.xpose.msra.mxu0 0.0
    %929 = vmatprep.subr.mxu0 0.0
    %930 = vmatpush1.xpose.msra.mxu0 0.0
    %931 = vmatprep.subr.mxu0 0.0
    %932 = vmatpush1.xpose.msra.mxu0 0.0
    %933 = vmatprep.subr.mxu0 0.0
    %934 = vmatpush1.xpose.msra.mxu0 0.0
    %935 = vmatprep.subr.mxu0 0.0
    %936 = vmatpush1.xpose.msra.mxu0 0.0
    %937 = vmatprep.subr.mxu0 0.0
    %938 = vmatpush1.xpose.msra.mxu0 0.0
    %939 = vmatprep.subr.mxu0 0.0
    %940 = vmatpush1.xpose.msra.mxu0 0.0
    %941 = vmatprep.subr.mxu0 0.0
    %942 = vmatpush1.xpose.msra.mxu0 0.0
    %943 = vmatprep.subr.mxu0 0.0
    %944 = vmatpush1.xpose.msra.mxu0 0.0
    %945 = vmatprep.subr.mxu0 0.0
    %946 = vmatpush1.xpose.msra.mxu0 0.0
    %947 = vmatprep.subr.mxu0 0.0
    %948 = vmatpush1.xpose.msra.mxu0 0.0
    %949 = vmatprep.subr.mxu0 0.0
    %950 = vmatpush1.xpose.msra.mxu0 0.0
    %951 = vmatprep.subr.mxu0 0.0
    %952 = vmatpush1.xpose.msra.mxu0 0.0
    %953 = vmatprep.subr.mxu0 0.0
    %954 = vmatpush1.xpose.msra.mxu0 0.0
    %955 = vmatprep.subr.mxu0 0.0
    %956 = vmatpush1.xpose.msra.mxu0 0.0
    %957 = vmatprep.subr.mxu0 0.0
    %958 = vmatpush1.xpose.msra.mxu0 0.0
    %959 = vmatprep.subr.mxu0 0.0
    %960 = vmatpush1.xpose.msra.mxu0 0.0
    %961 = vmatprep.subr.mxu0 0.0
    %962 = vmatpush1.xpose.msra.mxu0 0.0
    %963 = vmatprep.subr.mxu0 0.0
    %964 = vmatpush1.xpose.msra.mxu0 0.0
    %965 = vmatprep.subr.mxu0 0.0
    %966 = vmatpush1.xpose.msra.mxu0 0.0
    %967 = vmatprep.subr.mxu0 0.0
    %968 = vmatpush1.xpose.msra.mxu0 0.0
    %969 = vmatprep.subr.mxu0 0.0
    %970 = vmatpush1.xpose.msra.mxu0 0.0
    %971 = vmatprep.mubr.f32.mxu0 0.0
    %972 = vmatmul.mubr.f32.gmra.mrb[0].mxu0 %v903
    %v973 = vpop.f32.mrb[0].mxu0
    %v974 = vadd.f32 0.0, %v973
    %v975 = vpop.f32.mrb[0].mxu0
    %976 = vdwg.mxu0
    %v977 = vsel %vm165, %v896, -inf
    %978 = vmax.xlane.f32.xlu0 %v977
    %v979 = vpop.xlane.xlu0 %978
    %v980 = vsel %vm165, %v974, -inf
    %981 = vmax.xlane.f32.xlu0 %v980
    %v982 = vpop.xlane.xlu0 %981
    %v983 = vsub.f32 %v896, %v979
    %v984 = vsub.f32 %v974, %v982
    %v985 = vmul.f32 %v983, 1.442695
    %v986 = vpow.pop %v985
    %v987 = vmul.f32 %v984, 1.442695
    %v988 = vpow.pop %v987
    %v989 = vsel %vm165, %v986, 0.0
    %990 = vadd.xlane.f32.xlu0 %v989
    %v991 = vpop.xlane.xlu0 %990
    %v992 = vsel %vm165, %v988, 0.0
    %993 = vadd.xlane.f32.xlu0 %v992
    %v994 = vpop.xlane.xlu0 %993
    %995 = vrot.lane.b32.xlu0 %v160, 48
    %v996 = vpop.permute.xlu0 %995
    %v999 = vsel %vm165, %v986, 0
    %1001 = vmatprep.subr.mxu0 0.0
    %1002 = vmatpush1.msra.mxu0 %v996
    %1003 = vmatprep.subr.mxu0 0.0
    %1004 = vmatpush1.msra.mxu0 0.0
    %1005 = vmatprep.subr.mxu0 0.0
    %1006 = vmatpush1.msra.mxu0 0.0
    %1007 = vmatprep.subr.mxu0 0.0
    %1008 = vmatpush1.msra.mxu0 0.0
    %1009 = vmatprep.subr.mxu0 0.0
    %1010 = vmatpush1.msra.mxu0 0.0
    %1011 = vmatprep.subr.mxu0 0.0
    %1012 = vmatpush1.msra.mxu0 0.0
    %1013 = vmatprep.subr.mxu0 0.0
    %1014 = vmatpush1.msra.mxu0 0.0
    %1015 = vmatprep.subr.mxu0 0.0
    %1016 = vmatpush1.msra.mxu0 0.0
    %1017 = vmatprep.subr.mxu0 0.0
    %1018 = vmatpush1.msra.mxu0 0.0
    %1019 = vmatprep.subr.mxu0 0.0
    %1020 = vmatpush1.msra.mxu0 0.0
    %1021 = vmatprep.subr.mxu0 0.0
    %1022 = vmatpush1.msra.mxu0 0.0
    %1023 = vmatprep.subr.mxu0 0.0
    %1024 = vmatpush1.msra.mxu0 0.0
    %1025 = vmatprep.subr.mxu0 0.0
    %1026 = vmatpush1.msra.mxu0 0.0
    %1027 = vmatprep.subr.mxu0 0.0
    %1028 = vmatpush1.msra.mxu0 0.0
    %1029 = vmatprep.subr.mxu0 0.0
    %1030 = vmatpush1.msra.mxu0 0.0
    %1031 = vmatprep.subr.mxu0 0.0
    %1032 = vmatpush1.msra.mxu0 0.0
    %1033 = vmatprep.subr.mxu0 0.0
    %1034 = vmatpush1.msra.mxu0 0.0
    %1035 = vmatprep.subr.mxu0 0.0
    %1036 = vmatpush1.msra.mxu0 0.0
    %1037 = vmatprep.subr.mxu0 0.0
    %1038 = vmatpush1.msra.mxu0 0.0
    %1039 = vmatprep.subr.mxu0 0.0
    %1040 = vmatpush1.msra.mxu0 0.0
    %1041 = vmatprep.subr.mxu0 0.0
    %1042 = vmatpush1.msra.mxu0 0.0
    %1043 = vmatprep.subr.mxu0 0.0
    %1044 = vmatpush1.msra.mxu0 0.0
    %1045 = vmatprep.subr.mxu0 0.0
    %1046 = vmatpush1.msra.mxu0 0.0
    %1047 = vmatprep.subr.mxu0 0.0
    %1048 = vmatpush1.msra.mxu0 0.0
    %1049 = vmatprep.subr.mxu0 0.0
    %1050 = vmatpush1.msra.mxu0 0.0
    %1051 = vmatprep.subr.mxu0 0.0
    %1052 = vmatpush1.msra.mxu0 0.0
    %1053 = vmatprep.subr.mxu0 0.0
    %1054 = vmatpush1.msra.mxu0 0.0
    %1055 = vmatprep.subr.mxu0 0.0
    %1056 = vmatpush1.msra.mxu0 0.0
    %1057 = vmatprep.subr.mxu0 0.0
    %1058 = vmatpush1.msra.mxu0 0.0
    %1059 = vmatprep.subr.mxu0 0.0
    %1060 = vmatpush1.msra.mxu0 0.0
    %1061 = vmatprep.subr.mxu0 0.0
    %1062 = vmatpush1.msra.mxu0 0.0
    %1063 = vmatprep.subr.mxu0 0.0
    %1064 = vmatpush1.msra.mxu0 0.0
    %1065 = vmatprep.mubr.f32.mxu0 0.0
    %1066 = vmatmul.mubr.f32.gmra.mrb[0].mxu0 %v999
    %v1067 = vpop.f32.mrb[0].mxu0
    %v1068 = vadd.f32 0.0, %v1067
    %v1069 = vpop.f32.mrb[0].mxu0
    %1070 = vdwg.mxu0
    %1071 = vrot.lane.b32.xlu0 %v161, 48
    %v1072 = vpop.permute.xlu0 %1071
    %v1075 = vsel %vm165, %v988, 0
    %1077 = vmatprep.subr.mxu0 0.0
    %1078 = vmatpush1.msra.mxu0 %v1072
    %1079 = vmatprep.subr.mxu0 0.0
    %1080 = vmatpush1.msra.mxu0 0.0
    %1081 = vmatprep.subr.mxu0 0.0
    %1082 = vmatpush1.msra.mxu0 0.0
    %1083 = vmatprep.subr.mxu0 0.0
    %1084 = vmatpush1.msra.mxu0 0.0
    %1085 = vmatprep.subr.mxu0 0.0
    %1086 = vmatpush1.msra.mxu0 0.0
    %1087 = vmatprep.subr.mxu0 0.0
    %1088 = vmatpush1.msra.mxu0 0.0
    %1089 = vmatprep.subr.mxu0 0.0
    %1090 = vmatpush1.msra.mxu0 0.0
    %1091 = vmatprep.subr.mxu0 0.0
    %1092 = vmatpush1.msra.mxu0 0.0
    %1093 = vmatprep.subr.mxu0 0.0
    %1094 = vmatpush1.msra.mxu0 0.0
    %1095 = vmatprep.subr.mxu0 0.0
    %1096 = vmatpush1.msra.mxu0 0.0
    %1097 = vmatprep.subr.mxu0 0.0
    %1098 = vmatpush1.msra.mxu0 0.0
    %1099 = vmatprep.subr.mxu0 0.0
    %1100 = vmatpush1.msra.mxu0 0.0
    %1101 = vmatprep.subr.mxu0 0.0
    %1102 = vmatpush1.msra.mxu0 0.0
    %1103 = vmatprep.subr.mxu0 0.0
    %1104 = vmatpush1.msra.mxu0 0.0
    %1105 = vmatprep.subr.mxu0 0.0
    %1106 = vmatpush1.msra.mxu0 0.0
    %1107 = vmatprep.subr.mxu0 0.0
    %1108 = vmatpush1.msra.mxu0 0.0
    %1109 = vmatprep.subr.mxu0 0.0
    %1110 = vmatpush1.msra.mxu0 0.0
    %1111 = vmatprep.subr.mxu0 0.0
    %1112 = vmatpush1.msra.mxu0 0.0
    %1113 = vmatprep.subr.mxu0 0.0
    %1114 = vmatpush1.msra.mxu0 0.0
    %1115 = vmatprep.subr.mxu0 0.0
    %1116 = vmatpush1.msra.mxu0 0.0
    %1117 = vmatprep.subr.mxu0 0.0
    %1118 = vmatpush1.msra.mxu0 0.0
    %1119 = vmatprep.subr.mxu0 0.0
    %1120 = vmatpush1.msra.mxu0 0.0
    %1121 = vmatprep.subr.mxu0 0.0
    %1122 = vmatpush1.msra.mxu0 0.0
    %1123 = vmatprep.subr.mxu0 0.0
    %1124 = vmatpush1.msra.mxu0 0.0
    %1125 = vmatprep.subr.mxu0 0.0
    %1126 = vmatpush1.msra.mxu0 0.0
    %1127 = vmatprep.subr.mxu0 0.0
    %1128 = vmatpush1.msra.mxu0 0.0
    %1129 = vmatprep.subr.mxu0 0.0
    %1130 = vmatpush1.msra.mxu0 0.0
    %1131 = vmatprep.subr.mxu0 0.0
    %1132 = vmatpush1.msra.mxu0 0.0
    %1133 = vmatprep.subr.mxu0 0.0
    %1134 = vmatpush1.msra.mxu0 0.0
    %1135 = vmatprep.subr.mxu0 0.0
    %1136 = vmatpush1.msra.mxu0 0.0
    %1137 = vmatprep.subr.mxu0 0.0
    %1138 = vmatpush1.msra.mxu0 0.0
    %1139 = vmatprep.subr.mxu0 0.0
    %1140 = vmatpush1.msra.mxu0 0.0
    %1141 = vmatprep.mubr.f32.mxu0 0.0
    %1142 = vmatmul.mubr.f32.gmra.mrb[0].mxu0 %v1075
    %v1143 = vpop.f32.mrb[0].mxu0
    %v1144 = vadd.f32 0.0, %v1143
    %v1145 = vpop.f32.mrb[0].mxu0
    %1146 = vdwg.mxu0
    %v1147 = vrcp.pop %v991
    %v1148 = vrcp.pop %v994
    %v1149 = vmul.f32 %v1068, %v1147
    %v1150 = vmul.f32 %v1144, %v1148
    %1151 = vrot.lane.b32.xlu0 %v160, 104
    %v1152 = vpop.permute.xlu0 %1151
    %1153 = vrot.lane.b32.xlu0 %v160, 72
    %v1154 = vpop.permute.xlu0 %1153
    %v1155 = vsel %vm165, %v1152, 0
    %v1157 = vsel %vm165, %v1154, 0
    %1159 = vmatprep.subr.mxu0 0.0
    %1160 = vmatpush1.xpose.msra.mxu0 %v1157
    %1161 = vmatprep.subr.mxu0 0.0
    %1162 = vmatpush1.xpose.msra.mxu0 0.0
    %1163 = vmatprep.subr.mxu0 0.0
    %1164 = vmatpush1.xpose.msra.mxu0 0.0
    %1165 = vmatprep.subr.mxu0 0.0
    %1166 = vmatpush1.xpose.msra.mxu0 0.0
    %1167 = vmatprep.subr.mxu0 0.0
    %1168 = vmatpush1.xpose.msra.mxu0 0.0
    %1169 = vmatprep.subr.mxu0 0.0
    %1170 = vmatpush1.xpose.msra.mxu0 0.0
    %1171 = vmatprep.subr.mxu0 0.0
    %1172 = vmatpush1.xpose.msra.mxu0 0.0
    %1173 = vmatprep.subr.mxu0 0.0
    %1174 = vmatpush1.xpose.msra.mxu0 0.0
    %1175 = vmatprep.subr.mxu0 0.0
    %1176 = vmatpush1.xpose.msra.mxu0 0.0
    %1177 = vmatprep.subr.mxu0 0.0
    %1178 = vmatpush1.xpose.msra.mxu0 0.0
    %1179 = vmatprep.subr.mxu0 0.0
    %1180 = vmatpush1.xpose.msra.mxu0 0.0
    %1181 = vmatprep.subr.mxu0 0.0
    %1182 = vmatpush1.xpose.msra.mxu0 0.0
    %1183 = vmatprep.subr.mxu0 0.0
    %1184 = vmatpush1.xpose.msra.mxu0 0.0
    %1185 = vmatprep.subr.mxu0 0.0
    %1186 = vmatpush1.xpose.msra.mxu0 0.0
    %1187 = vmatprep.subr.mxu0 0.0
    %1188 = vmatpush1.xpose.msra.mxu0 0.0
    %1189 = vmatprep.subr.mxu0 0.0
    %1190 = vmatpush1.xpose.msra.mxu0 0.0
    %1191 = vmatprep.subr.mxu0 0.0
    %1192 = vmatpush1.xpose.msra.mxu0 0.0
    %1193 = vmatprep.subr.mxu0 0.0
    %1194 = vmatpush1.xpose.msra.mxu0 0.0
    %1195 = vmatprep.subr.mxu0 0.0
    %1196 = vmatpush1.xpose.msra.mxu0 0.0
    %1197 = vmatprep.subr.mxu0 0.0
    %1198 = vmatpush1.xpose.msra.mxu0 0.0
    %1199 = vmatprep.subr.mxu0 0.0
    %1200 = vmatpush1.xpose.msra.mxu0 0.0
    %1201 = vmatprep.subr.mxu0 0.0
    %1202 = vmatpush1.xpose.msra.mxu0 0.0
    %1203 = vmatprep.subr.mxu0 0.0
    %1204 = vmatpush1.xpose.msra.mxu0 0.0
    %1205 = vmatprep.subr.mxu0 0.0
    %1206 = vmatpush1.xpose.msra.mxu0 0.0
    %1207 = vmatprep.subr.mxu0 0.0
    %1208 = vmatpush1.xpose.msra.mxu0 0.0
    %1209 = vmatprep.subr.mxu0 0.0
    %1210 = vmatpush1.xpose.msra.mxu0 0.0
    %1211 = vmatprep.subr.mxu0 0.0
    %1212 = vmatpush1.xpose.msra.mxu0 0.0
    %1213 = vmatprep.subr.mxu0 0.0
    %1214 = vmatpush1.xpose.msra.mxu0 0.0
    %1215 = vmatprep.subr.mxu0 0.0
    %1216 = vmatpush1.xpose.msra.mxu0 0.0
    %1217 = vmatprep.subr.mxu0 0.0
    %1218 = vmatpush1.xpose.msra.mxu0 0.0
    %1219 = vmatprep.subr.mxu0 0.0
    %1220 = vmatpush1.xpose.msra.mxu0 0.0
    %1221 = vmatprep.subr.mxu0 0.0
    %1222 = vmatpush1.xpose.msra.mxu0 0.0
    %1223 = vmatprep.mubr.f32.mxu0 0.0
    %1224 = vmatmul.mubr.f32.gmra.mrb[0].mxu0 %v1155
    %v1225 = vpop.f32.mrb[0].mxu0
    %v1226 = vadd.f32 0.0, %v1225
    %v1227 = vpop.f32.mrb[0].mxu0
    %1228 = vdwg.mxu0
    %1229 = vrot.lane.b32.xlu0 %v161, 104
    %v1230 = vpop.permute.xlu0 %1229
    %1231 = vrot.lane.b32.xlu0 %v161, 72
    %v1232 = vpop.permute.xlu0 %1231
    %v1233 = vsel %vm165, %v1230, 0
    %v1235 = vsel %vm165, %v1232, 0
    %1237 = vmatprep.subr.mxu0 0.0
    %1238 = vmatpush1.xpose.msra.mxu0 %v1235
    %1239 = vmatprep.subr.mxu0 0.0
    %1240 = vmatpush1.xpose.msra.mxu0 0.0
    %1241 = vmatprep.subr.mxu0 0.0
    %1242 = vmatpush1.xpose.msra.mxu0 0.0
    %1243 = vmatprep.subr.mxu0 0.0
    %1244 = vmatpush1.xpose.msra.mxu0 0.0
    %1245 = vmatprep.subr.mxu0 0.0
    %1246 = vmatpush1.xpose.msra.mxu0 0.0
    %1247 = vmatprep.subr.mxu0 0.0
    %1248 = vmatpush1.xpose.msra.mxu0 0.0
    %1249 = vmatprep.subr.mxu0 0.0
    %1250 = vmatpush1.xpose.msra.mxu0 0.0
    %1251 = vmatprep.subr.mxu0 0.0
    %1252 = vmatpush1.xpose.msra.mxu0 0.0
    %1253 = vmatprep.subr.mxu0 0.0
    %1254 = vmatpush1.xpose.msra.mxu0 0.0
    %1255 = vmatprep.subr.mxu0 0.0
    %1256 = vmatpush1.xpose.msra.mxu0 0.0
    %1257 = vmatprep.subr.mxu0 0.0
    %1258 = vmatpush1.xpose.msra.mxu0 0.0
    %1259 = vmatprep.subr.mxu0 0.0
    %1260 = vmatpush1.xpose.msra.mxu0 0.0
    %1261 = vmatprep.subr.mxu0 0.0
    %1262 = vmatpush1.xpose.msra.mxu0 0.0
    %1263 = vmatprep.subr.mxu0 0.0
    %1264 = vmatpush1.xpose.msra.mxu0 0.0
    %1265 = vmatprep.subr.mxu0 0.0
    %1266 = vmatpush1.xpose.msra.mxu0 0.0
    %1267 = vmatprep.subr.mxu0 0.0
    %1268 = vmatpush1.xpose.msra.mxu0 0.0
    %1269 = vmatprep.subr.mxu0 0.0
    %1270 = vmatpush1.xpose.msra.mxu0 0.0
    %1271 = vmatprep.subr.mxu0 0.0
    %1272 = vmatpush1.xpose.msra.mxu0 0.0
    %1273 = vmatprep.subr.mxu0 0.0
    %1274 = vmatpush1.xpose.msra.mxu0 0.0
    %1275 = vmatprep.subr.mxu0 0.0
    %1276 = vmatpush1.xpose.msra.mxu0 0.0
    %1277 = vmatprep.subr.mxu0 0.0
    %1278 = vmatpush1.xpose.msra.mxu0 0.0
    %1279 = vmatprep.subr.mxu0 0.0
    %1280 = vmatpush1.xpose.msra.mxu0 0.0
    %1281 = vmatprep.subr.mxu0 0.0
    %1282 = vmatpush1.xpose.msra.mxu0 0.0
    %1283 = vmatprep.subr.mxu0 0.0
    %1284 = vmatpush1.xpose.msra.mxu0 0.0
    %1285 = vmatprep.subr.mxu0 0.0
    %1286 = vmatpush1.xpose.msra.mxu0 0.0
    %1287 = vmatprep.subr.mxu0 0.0
    %1288 = vmatpush1.xpose.msra.mxu0 0.0
    %1289 = vmatprep.subr.mxu0 0.0
    %1290 = vmatpush1.xpose.msra.mxu0 0.0
    %1291 = vmatprep.subr.mxu0 0.0
    %1292 = vmatpush1.xpose.msra.mxu0 0.0
    %1293 = vmatprep.subr.mxu0 0.0
    %1294 = vmatpush1.xpose.msra.mxu0 0.0
    %1295 = vmatprep.subr.mxu0 0.0
    %1296 = vmatpush1.xpose.msra.mxu0 0.0
    %1297 = vmatprep.subr.mxu0 0.0
    %1298 = vmatpush1.xpose.msra.mxu0 0.0
    %1299 = vmatprep.subr.mxu0 0.0
    %1300 = vmatpush1.xpose.msra.mxu0 0.0
    %1301 = vmatprep.mubr.f32.mxu0 0.0
    %1302 = vmatmul.mubr.f32.gmra.mrb[0].mxu0 %v1233
    %v1303 = vpop.f32.mrb[0].mxu0
    %v1304 = vadd.f32 0.0, %v1303
    %v1305 = vpop.f32.mrb[0].mxu0
    %1306 = vdwg.mxu0
    %v1307 = vsel %vm165, %v1226, -inf
    %1308 = vmax.xlane.f32.xlu0 %v1307
    %v1309 = vpop.xlane.xlu0 %1308
    %v1310 = vsel %vm165, %v1304, -inf
    %1311 = vmax.xlane.f32.xlu0 %v1310
    %v1312 = vpop.xlane.xlu0 %1311
    %v1313 = vsub.f32 %v1226, %v1309
    %v1314 = vsub.f32 %v1304, %v1312
    %v1315 = vmul.f32 %v1313, 1.442695
    %v1316 = vpow.pop %v1315
    %v1317 = vmul.f32 %v1314, 1.442695
    %v1318 = vpow.pop %v1317
    %v1319 = vsel %vm165, %v1316, 0.0
    %1320 = vadd.xlane.f32.xlu0 %v1319
    %v1321 = vpop.xlane.xlu0 %1320
    %v1322 = vsel %vm165, %v1318, 0.0
    %1323 = vadd.xlane.f32.xlu0 %v1322
    %v1324 = vpop.xlane.xlu0 %1323
    %1325 = vrot.lane.b32.xlu0 %v160, 40
    %v1326 = vpop.permute.xlu0 %1325
    %v1329 = vsel %vm165, %v1316, 0
    %1331 = vmatprep.subr.mxu0 0.0
    %1332 = vmatpush1.msra.mxu0 %v1326
    %1333 = vmatprep.subr.mxu0 0.0
    %1334 = vmatpush1.msra.mxu0 0.0
    %1335 = vmatprep.subr.mxu0 0.0
    %1336 = vmatpush1.msra.mxu0 0.0
    %1337 = vmatprep.subr.mxu0 0.0
    %1338 = vmatpush1.msra.mxu0 0.0
    %1339 = vmatprep.subr.mxu0 0.0
    %1340 = vmatpush1.msra.mxu0 0.0
    %1341 = vmatprep.subr.mxu0 0.0
    %1342 = vmatpush1.msra.mxu0 0.0
    %1343 = vmatprep.subr.mxu0 0.0
    %1344 = vmatpush1.msra.mxu0 0.0
    %1345 = vmatprep.subr.mxu0 0.0
    %1346 = vmatpush1.msra.mxu0 0.0
    %1347 = vmatprep.subr.mxu0 0.0
    %1348 = vmatpush1.msra.mxu0 0.0
    %1349 = vmatprep.subr.mxu0 0.0
    %1350 = vmatpush1.msra.mxu0 0.0
    %1351 = vmatprep.subr.mxu0 0.0
    %1352 = vmatpush1.msra.mxu0 0.0
    %1353 = vmatprep.subr.mxu0 0.0
    %1354 = vmatpush1.msra.mxu0 0.0
    %1355 = vmatprep.subr.mxu0 0.0
    %1356 = vmatpush1.msra.mxu0 0.0
    %1357 = vmatprep.subr.mxu0 0.0
    %1358 = vmatpush1.msra.mxu0 0.0
    %1359 = vmatprep.subr.mxu0 0.0
    %1360 = vmatpush1.msra.mxu0 0.0
    %1361 = vmatprep.subr.mxu0 0.0
    %1362 = vmatpush1.msra.mxu0 0.0
    %1363 = vmatprep.subr.mxu0 0.0
    %1364 = vmatpush1.msra.mxu0 0.0
    %1365 = vmatprep.subr.mxu0 0.0
    %1366 = vmatpush1.msra.mxu0 0.0
    %1367 = vmatprep.subr.mxu0 0.0
    %1368 = vmatpush1.msra.mxu0 0.0
    %1369 = vmatprep.subr.mxu0 0.0
    %1370 = vmatpush1.msra.mxu0 0.0
    %1371 = vmatprep.subr.mxu0 0.0
    %1372 = vmatpush1.msra.mxu0 0.0
    %1373 = vmatprep.subr.mxu0 0.0
    %1374 = vmatpush1.msra.mxu0 0.0
    %1375 = vmatprep.subr.mxu0 0.0
    %1376 = vmatpush1.msra.mxu0 0.0
    %1377 = vmatprep.subr.mxu0 0.0
    %1378 = vmatpush1.msra.mxu0 0.0
    %1379 = vmatprep.subr.mxu0 0.0
    %1380 = vmatpush1.msra.mxu0 0.0
    %1381 = vmatprep.subr.mxu0 0.0
    %1382 = vmatpush1.msra.mxu0 0.0
    %1383 = vmatprep.subr.mxu0 0.0
    %1384 = vmatpush1.msra.mxu0 0.0
    %1385 = vmatprep.subr.mxu0 0.0
    %1386 = vmatpush1.msra.mxu0 0.0
    %1387 = vmatprep.subr.mxu0 0.0
    %1388 = vmatpush1.msra.mxu0 0.0
    %1389 = vmatprep.subr.mxu0 0.0
    %1390 = vmatpush1.msra.mxu0 0.0
    %1391 = vmatprep.subr.mxu0 0.0
    %1392 = vmatpush1.msra.mxu0 0.0
    %1393 = vmatprep.subr.mxu0 0.0
    %1394 = vmatpush1.msra.mxu0 0.0
    %1395 = vmatprep.mubr.f32.mxu0 0.0
    %1396 = vmatmul.mubr.f32.gmra.mrb[0].mxu0 %v1329
    %v1397 = vpop.f32.mrb[0].mxu0
    %v1398 = vadd.f32 0.0, %v1397
    %v1399 = vpop.f32.mrb[0].mxu0
    %1400 = vdwg.mxu0
    %1401 = vrot.lane.b32.xlu0 %v161, 40
    %v1402 = vpop.permute.xlu0 %1401
    %v1405 = vsel %vm165, %v1318, 0
    %1407 = vmatprep.subr.mxu0 0.0
    %1408 = vmatpush1.msra.mxu0 %v1402
    %1409 = vmatprep.subr.mxu0 0.0
    %1410 = vmatpush1.msra.mxu0 0.0
    %1411 = vmatprep.subr.mxu0 0.0
    %1412 = vmatpush1.msra.mxu0 0.0
    %1413 = vmatprep.subr.mxu0 0.0
    %1414 = vmatpush1.msra.mxu0 0.0
    %1415 = vmatprep.subr.mxu0 0.0
    %1416 = vmatpush1.msra.mxu0 0.0
    %1417 = vmatprep.subr.mxu0 0.0
    %1418 = vmatpush1.msra.mxu0 0.0
    %1419 = vmatprep.subr.mxu0 0.0
    %1420 = vmatpush1.msra.mxu0 0.0
    %1421 = vmatprep.subr.mxu0 0.0
    %1422 = vmatpush1.msra.mxu0 0.0
    %1423 = vmatprep.subr.mxu0 0.0
    %1424 = vmatpush1.msra.mxu0 0.0
    %1425 = vmatprep.subr.mxu0 0.0
    %1426 = vmatpush1.msra.mxu0 0.0
    %1427 = vmatprep.subr.mxu0 0.0
    %1428 = vmatpush1.msra.mxu0 0.0
    %1429 = vmatprep.subr.mxu0 0.0
    %1430 = vmatpush1.msra.mxu0 0.0
    %1431 = vmatprep.subr.mxu0 0.0
    %1432 = vmatpush1.msra.mxu0 0.0
    %1433 = vmatprep.subr.mxu0 0.0
    %1434 = vmatpush1.msra.mxu0 0.0
    %1435 = vmatprep.subr.mxu0 0.0
    %1436 = vmatpush1.msra.mxu0 0.0
    %1437 = vmatprep.subr.mxu0 0.0
    %1438 = vmatpush1.msra.mxu0 0.0
    %1439 = vmatprep.subr.mxu0 0.0
    %1440 = vmatpush1.msra.mxu0 0.0
    %1441 = vmatprep.subr.mxu0 0.0
    %1442 = vmatpush1.msra.mxu0 0.0
    %1443 = vmatprep.subr.mxu0 0.0
    %1444 = vmatpush1.msra.mxu0 0.0
    %1445 = vmatprep.subr.mxu0 0.0
    %1446 = vmatpush1.msra.mxu0 0.0
    %1447 = vmatprep.subr.mxu0 0.0
    %1448 = vmatpush1.msra.mxu0 0.0
    %1449 = vmatprep.subr.mxu0 0.0
    %1450 = vmatpush1.msra.mxu0 0.0
    %1451 = vmatprep.subr.mxu0 0.0
    %1452 = vmatpush1.msra.mxu0 0.0
    %1453 = vmatprep.subr.mxu0 0.0
    %1454 = vmatpush1.msra.mxu0 0.0
    %1455 = vmatprep.subr.mxu0 0.0
    %1456 = vmatpush1.msra.mxu0 0.0
    %1457 = vmatprep.subr.mxu0 0.0
    %1458 = vmatpush1.msra.mxu0 0.0
    %1459 = vmatprep.subr.mxu0 0.0
    %1460 = vmatpush1.msra.mxu0 0.0
    %1461 = vmatprep.subr.mxu0 0.0
    %1462 = vmatpush1.msra.mxu0 0.0
    %1463 = vmatprep.subr.mxu0 0.0
    %1464 = vmatpush1.msra.mxu0 0.0
    %1465 = vmatprep.subr.mxu0 0.0
    %1466 = vmatpush1.msra.mxu0 0.0
    %1467 = vmatprep.subr.mxu0 0.0
    %1468 = vmatpush1.msra.mxu0 0.0
    %1469 = vmatprep.subr.mxu0 0.0
    %1470 = vmatpush1.msra.mxu0 0.0
    %1471 = vmatprep.mubr.f32.mxu0 0.0
    %1472 = vmatmul.mubr.f32.gmra.mrb[0].mxu0 %v1405
    %v1473 = vpop.f32.mrb[0].mxu0
    %v1474 = vadd.f32 0.0, %v1473
    %v1475 = vpop.f32.mrb[0].mxu0
    %1476 = vdwg.mxu0
    %v1477 = vrcp.pop %v1321
    %v1478 = vrcp.pop %v1324
    %v1479 = vmul.f32 %v1398, %v1477
    %v1480 = vmul.f32 %v1474, %v1478
    %1483 = vrot.lane.b32.xlu0 %v819, 8
    %v1484 = vpop.permute.xlu0 %1483
    %1485 = vrot.lane.b32.xlu0 %v820, 8
    %v1486 = vpop.permute.xlu0 %1485
    %1491 = vrot.lane.b32.xlu0 %v1149, 16
    %v1492 = vpop.permute.xlu0 %1491
    %1493 = vrot.lane.b32.xlu0 %v1150, 16
    %v1494 = vpop.permute.xlu0 %1493
    %1499 = vrot.lane.b32.xlu0 %v1479, 24
    %v1500 = vpop.permute.xlu0 %1499
    %1501 = vrot.lane.b32.xlu0 %v1480, 24
    %v1502 = vpop.permute.xlu0 %1501
    %v1505 = vsel %vm165, %v489, %v1484
    %v1506 = vsel %vm165, %v490, %v1486
    %vm1507 = vcmask 130048
    %v1508 = vsel %vm1507, %v1505, %v1492
    %v1509 = vsel %vm1507, %v1506, %v1494
    %vm1510 = vcmask 195584
    %v1511 = vsel %vm1510, %v1508, %v1500
    %v1512 = vsel %vm1510, %v1509, %v1502
    %1513 = vst.msk [vmem:[#allocation3] sm:$0xff] %vm75, %v1511
    %1514 = vst.msk [vmem:[#allocation3 + $0x8] sm:$0xff] %vm75, %v1512
    %v1515 = vld [vmem:[#allocation3] sm:$0xff]
    %v1516 = vld [vmem:[#allocation3 + $0x8] sm:$0xff]
    %v1517 = vld [vmem:[#allocation9] sm:$0xff]
    %v1518 = vld [vmem:[#allocation9 + $0x8] sm:$0xff]
    %v1519 = vld [vmem:[#allocation9 + $0x10] sm:$0xff]
    %v1520 = vld [vmem:[#allocation9 + $0x18] sm:$0xff]
    %v1521 = vld [vmem:[%s4] sm:$0x1]
    %v1523 = vlaneseq
    %v1524 = vshrl.u32 %v1523, 7
    %v1525 = vsub.s32 0, %v1524
    %v1526 = vrot.slane %v1521, %v1525
    %v1529 = vsel %vm75, %v1515, 0
    %v1532 = vsel %vm75, %v1516, 0
    %1534 = vmatprep.subr.mxu0 0.0
    %1535 = vmatpush1.msra.mxu0 %v1517
    %1536 = vmatprep.subr.mxu0 0.0
    %1537 = vmatpush1.msra.mxu0 %v1518
    %1538 = vmatprep.subr.mxu0 0.0
    %1539 = vmatpush1.msra.mxu0 %v1519
    %1540 = vmatprep.subr.mxu0 0.0
    %1541 = vmatpush1.msra.mxu0 %v1520
    %1542 = vmatprep.subr.mxu0 0.0
    %1543 = vmatpush1.msra.mxu0 0.0
    %1544 = vmatprep.subr.mxu0 0.0
    %1545 = vmatpush1.msra.mxu0 0.0
    %1546 = vmatprep.subr.mxu0 0.0
    %1547 = vmatpush1.msra.mxu0 0.0
    %1548 = vmatprep.subr.mxu0 0.0
    %1549 = vmatpush1.msra.mxu0 0.0
    %1550 = vmatprep.subr.mxu0 0.0
    %1551 = vmatpush1.msra.mxu0 0.0
    %1552 = vmatprep.subr.mxu0 0.0
    %1553 = vmatpush1.msra.mxu0 0.0
    %1554 = vmatprep.subr.mxu0 0.0
    %1555 = vmatpush1.msra.mxu0 0.0
    %1556 = vmatprep.subr.mxu0 0.0
    %1557 = vmatpush1.msra.mxu0 0.0
    %1558 = vmatprep.subr.mxu0 0.0
    %1559 = vmatpush1.msra.mxu0 0.0
    %1560 = vmatprep.subr.mxu0 0.0
    %1561 = vmatpush1.msra.mxu0 0.0
    %1562 = vmatprep.subr.mxu0 0.0
    %1563 = vmatpush1.msra.mxu0 0.0
    %1564 = vmatprep.subr.mxu0 0.0
    %1565 = vmatpush1.msra.mxu0 0.0
    %1566 = vmatprep.subr.mxu0 0.0
    %1567 = vmatpush1.msra.mxu0 0.0
    %1568 = vmatprep.subr.mxu0 0.0
    %1569 = vmatpush1.msra.mxu0 0.0
    %1570 = vmatprep.subr.mxu0 0.0
    %1571 = vmatpush1.msra.mxu0 0.0
    %1572 = vmatprep.subr.mxu0 0.0
    %1573 = vmatpush1.msra.mxu0 0.0
    %1574 = vmatprep.subr.mxu0 0.0
    %1575 = vmatpush1.msra.mxu0 0.0
    %1576 = vmatprep.subr.mxu0 0.0
    %1577 = vmatpush1.msra.mxu0 0.0
    %1578 = vmatprep.subr.mxu0 0.0
    %1579 = vmatpush1.msra.mxu0 0.0
    %1580 = vmatprep.subr.mxu0 0.0
    %1581 = vmatpush1.msra.mxu0 0.0
    %1582 = vmatprep.subr.mxu0 0.0
    %1583 = vmatpush1.msra.mxu0 0.0
    %1584 = vmatprep.subr.mxu0 0.0
    %1585 = vmatpush1.msra.mxu0 0.0
    %1586 = vmatprep.subr.mxu0 0.0
    %1587 = vmatpush1.msra.mxu0 0.0
    %1588 = vmatprep.subr.mxu0 0.0
    %1589 = vmatpush1.msra.mxu0 0.0
    %1590 = vmatprep.subr.mxu0 0.0
    %1591 = vmatpush1.msra.mxu0 0.0
    %1592 = vmatprep.subr.mxu0 0.0
    %1593 = vmatpush1.msra.mxu0 0.0
    %1594 = vmatprep.subr.mxu0 0.0
    %1595 = vmatpush1.msra.mxu0 0.0
    %1596 = vmatprep.subr.mxu0 0.0
    %1597 = vmatpush1.msra.mxu0 0.0
    %1598 = vmatprep.mubr.f32.mxu0 0.0
    %1599 = vmatmul.mubr.f32.gmra.mrb[0].mxu0 %v1529
    %v1600 = vpop.f32.mrb[0].mxu0
    %v1601 = vadd.f32 %v1526, %v1600
    %v1602 = vpop.f32.mrb[0].mxu0
    %1603 = vmatprep.mubr.f32.mxu0 0.0
    %1604 = vmatmul.mubr.f32.gmra.mrb[0].mxu0 %v1532
    %v1605 = vpop.f32.mrb[0].mxu0
    %v1606 = vadd.f32 %v1526, %v1605
    %v1607 = vpop.f32.mrb[0].mxu0
    %1608 = vdwg.mxu0
    %1609 = vst.msk [vmem:[#allocation10] sm:$0xff] %vm75, %v1601
    %1610 = vst.msk [vmem:[#allocation10 + $0x8] sm:$0xff] %vm75, %v1606
    // Predicated region
    $region34: #{tpu_custom_call.1} parent=1 // pred_check
      _
    $region35: #{tpu_custom_call.1} parent=1 // pred_check_branch
      %1612 = sbr.rel (0) target = $region37
    $region36: #{tpu_custom_call.1} parent=1 // pred_region
      %s1614 = ssub.s32 256, 256
      %1615 = vsyncadd [#allocation6], %s1614
      %s1616 = sshll.u32 [#allocation10], 4
      %s1617 = int_to_ptr.vmem [resolvable:$true] %s1616
      %1622 = dma.vmem_to_hbm [thread:$0]  %s1617, 256, %s5, [#allocation6], 128, 128, 8
    $region37: #{tpu_custom_call.1} parent=1 // pred_fallthru
      _
    // Predicated region
    $region38: #{tpu_custom_call.1} parent=1 // pred_check
      _
    $region39: #{tpu_custom_call.1} parent=1 // pred_check_branch
      %1624 = sbr.rel (0) target = $region41
    $region40: #{tpu_custom_call.1} parent=1 // pred_region
      %1625 = dma.done [#allocation6], 256
    $region41: #{tpu_custom_call.1} parent=1 // pred_fallthru
      _
    %1626 = vsyncpa [#allocation5], 1
    %1627 = vsyncpa [#allocation8], 1
    %1628 = vsyncpa [#allocation6], 1

</llo_original>
